<compile_context>
chip_gen: v7x
topology: tpu7x:2x2x1
jax: 0.10.0
libtpu: 0.0.40
codegen_flags: <defaults>
</compile_context>

<pallas_src>
import functools

import jax
import jax.numpy as jnp
from jax import lax
from jax.experimental import pallas as pl
from jax.experimental.pallas import tpu as pltpu


_OUT_ROWS = 8  # output conv rows padded 3 -> 8 for full-sublane stores


# ---------------------------------------------------------------------------
# Static packing layout of all conv weights into one 2-D operand
# ---------------------------------------------------------------------------
def _conv_pack_layout(k, num_ups):
    """Returns (layout, total_rows, max_cols); layout[j] = (row0, cout, cols).

    Order: block0 conv1, block0 conv2, (conv1, conv2) per skip block, out conv.
    """
    entries = [(k, 9 * k), (k, 9 * k)]
    for _ in range(1, num_ups):
        entries.append((k, 9 * 2 * k))   # conv1 of a skip block (concat input)
        entries.append((k, 9 * k))
    entries.append((_OUT_ROWS, 9 * k))   # output conv, rows padded to 8
    layout, r = [], 0
    for cout, cols in entries:
        layout.append((r, cout, cols))
        r += cout
    max_cols = max(c for _, c in entries)
    return tuple(layout), r, max_cols


# ---------------------------------------------------------------------------
# Parameters (deterministic synthetic init mirroring SizedGenerator.__init__)
# ---------------------------------------------------------------------------
def init_params(key, latent_dim, num_filters, image_size, num_ups):
    """Torch-layout parameters: linear (out,in); convs (Cout,Cin,3,3)."""
    k = num_filters
    s = image_size // (2 ** num_ups)
    keys = jax.random.split(key, 2 * (num_ups + 1) + 2)
    scale = 0.1
    it = iter(keys)
    params = {"linear": scale * jax.random.normal(
        next(it), (s * s * k, latent_dim), jnp.float32)}
    convs = []
    for i in range(num_ups + 1):
        cin = k if i == 0 else 2 * k
        wa = scale * jax.random.normal(next(it), (k, cin, 3, 3), jnp.float32)
        wb = scale * jax.random.normal(next(it), (k, k, 3, 3), jnp.float32)
        convs.append((wa, wb))
    params["convs"] = convs
    params["out"] = scale * jax.random.normal(next(it), (3, k, 3, 3), jnp.float32)
    return params


def prepare_params(params, *, num_filters, image_size, num_ups):
    """One-time host-side rearrangement of torch-layout params for the kernel."""
    k = num_filters
    s = image_size // (2 ** num_ups)
    layout, total_rows, max_cols = _conv_pack_layout(k, num_ups)

    def flat(w):  # (Cout, Cin, 3, 3) -> (Cout, 9*Cin), col = (ky*3+kx)*Cin + ci
        cout, cin = w.shape[0], w.shape[1]
        return jnp.transpose(w, (0, 2, 3, 1)).reshape(cout, 9 * cin).astype(
            jnp.bfloat16)

    flats = [flat(params["convs"][0][0]), flat(params["convs"][0][1])]
    for i in range(1, num_ups):
        flats += [flat(params["convs"][i][0]), flat(params["convs"][i][1])]
    w_out = params["out"]                                   # (3, k, 3, 3)
    w_out = jnp.concatenate(
        [w_out, jnp.zeros((_OUT_ROWS - w_out.shape[0],) + w_out.shape[1:],
                          w_out.dtype)], axis=0)
    flats.append(flat(w_out))
    # NOTE: params["convs"][num_ups] exists but is never used, matching the
    # torch forward's zip(conv[1:], skip) which drops the last conv block.

    packed = []
    for f, (r0, cout, cols) in zip(flats, layout):
        assert f.shape == (cout, cols), (f.shape, cout, cols)
        packed.append(jnp.pad(f, ((0, 0), (0, max_cols - cols))))
    w_pack = jnp.concatenate(packed, axis=0)
    assert w_pack.shape == (total_rows, max_cols)

    def gather(w_src, factor):
        """0/1 matrix G so that (x @ G) nearest-upsamples a flattened map."""
        p_src = w_src * w_src
        w_dst = w_src * factor
        p_dst = p_src * factor * factor
        r = jnp.arange(p_src)[:, None]
        o = jnp.arange(p_dst)[None, :]
        src = (o // w_dst // factor) * w_src + (o % w_dst) // factor
        return (r == src).astype(jnp.bfloat16)

    g_chain = tuple(gather(s * 2 ** i, 2) for i in range(num_ups))
    g_skip = tuple(gather(s, 2 ** (i + 1)) for i in range(1, num_ups))

    return {
        "linear_t": jnp.transpose(params["linear"]).astype(jnp.bfloat16),
        "w_pack": w_pack,
        "g_chain": g_chain,
        "g_skip": g_skip,
    }


# ---------------------------------------------------------------------------
# The fused generator kernel (one image per grid step)
# ---------------------------------------------------------------------------
def _make_generator_kernel(k, s, num_ups, fuse_linear, w_layout):
    ss = s * s

    def edge_masks(w_img, p):
        """(1, P) validity masks per (dy, dx), hoisted once per resolution."""
        pos = lax.broadcasted_iota(jnp.int32, (1, p), 1)
        col = pos % w_img
        top = pos >= w_img          # valid for dy = -1
        bot = pos < (p - w_img)     # valid for dy = +1
        lft = col >= 1              # valid for dx = -1
        rgt = col <= (w_img - 2)    # valid for dx = +1
        masks = {}
        for dy in (-1, 0, 1):
            for dx in (-1, 0, 1):
                ms = []
                if dy == -1:
                    ms.append(top)
                elif dy == 1:
                    ms.append(bot)
                if dx == -1:
                    ms.append(lft)
                elif dx == 1:
                    ms.append(rgt)
                if not ms:
                    masks[(dy, dx)] = None
                elif len(ms) == 1:
                    masks[(dy, dx)] = ms[0]
                else:
                    masks[(dy, dx)] = jnp.logical_and(ms[0], ms[1])
        return masks

    def kernel(*args):
        num_scratch = 2 if fuse_linear else 1
        out_ref = args[-(num_scratch + 1)]
        stack_ref = args[-num_scratch]
        fm_scr = args[-1] if fuse_linear else None

        it = 0
        x_ref = args[it]; it += 1
        if fuse_linear:
            w_lin_ref = args[it]; it += 1
        w_pack_ref = args[it]; it += 1
        g_chain = args[it:it + num_ups]; it += num_ups
        g_skip = args[it:it + num_ups - 1]

        def w_flat(j):
            r0, cout, cols = w_layout[j]
            return w_pack_ref[r0:r0 + cout, 0:cols]

        def conv3x3_elu(parts, j, w_img, p, masks):
            """3x3 SAME conv + ELU over the channel-concat of `parts`.

            parts: list of (Cin_i, P) float arrays.  The 9 shifted taps of every
            part are stored into stack_ref (bf16 VMEM) so the whole conv is ONE
            (Cout, 9*sum Cin_i) @ (9*sum Cin_i, P) MXU matmul with f32 accum.
            """
            cin_tot = sum(x.shape[0] for x in parts)
            use_roll = (p % 128 == 0)
            padded = None
            if not use_roll:   # tiny first block only: proven pad+slice path
                padded = []
                for x in parts:
                    zp = jnp.zeros((x.shape[0], w_img + 1), x.dtype)
                    padded.append(jnp.concatenate([zp, x, zp], axis=1))
            t = 0
            for ky in range(3):
                for kx in range(3):
                    dy, dx = ky - 1, kx - 1
                    sh = dy * w_img + dx
                    m = masks[(dy, dx)]
                    r = t * cin_tot
                    for pi, x in enumerate(parts):
                        cin = x.shape[0]
                        if sh == 0:
                            tap = x
                        elif use_roll:
                            # tap[q] = x[q + sh] (wrap zeroed by mask); XLU slot
                            tap = pltpu.roll(x, shift=(-sh) % p, axis=1)
                        else:
                            start = (w_img + 1) + sh
                            tap = lax.slice_in_dim(padded[pi], start, start + p,
                                                   axis=1)
                        if m is not None:
                            tap = jnp.where(m, tap, jnp.zeros_like(tap))
                        stack_ref[r:r + cin, 0:p] = tap.astype(jnp.bfloat16)
                        r += cin
                    t += 1
            acc = jnp.dot(w_flat(j), stack_ref[0:9 * cin_tot, 0:p],
                          preferred_element_type=jnp.float32)
            # ELU(alpha=1) on the f32 accumulator (matches nn.ELU).
            return jnp.where(acc > 0.0, acc,
                             jnp.exp(jnp.minimum(acc, 0.0)) - 1.0)

        # ---- initial feature maps fm: (k, s*s) bf16 ----
        if fuse_linear:
            row = jnp.dot(x_ref[0], w_lin_ref[...],
                          preferred_element_type=jnp.float32)      # (1, k*s*s)
            row = row.astype(jnp.bfloat16)
            for c in range(k):   # redistribute lanes -> (k, s*s) via scratch
                fm_scr[c:c + 1, :] = row[:, c * ss:(c + 1) * ss]
            fm = fm_scr[...]
        else:
            fm = x_ref[0]

        # ---- block 0: nearest x2 upsample (precomputed gather), two convs ----
        w_img = 2 * s
        p = w_img * w_img
        masks = edge_masks(w_img, p)
        up0 = jnp.dot(fm, g_chain[0][...], preferred_element_type=jnp.float32)
        h = conv3x3_elu([up0], 0, w_img, p, masks)
        h = conv3x3_elu([h], 1, w_img, p, masks)
        wj = 2

        # ---- skip blocks: x2 chain upsample + 2^(i+1) skip upsample; the
        # channel concat is realised as two parts of one stacked tap buffer,
        # so conv1 is still a single matmul with K = 9 * 2k. ----
        # TODO(synk): the chain-path gather matrix scales as image_size^4; for
        # very large images on v7x (64 MiB VMEM) replace it with a
        # phase-decomposed (sub-pixel) conv so upsample cost is linear in P.
        for i in range(1, num_ups):
            up_chain = jnp.dot(h.astype(jnp.bfloat16), g_chain[i][...],
                               preferred_element_type=jnp.float32)
            up_skip = jnp.dot(fm, g_skip[i - 1][...],
                              preferred_element_type=jnp.float32)
            w_img *= 2
            p = w_img * w_img
            masks = edge_masks(w_img, p)
            h = conv3x3_elu([up_chain, up_skip], wj, w_img, p, masks)
            h = conv3x3_elu([h], wj + 1, w_img, p, masks)
            wj += 2

        # ---- output conv (3 real rows padded to 8) + ELU output activation ---
        out = conv3x3_elu([h], wj, w_img, p, masks)
        out_ref[0] = out.astype(out_ref.dtype)

    return kernel


# ---------------------------------------------------------------------------
# Forward pass (single pallas_call)
# ---------------------------------------------------------------------------
def generator_forward(prepped, inp, *, num_filters, image_size, num_ups,
                      skip_linear_layer=False):
    k = num_filters
    s = image_size // (2 ** num_ups)
    bsz = inp.shape[0]
    p_out = image_size * image_size
    layout, _, _ = _conv_pack_layout(k, num_ups)
    fuse_linear = not skip_linear_layer

    if fuse_linear:
        x_op = inp.reshape(bsz, 1, -1).astype(jnp.bfloat16)       # (B, 1, latent)
        latent = x_op.shape[-1]
        x_spec = pl.BlockSpec((1, 1, latent), lambda b: (b, 0, 0))
    else:
        # torch .view(-1, k, s, s) on a row-major tensor -> (B, k, s*s) is free.
        x_op = inp.reshape(bsz, k, s * s).astype(jnp.bfloat16)
        x_spec = pl.BlockSpec((1, k, s * s), lambda b: (b, 0, 0))

    operands = [x_op]
    in_specs = [x_spec]
    if fuse_linear:
        operands.append(prepped["linear_t"])
        in_specs.append(pl.BlockSpec(prepped["linear_t"].shape,
                                     lambda b: (0, 0)))
    operands.append(prepped["w_pack"])
    in_specs.append(pl.BlockSpec(prepped["w_pack"].shape, lambda b: (0, 0)))
    for g in prepped["g_chain"] + prepped["g_skip"]:
        operands.append(g)
        in_specs.append(pl.BlockSpec(g.shape, lambda b: (0, 0)))

    cin_max = 2 * k if num_ups > 1 else k
    scratch_shapes = [pltpu.VMEM((9 * cin_max, p_out), jnp.bfloat16)]
    if fuse_linear:
        scratch_shapes.append(pltpu.VMEM((k, s * s), jnp.bfloat16))

    kernel = _make_generator_kernel(k, s, num_ups, fuse_linear, layout)

    out = pl.pallas_call(
        kernel,
        out_shape=jax.ShapeDtypeStruct((bsz, _OUT_ROWS, p_out), jnp.float32),
        grid_spec=pltpu.PrefetchScalarGridSpec(
            num_scalar_prefetch=0,
            grid=(bsz,),
            in_specs=in_specs,
            out_specs=pl.BlockSpec((1, _OUT_ROWS, p_out), lambda b: (b, 0, 0)),
            scratch_shapes=scratch_shapes,
        ),
        compiler_params=pltpu.CompilerParams(
            dimension_semantics=("parallel",),
            vmem_limit_bytes=48 * 1024 * 1024,
        ),
    )(*operands)
    # NCHW output, matching PyTorch.
    return out[:, :3, :].reshape(bsz, 3, image_size, image_size)


# ---------------------------------------------------------------------------
# Pure-JAX f32 reference (for correctness check)
# ---------------------------------------------------------------------------
def reference_forward(params, inp, *, num_filters, image_size, num_ups):
    k = num_filters
    s = image_size // (2 ** num_ups)
    bsz = inp.shape[0]
    fmaps = jnp.dot(inp, params["linear"].T,
                    precision=lax.Precision.HIGHEST).reshape(bsz, k, s, s)

    def conv(x, w):
        y = lax.conv_general_dilated(
            x, w, (1, 1), "SAME",
            dimension_numbers=("NCHW", "OIHW", "NCHW"),
            precision=lax.Precision.HIGHEST)
        return jax.nn.elu(y)

    def up(x, f):
        return jnp.repeat(jnp.repeat(x, f, axis=2), f, axis=3)

    def block(x, wts):
        x = up(x, 2)
        return conv(conv(x, wts[0]), wts[1])

    chain = block(fmaps, params["convs"][0])
    for i in range(num_ups - 1):
        sk = up(fmaps, 2 ** (i + 1))
        chain = block(jnp.concatenate([chain, sk], axis=1),
                      params["convs"][i + 1])
    return conv(chain, params["out"])


if __name__ == "__main__":
    latent_dim, num_filters, image_size, num_ups = 16, 8, 16, 2
    B = 2

    key = jax.random.PRNGKey(0)
    kp, kx = jax.random.split(key)
    params = init_params(kp, latent_dim, num_filters, image_size, num_ups)
    prepped = prepare_params(params, num_filters=num_filters,
                             image_size=image_size, num_ups=num_ups)
    inp = jax.random.normal(kx, (B, latent_dim), jnp.float32)

    fwd = jax.jit(functools.partial(
        generator_forward, num_filters=num_filters,
        image_size=image_size, num_ups=num_ups))
    out = jax.block_until_ready(fwd(prepped, inp))
    assert out.shape == (B, 3, image_size, image_size), out.shape

    ref = reference_forward(params, inp, num_filters=num_filters,
                            image_size=image_size, num_ups=num_ups)
    err = float(jnp.max(jnp.abs(out - ref)))
    # bf16 MXU inputs with f32 accumulation: expect ~1e-3 error on O(0.3) values
    assert err < 3e-2, f"max abs err {err}"
    print("KERNEL_OK")
</pallas_src>

<mosaic_0001>
module attributes {stable_mosaic.version = 11 : i64} {
  func.func @kernel(%arg0: i32, %arg1: memref<1x1x16xbf16, #tpu.memory_space<vmem>>, %arg2: memref<16x128xbf16, #tpu.memory_space<vmem>>, %arg3: memref<40x144xbf16, #tpu.memory_space<vmem>>, %arg4: memref<16x64xbf16, #tpu.memory_space<vmem>>, %arg5: memref<64x256xbf16, #tpu.memory_space<vmem>>, %arg6: memref<16x256xbf16, #tpu.memory_space<vmem>>, %arg7: memref<1x8x256xf32, #tpu.memory_space<vmem>>, %arg8: memref<144x256xbf16, #tpu.memory_space<vmem>>, %arg9: memref<8x16xbf16, #tpu.memory_space<vmem>>) attributes {dimension_semantics = [#tpu.dimension_semantics<parallel>], iteration_bounds = array<i64: 2>, scalar_prefetch = 0 : i64, scratch_operands = 2 : i64, tpu.core_type = #tpu.core_type<tc>, window_params = [{transform_indices = @transform_0, window_bounds = array<i64: 1, 1, 16>}, {pipeline_mode = #tpu.pipeline_mode<synchronous>, transform_indices = @transform_1, window_bounds = array<i64: 16, 128>}, {pipeline_mode = #tpu.pipeline_mode<synchronous>, transform_indices = @transform_2, window_bounds = array<i64: 40, 144>}, {pipeline_mode = #tpu.pipeline_mode<synchronous>, transform_indices = @transform_3, window_bounds = array<i64: 16, 64>}, {pipeline_mode = #tpu.pipeline_mode<synchronous>, transform_indices = @transform_4, window_bounds = array<i64: 64, 256>}, {pipeline_mode = #tpu.pipeline_mode<synchronous>, transform_indices = @transform_5, window_bounds = array<i64: 16, 256>}, {transform_indices = @transform_6, window_bounds = array<i64: 1, 8, 256>}]} {
    %c0 = arith.constant 0 : index
    %c0_0 = arith.constant 0 : index
    %c0_1 = arith.constant 0 : index
    %0 = vector.load %arg1[%c0, %c0_0, %c0_1] : memref<1x1x16xbf16, #tpu.memory_space<vmem>>, vector<1x1x16xbf16>
    %1 = vector.shape_cast %0 : vector<1x1x16xbf16> to vector<1x16xbf16>
    %c0_2 = arith.constant 0 : index
    %c0_3 = arith.constant 0 : index
    %2 = vector.load %arg2[%c0_2, %c0_3] : memref<16x128xbf16, #tpu.memory_space<vmem>>, vector<16x128xbf16>
    %cst = arith.constant dense<0.000000e+00> : vector<1x128xf32>
    %3 = tpu.matmul %1, %2, %cst {dimension_numbers = #tpu.dot_dimension_numbers<[1], [0], [0], [1], [0, 0, 1, 1], [], []>} : vector<1x16xbf16>, vector<16x128xbf16>, vector<1x128xf32> -> vector<1x128xf32>
    %4 = arith.truncf %3 : vector<1x128xf32> to vector<1x128xbf16>
    %5 = vector.extract_strided_slice %4 {offsets = [0, 0], sizes = [1, 16], strides = [1, 1]} : vector<1x128xbf16> to vector<1x16xbf16>
    %c0_4 = arith.constant 0 : index
    %c0_5 = arith.constant 0 : index
    %6 = vector.load %arg9[%c0_4, %c0_5] : memref<8x16xbf16, #tpu.memory_space<vmem>>, vector<1x16xbf16>
    tpu.vector_store %arg9[%c0_4, %c0_5], %5 {strides = array<i32>} : memref<8x16xbf16, #tpu.memory_space<vmem>>, vector<1x16xbf16>,
    %7 = vector.extract_strided_slice %4 {offsets = [0, 16], sizes = [1, 16], strides = [1, 1]} : vector<1x128xbf16> to vector<1x16xbf16>
    %c1 = arith.constant 1 : index
    %c0_6 = arith.constant 0 : index
    %8 = vector.load %arg9[%c1, %c0_6] : memref<8x16xbf16, #tpu.memory_space<vmem>>, vector<1x16xbf16>
    tpu.vector_store %arg9[%c1, %c0_6], %7 {strides = array<i32>} : memref<8x16xbf16, #tpu.memory_space<vmem>>, vector<1x16xbf16>,
    %9 = vector.extract_strided_slice %4 {offsets = [0, 32], sizes = [1, 16], strides = [1, 1]} : vector<1x128xbf16> to vector<1x16xbf16>
    %c2 = arith.constant 2 : index
    %c0_7 = arith.constant 0 : index
    %10 = vector.load %arg9[%c2, %c0_7] : memref<8x16xbf16, #tpu.memory_space<vmem>>, vector<1x16xbf16>
    tpu.vector_store %arg9[%c2, %c0_7], %9 {strides = array<i32>} : memref<8x16xbf16, #tpu.memory_space<vmem>>, vector<1x16xbf16>,
    %11 = vector.extract_strided_slice %4 {offsets = [0, 48], sizes = [1, 16], strides = [1, 1]} : vector<1x128xbf16> to vector<1x16xbf16>
    %c3 = arith.constant 3 : index
    %c0_8 = arith.constant 0 : index
    %12 = vector.load %arg9[%c3, %c0_8] : memref<8x16xbf16, #tpu.memory_space<vmem>>, vector<1x16xbf16>
    tpu.vector_store %arg9[%c3, %c0_8], %11 {strides = array<i32>} : memref<8x16xbf16, #tpu.memory_space<vmem>>, vector<1x16xbf16>,
    %13 = vector.extract_strided_slice %4 {offsets = [0, 64], sizes = [1, 16], strides = [1, 1]} : vector<1x128xbf16> to vector<1x16xbf16>
    %c4 = arith.constant 4 : index
    %c0_9 = arith.constant 0 : index
    %14 = vector.load %arg9[%c4, %c0_9] : memref<8x16xbf16, #tpu.memory_space<vmem>>, vector<1x16xbf16>
    tpu.vector_store %arg9[%c4, %c0_9], %13 {strides = array<i32>} : memref<8x16xbf16, #tpu.memory_space<vmem>>, vector<1x16xbf16>,
    %15 = vector.extract_strided_slice %4 {offsets = [0, 80], sizes = [1, 16], strides = [1, 1]} : vector<1x128xbf16> to vector<1x16xbf16>
    %c5 = arith.constant 5 : index
    %c0_10 = arith.constant 0 : index
    %16 = vector.load %arg9[%c5, %c0_10] : memref<8x16xbf16, #tpu.memory_space<vmem>>, vector<1x16xbf16>
    tpu.vector_store %arg9[%c5, %c0_10], %15 {strides = array<i32>} : memref<8x16xbf16, #tpu.memory_space<vmem>>, vector<1x16xbf16>,
    %17 = vector.extract_strided_slice %4 {offsets = [0, 96], sizes = [1, 16], strides = [1, 1]} : vector<1x128xbf16> to vector<1x16xbf16>
    %c6 = arith.constant 6 : index
    %c0_11 = arith.constant 0 : index
    %18 = vector.load %arg9[%c6, %c0_11] : memref<8x16xbf16, #tpu.memory_space<vmem>>, vector<1x16xbf16>
    tpu.vector_store %arg9[%c6, %c0_11], %17 {strides = array<i32>} : memref<8x16xbf16, #tpu.memory_space<vmem>>, vector<1x16xbf16>,
    %19 = vector.extract_strided_slice %4 {offsets = [0, 112], sizes = [1, 16], strides = [1, 1]} : vector<1x128xbf16> to vector<1x16xbf16>
    %c7 = arith.constant 7 : index
    %c0_12 = arith.constant 0 : index
    %20 = vector.load %arg9[%c7, %c0_12] : memref<8x16xbf16, #tpu.memory_space<vmem>>, vector<1x16xbf16>
    tpu.vector_store %arg9[%c7, %c0_12], %19 {strides = array<i32>} : memref<8x16xbf16, #tpu.memory_space<vmem>>, vector<1x16xbf16>,
    %c0_13 = arith.constant 0 : index
    %c0_14 = arith.constant 0 : index
    %21 = vector.load %arg9[%c0_13, %c0_14] : memref<8x16xbf16, #tpu.memory_space<vmem>>, vector<8x16xbf16>
    %22 = tpu.iota {dimensions = array<i32: 1>} : vector<1x64xi32>
    %c8_i32 = arith.constant 8 : i32
    %c0_i32 = arith.constant 0 : i32
    %23 = arith.cmpi eq, %c8_i32, %c0_i32 : i32
    %c1_i32 = arith.constant 1 : i32
    %24 = arith.select %23, %c1_i32, %c8_i32 : i32
    %25 = vector.broadcast %24 : i32 to vector<1x64xi32>
    %26 = arith.remsi %22, %25 : vector<1x64xi32>
    %c0_i32_15 = arith.constant 0 : i32
    %27 = vector.broadcast %c0_i32_15 : i32 to vector<1x64xi32>
    %28 = arith.cmpi ne, %26, %27 : vector<1x64xi32>
    %c0_i32_16 = arith.constant 0 : i32
    %29 = vector.broadcast %c0_i32_16 : i32 to vector<1x64xi32>
    %30 = arith.cmpi slt, %26, %29 : vector<1x64xi32>
    %c0_i32_17 = arith.constant 0 : i32
    %31 = arith.cmpi slt, %24, %c0_i32_17 : i32
    %32 = vector.broadcast %31 : i1 to vector<1x64xi1>
    %33 = vector.broadcast %32 : vector<1x64xi1> to vector<1x64xi1>
    %34 = arith.xori %30, %33 : vector<1x64xi1>
    %35 = arith.andi %34, %28 : vector<1x64xi1>
    %36 = vector.broadcast %24 : i32 to vector<1x64xi32>
    %37 = arith.addi %26, %36 : vector<1x64xi32>
    %38 = arith.select %35, %37, %26 : vector<1x64xi1>, vector<1x64xi32>
    %c8_i32_18 = arith.constant 8 : i32
    %39 = vector.broadcast %c8_i32_18 : i32 to vector<1x64xi32>
    %40 = arith.cmpi sge, %22, %39 : vector<1x64xi32>
    %c56_i32 = arith.constant 56 : i32
    %41 = vector.broadcast %c56_i32 : i32 to vector<1x64xi32>
    %42 = arith.cmpi slt, %22, %41 : vector<1x64xi32>
    %c1_i32_19 = arith.constant 1 : i32
    %43 = vector.broadcast %c1_i32_19 : i32 to vector<1x64xi32>
    %44 = arith.cmpi sge, %38, %43 : vector<1x64xi32>
    %c6_i32 = arith.constant 6 : i32
    %45 = vector.broadcast %c6_i32 : i32 to vector<1x64xi32>
    %46 = arith.cmpi sle, %38, %45 : vector<1x64xi32>
    %47 = arith.andi %40, %44 : vector<1x64xi1>
    %48 = arith.andi %40, %46 : vector<1x64xi1>
    %49 = arith.andi %42, %44 : vector<1x64xi1>
    %50 = arith.andi %42, %46 : vector<1x64xi1>
    %c0_20 = arith.constant 0 : index
    %c0_21 = arith.constant 0 : index
    %51 = vector.load %arg4[%c0_20, %c0_21] : memref<16x64xbf16, #tpu.memory_space<vmem>>, vector<16x64xbf16>
    %cst_22 = arith.constant dense<0.000000e+00> : vector<8x64xf32>
    %52 = tpu.matmul %21, %51, %cst_22 {dimension_numbers = #tpu.dot_dimension_numbers<[1], [0], [0], [1], [0, 0, 1, 1], [], []>} : vector<8x16xbf16>, vector<16x64xbf16>, vector<8x64xf32> -> vector<8x64xf32>
    %cst_23 = arith.constant 0.000000e+00 : f32
    %53 = vector.broadcast %cst_23 : f32 to vector<8x9xf32>
    %54 = tpu.concatenate %53, %52, %53 in 1 : vector<8x9xf32>, vector<8x64xf32>, vector<8x9xf32> -> vector<8x82xf32>
    %55 = vector.extract_strided_slice %54 {offsets = [0, 0], sizes = [8, 64], strides = [1, 1]} : vector<8x82xf32> to vector<8x64xf32>
    %cst_24 = arith.constant 0.000000e+00 : f32
    %56 = vector.broadcast %cst_24 : f32 to vector<8x64xf32>
    %57 = vector.shape_cast %47 : vector<1x64xi1> to vector<1x64xi1>
    %58 = vector.broadcast %57 : vector<1x64xi1> to vector<8x64xi1>
    %59 = arith.select %58, %55, %56 : vector<8x64xi1>, vector<8x64xf32>
    %60 = arith.truncf %59 : vector<8x64xf32> to vector<8x64xbf16>
    %c0_25 = arith.constant 0 : index
    %c0_26 = arith.constant 0 : index
    %61 = vector.load %arg8[%c0_25, %c0_26] : memref<144x256xbf16, #tpu.memory_space<vmem>>, vector<8x64xbf16>
    tpu.vector_store %arg8[%c0_25, %c0_26], %60 {strides = array<i32>} : memref<144x256xbf16, #tpu.memory_space<vmem>>, vector<8x64xbf16>,
    %62 = vector.extract_strided_slice %54 {offsets = [0, 1], sizes = [8, 64], strides = [1, 1]} : vector<8x82xf32> to vector<8x64xf32>
    %cst_27 = arith.constant 0.000000e+00 : f32
    %63 = vector.broadcast %cst_27 : f32 to vector<8x64xf32>
    %64 = vector.shape_cast %40 : vector<1x64xi1> to vector<1x64xi1>
    %65 = vector.broadcast %64 : vector<1x64xi1> to vector<8x64xi1>
    %66 = arith.select %65, %62, %63 : vector<8x64xi1>, vector<8x64xf32>
    %67 = arith.truncf %66 : vector<8x64xf32> to vector<8x64xbf16>
    %c8 = arith.constant 8 : index
    %c0_28 = arith.constant 0 : index
    %68 = vector.load %arg8[%c8, %c0_28] : memref<144x256xbf16, #tpu.memory_space<vmem>>, vector<8x64xbf16>
    tpu.vector_store %arg8[%c8, %c0_28], %67 {strides = array<i32>} : memref<144x256xbf16, #tpu.memory_space<vmem>>, vector<8x64xbf16>,
    %69 = vector.extract_strided_slice %54 {offsets = [0, 2], sizes = [8, 64], strides = [1, 1]} : vector<8x82xf32> to vector<8x64xf32>
    %cst_29 = arith.constant 0.000000e+00 : f32
    %70 = vector.broadcast %cst_29 : f32 to vector<8x64xf32>
    %71 = vector.shape_cast %48 : vector<1x64xi1> to vector<1x64xi1>
    %72 = vector.broadcast %71 : vector<1x64xi1> to vector<8x64xi1>
    %73 = arith.select %72, %69, %70 : vector<8x64xi1>, vector<8x64xf32>
    %74 = arith.truncf %73 : vector<8x64xf32> to vector<8x64xbf16>
    %c16 = arith.constant 16 : index
    %c0_30 = arith.constant 0 : index
    %75 = vector.load %arg8[%c16, %c0_30] : memref<144x256xbf16, #tpu.memory_space<vmem>>, vector<8x64xbf16>
    tpu.vector_store %arg8[%c16, %c0_30], %74 {strides = array<i32>} : memref<144x256xbf16, #tpu.memory_space<vmem>>, vector<8x64xbf16>,
    %76 = vector.extract_strided_slice %54 {offsets = [0, 8], sizes = [8, 64], strides = [1, 1]} : vector<8x82xf32> to vector<8x64xf32>
    %cst_31 = arith.constant 0.000000e+00 : f32
    %77 = vector.broadcast %cst_31 : f32 to vector<8x64xf32>
    %78 = vector.shape_cast %44 : vector<1x64xi1> to vector<1x64xi1>
    %79 = vector.broadcast %78 : vector<1x64xi1> to vector<8x64xi1>
    %80 = arith.select %79, %76, %77 : vector<8x64xi1>, vector<8x64xf32>
    %81 = arith.truncf %80 : vector<8x64xf32> to vector<8x64xbf16>
    %c24 = arith.constant 24 : index
    %c0_32 = arith.constant 0 : index
    %82 = vector.load %arg8[%c24, %c0_32] : memref<144x256xbf16, #tpu.memory_space<vmem>>, vector<8x64xbf16>
    tpu.vector_store %arg8[%c24, %c0_32], %81 {strides = array<i32>} : memref<144x256xbf16, #tpu.memory_space<vmem>>, vector<8x64xbf16>,
    %83 = arith.truncf %52 : vector<8x64xf32> to vector<8x64xbf16>
    %c32 = arith.constant 32 : index
    %c0_33 = arith.constant 0 : index
    %84 = vector.load %arg8[%c32, %c0_33] : memref<144x256xbf16, #tpu.memory_space<vmem>>, vector<8x64xbf16>
    tpu.vector_store %arg8[%c32, %c0_33], %83 {strides = array<i32>} : memref<144x256xbf16, #tpu.memory_space<vmem>>, vector<8x64xbf16>,
    %85 = vector.extract_strided_slice %54 {offsets = [0, 10], sizes = [8, 64], strides = [1, 1]} : vector<8x82xf32> to vector<8x64xf32>
    %cst_34 = arith.constant 0.000000e+00 : f32
    %86 = vector.broadcast %cst_34 : f32 to vector<8x64xf32>
    %87 = vector.shape_cast %46 : vector<1x64xi1> to vector<1x64xi1>
    %88 = vector.broadcast %87 : vector<1x64xi1> to vector<8x64xi1>
    %89 = arith.select %88, %85, %86 : vector<8x64xi1>, vector<8x64xf32>
    %90 = arith.truncf %89 : vector<8x64xf32> to vector<8x64xbf16>
    %c40 = arith.constant 40 : index
    %c0_35 = arith.constant 0 : index
    %91 = vector.load %arg8[%c40, %c0_35] : memref<144x256xbf16, #tpu.memory_space<vmem>>, vector<8x64xbf16>
    tpu.vector_store %arg8[%c40, %c0_35], %90 {strides = array<i32>} : memref<144x256xbf16, #tpu.memory_space<vmem>>, vector<8x64xbf16>,
    %92 = vector.extract_strided_slice %54 {offsets = [0, 16], sizes = [8, 64], strides = [1, 1]} : vector<8x82xf32> to vector<8x64xf32>
    %cst_36 = arith.constant 0.000000e+00 : f32
    %93 = vector.broadcast %cst_36 : f32 to vector<8x64xf32>
    %94 = vector.shape_cast %49 : vector<1x64xi1> to vector<1x64xi1>
    %95 = vector.broadcast %94 : vector<1x64xi1> to vector<8x64xi1>
    %96 = arith.select %95, %92, %93 : vector<8x64xi1>, vector<8x64xf32>
    %97 = arith.truncf %96 : vector<8x64xf32> to vector<8x64xbf16>
    %c48 = arith.constant 48 : index
    %c0_37 = arith.constant 0 : index
    %98 = vector.load %arg8[%c48, %c0_37] : memref<144x256xbf16, #tpu.memory_space<vmem>>, vector<8x64xbf16>
    tpu.vector_store %arg8[%c48, %c0_37], %97 {strides = array<i32>} : memref<144x256xbf16, #tpu.memory_space<vmem>>, vector<8x64xbf16>,
    %99 = vector.extract_strided_slice %54 {offsets = [0, 17], sizes = [8, 64], strides = [1, 1]} : vector<8x82xf32> to vector<8x64xf32>
    %cst_38 = arith.constant 0.000000e+00 : f32
    %100 = vector.broadcast %cst_38 : f32 to vector<8x64xf32>
    %101 = vector.shape_cast %42 : vector<1x64xi1> to vector<1x64xi1>
    %102 = vector.broadcast %101 : vector<1x64xi1> to vector<8x64xi1>
    %103 = arith.select %102, %99, %100 : vector<8x64xi1>, vector<8x64xf32>
    %104 = arith.truncf %103 : vector<8x64xf32> to vector<8x64xbf16>
    %c56 = arith.constant 56 : index
    %c0_39 = arith.constant 0 : index
    %105 = vector.load %arg8[%c56, %c0_39] : memref<144x256xbf16, #tpu.memory_space<vmem>>, vector<8x64xbf16>
    tpu.vector_store %arg8[%c56, %c0_39], %104 {strides = array<i32>} : memref<144x256xbf16, #tpu.memory_space<vmem>>, vector<8x64xbf16>,
    %106 = vector.extract_strided_slice %54 {offsets = [0, 18], sizes = [8, 64], strides = [1, 1]} : vector<8x82xf32> to vector<8x64xf32>
    %cst_40 = arith.constant 0.000000e+00 : f32
    %107 = vector.broadcast %cst_40 : f32 to vector<8x64xf32>
    %108 = vector.shape_cast %50 : vector<1x64xi1> to vector<1x64xi1>
    %109 = vector.broadcast %108 : vector<1x64xi1> to vector<8x64xi1>
    %110 = arith.select %109, %106, %107 : vector<8x64xi1>, vector<8x64xf32>
    %111 = arith.truncf %110 : vector<8x64xf32> to vector<8x64xbf16>
    %c64 = arith.constant 64 : index
    %c0_41 = arith.constant 0 : index
    %112 = vector.load %arg8[%c64, %c0_41] : memref<144x256xbf16, #tpu.memory_space<vmem>>, vector<8x64xbf16>
    tpu.vector_store %arg8[%c64, %c0_41], %111 {strides = array<i32>} : memref<144x256xbf16, #tpu.memory_space<vmem>>, vector<8x64xbf16>,
    %c0_42 = arith.constant 0 : index
    %c0_43 = arith.constant 0 : index
    %113 = vector.load %arg3[%c0_42, %c0_43] : memref<40x144xbf16, #tpu.memory_space<vmem>>, vector<8x72xbf16>
    %c0_44 = arith.constant 0 : index
    %c0_45 = arith.constant 0 : index
    %114 = vector.load %arg8[%c0_44, %c0_45] : memref<144x256xbf16, #tpu.memory_space<vmem>>, vector<72x64xbf16>
    %cst_46 = arith.constant dense<0.000000e+00> : vector<8x64xf32>
    %115 = tpu.matmul %113, %114, %cst_46 {dimension_numbers = #tpu.dot_dimension_numbers<[1], [0], [0], [1], [0, 0, 1, 1], [], []>} : vector<8x72xbf16>, vector<72x64xbf16>, vector<8x64xf32> -> vector<8x64xf32>
    %cst_47 = arith.constant 0.000000e+00 : f32
    %116 = vector.broadcast %cst_47 : f32 to vector<8x64xf32>
    %117 = arith.cmpf ogt, %115, %116 : vector<8x64xf32>
    %cst_48 = arith.constant 0.000000e+00 : f32
    %118 = vector.broadcast %cst_48 : f32 to vector<8x64xf32>
    %119 = arith.minimumf %115, %118 : vector<8x64xf32>
    %120 = math.exp %119 : vector<8x64xf32>
    %cst_49 = arith.constant 1.000000e+00 : f32
    %121 = vector.broadcast %cst_49 : f32 to vector<8x64xf32>
    %122 = arith.subf %120, %121 : vector<8x64xf32>
    %123 = arith.select %117, %115, %122 : vector<8x64xi1>, vector<8x64xf32>
    %cst_50 = arith.constant 0.000000e+00 : f32
    %124 = vector.broadcast %cst_50 : f32 to vector<8x9xf32>
    %125 = tpu.concatenate %124, %123, %124 in 1 : vector<8x9xf32>, vector<8x64xf32>, vector<8x9xf32> -> vector<8x82xf32>
    %126 = vector.extract_strided_slice %125 {offsets = [0, 0], sizes = [8, 64], strides = [1, 1]} : vector<8x82xf32> to vector<8x64xf32>
    %cst_51 = arith.constant 0.000000e+00 : f32
    %127 = vector.broadcast %cst_51 : f32 to vector<8x64xf32>
    %128 = vector.shape_cast %47 : vector<1x64xi1> to vector<1x64xi1>
    %129 = vector.broadcast %128 : vector<1x64xi1> to vector<8x64xi1>
    %130 = arith.select %129, %126, %127 : vector<8x64xi1>, vector<8x64xf32>
    %131 = arith.truncf %130 : vector<8x64xf32> to vector<8x64xbf16>
    %c0_52 = arith.constant 0 : index
    %c0_53 = arith.constant 0 : index
    %132 = vector.load %arg8[%c0_52, %c0_53] : memref<144x256xbf16, #tpu.memory_space<vmem>>, vector<8x64xbf16>
    tpu.vector_store %arg8[%c0_52, %c0_53], %131 {strides = array<i32>} : memref<144x256xbf16, #tpu.memory_space<vmem>>, vector<8x64xbf16>,
    %133 = vector.extract_strided_slice %125 {offsets = [0, 1], sizes = [8, 64], strides = [1, 1]} : vector<8x82xf32> to vector<8x64xf32>
    %cst_54 = arith.constant 0.000000e+00 : f32
    %134 = vector.broadcast %cst_54 : f32 to vector<8x64xf32>
    %135 = vector.shape_cast %40 : vector<1x64xi1> to vector<1x64xi1>
    %136 = vector.broadcast %135 : vector<1x64xi1> to vector<8x64xi1>
    %137 = arith.select %136, %133, %134 : vector<8x64xi1>, vector<8x64xf32>
    %138 = arith.truncf %137 : vector<8x64xf32> to vector<8x64xbf16>
    %c8_55 = arith.constant 8 : index
    %c0_56 = arith.constant 0 : index
    %139 = vector.load %arg8[%c8_55, %c0_56] : memref<144x256xbf16, #tpu.memory_space<vmem>>, vector<8x64xbf16>
    tpu.vector_store %arg8[%c8_55, %c0_56], %138 {strides = array<i32>} : memref<144x256xbf16, #tpu.memory_space<vmem>>, vector<8x64xbf16>,
    %140 = vector.extract_strided_slice %125 {offsets = [0, 2], sizes = [8, 64], strides = [1, 1]} : vector<8x82xf32> to vector<8x64xf32>
    %cst_57 = arith.constant 0.000000e+00 : f32
    %141 = vector.broadcast %cst_57 : f32 to vector<8x64xf32>
    %142 = vector.shape_cast %48 : vector<1x64xi1> to vector<1x64xi1>
    %143 = vector.broadcast %142 : vector<1x64xi1> to vector<8x64xi1>
    %144 = arith.select %143, %140, %141 : vector<8x64xi1>, vector<8x64xf32>
    %145 = arith.truncf %144 : vector<8x64xf32> to vector<8x64xbf16>
    %c16_58 = arith.constant 16 : index
    %c0_59 = arith.constant 0 : index
    %146 = vector.load %arg8[%c16_58, %c0_59] : memref<144x256xbf16, #tpu.memory_space<vmem>>, vector<8x64xbf16>
    tpu.vector_store %arg8[%c16_58, %c0_59], %145 {strides = array<i32>} : memref<144x256xbf16, #tpu.memory_space<vmem>>, vector<8x64xbf16>,
    %147 = vector.extract_strided_slice %125 {offsets = [0, 8], sizes = [8, 64], strides = [1, 1]} : vector<8x82xf32> to vector<8x64xf32>
    %cst_60 = arith.constant 0.000000e+00 : f32
    %148 = vector.broadcast %cst_60 : f32 to vector<8x64xf32>
    %149 = vector.shape_cast %44 : vector<1x64xi1> to vector<1x64xi1>
    %150 = vector.broadcast %149 : vector<1x64xi1> to vector<8x64xi1>
    %151 = arith.select %150, %147, %148 : vector<8x64xi1>, vector<8x64xf32>
    %152 = arith.truncf %151 : vector<8x64xf32> to vector<8x64xbf16>
    %c24_61 = arith.constant 24 : index
    %c0_62 = arith.constant 0 : index
    %153 = vector.load %arg8[%c24_61, %c0_62] : memref<144x256xbf16, #tpu.memory_space<vmem>>, vector<8x64xbf16>
    tpu.vector_store %arg8[%c24_61, %c0_62], %152 {strides = array<i32>} : memref<144x256xbf16, #tpu.memory_space<vmem>>, vector<8x64xbf16>,
    %154 = arith.truncf %123 : vector<8x64xf32> to vector<8x64xbf16>
    %c32_63 = arith.constant 32 : index
    %c0_64 = arith.constant 0 : index
    %155 = vector.load %arg8[%c32_63, %c0_64] : memref<144x256xbf16, #tpu.memory_space<vmem>>, vector<8x64xbf16>
    tpu.vector_store %arg8[%c32_63, %c0_64], %154 {strides = array<i32>} : memref<144x256xbf16, #tpu.memory_space<vmem>>, vector<8x64xbf16>,
    %156 = vector.extract_strided_slice %125 {offsets = [0, 10], sizes = [8, 64], strides = [1, 1]} : vector<8x82xf32> to vector<8x64xf32>
    %cst_65 = arith.constant 0.000000e+00 : f32
    %157 = vector.broadcast %cst_65 : f32 to vector<8x64xf32>
    %158 = vector.shape_cast %46 : vector<1x64xi1> to vector<1x64xi1>
    %159 = vector.broadcast %158 : vector<1x64xi1> to vector<8x64xi1>
    %160 = arith.select %159, %156, %157 : vector<8x64xi1>, vector<8x64xf32>
    %161 = arith.truncf %160 : vector<8x64xf32> to vector<8x64xbf16>
    %c40_66 = arith.constant 40 : index
    %c0_67 = arith.constant 0 : index
    %162 = vector.load %arg8[%c40_66, %c0_67] : memref<144x256xbf16, #tpu.memory_space<vmem>>, vector<8x64xbf16>
    tpu.vector_store %arg8[%c40_66, %c0_67], %161 {strides = array<i32>} : memref<144x256xbf16, #tpu.memory_space<vmem>>, vector<8x64xbf16>,
    %163 = vector.extract_strided_slice %125 {offsets = [0, 16], sizes = [8, 64], strides = [1, 1]} : vector<8x82xf32> to vector<8x64xf32>
    %cst_68 = arith.constant 0.000000e+00 : f32
    %164 = vector.broadcast %cst_68 : f32 to vector<8x64xf32>
    %165 = vector.shape_cast %49 : vector<1x64xi1> to vector<1x64xi1>
    %166 = vector.broadcast %165 : vector<1x64xi1> to vector<8x64xi1>
    %167 = arith.select %166, %163, %164 : vector<8x64xi1>, vector<8x64xf32>
    %168 = arith.truncf %167 : vector<8x64xf32> to vector<8x64xbf16>
    %c48_69 = arith.constant 48 : index
    %c0_70 = arith.constant 0 : index
    %169 = vector.load %arg8[%c48_69, %c0_70] : memref<144x256xbf16, #tpu.memory_space<vmem>>, vector<8x64xbf16>
    tpu.vector_store %arg8[%c48_69, %c0_70], %168 {strides = array<i32>} : memref<144x256xbf16, #tpu.memory_space<vmem>>, vector<8x64xbf16>,
    %170 = vector.extract_strided_slice %125 {offsets = [0, 17], sizes = [8, 64], strides = [1, 1]} : vector<8x82xf32> to vector<8x64xf32>
    %cst_71 = arith.constant 0.000000e+00 : f32
    %171 = vector.broadcast %cst_71 : f32 to vector<8x64xf32>
    %172 = vector.shape_cast %42 : vector<1x64xi1> to vector<1x64xi1>
    %173 = vector.broadcast %172 : vector<1x64xi1> to vector<8x64xi1>
    %174 = arith.select %173, %170, %171 : vector<8x64xi1>, vector<8x64xf32>
    %175 = arith.truncf %174 : vector<8x64xf32> to vector<8x64xbf16>
    %c56_72 = arith.constant 56 : index
    %c0_73 = arith.constant 0 : index
    %176 = vector.load %arg8[%c56_72, %c0_73] : memref<144x256xbf16, #tpu.memory_space<vmem>>, vector<8x64xbf16>
    tpu.vector_store %arg8[%c56_72, %c0_73], %175 {strides = array<i32>} : memref<144x256xbf16, #tpu.memory_space<vmem>>, vector<8x64xbf16>,
    %177 = vector.extract_strided_slice %125 {offsets = [0, 18], sizes = [8, 64], strides = [1, 1]} : vector<8x82xf32> to vector<8x64xf32>
    %cst_74 = arith.constant 0.000000e+00 : f32
    %178 = vector.broadcast %cst_74 : f32 to vector<8x64xf32>
    %179 = vector.shape_cast %50 : vector<1x64xi1> to vector<1x64xi1>
    %180 = vector.broadcast %179 : vector<1x64xi1> to vector<8x64xi1>
    %181 = arith.select %180, %177, %178 : vector<8x64xi1>, vector<8x64xf32>
    %182 = arith.truncf %181 : vector<8x64xf32> to vector<8x64xbf16>
    %c64_75 = arith.constant 64 : index
    %c0_76 = arith.constant 0 : index
    %183 = vector.load %arg8[%c64_75, %c0_76] : memref<144x256xbf16, #tpu.memory_space<vmem>>, vector<8x64xbf16>
    tpu.vector_store %arg8[%c64_75, %c0_76], %182 {strides = array<i32>} : memref<144x256xbf16, #tpu.memory_space<vmem>>, vector<8x64xbf16>,
    %c8_77 = arith.constant 8 : index
    %c0_78 = arith.constant 0 : index
    %184 = vector.load %arg3[%c8_77, %c0_78] : memref<40x144xbf16, #tpu.memory_space<vmem>>, vector<8x72xbf16>
    %c0_79 = arith.constant 0 : index
    %c0_80 = arith.constant 0 : index
    %185 = vector.load %arg8[%c0_79, %c0_80] : memref<144x256xbf16, #tpu.memory_space<vmem>>, vector<72x64xbf16>
    %cst_81 = arith.constant dense<0.000000e+00> : vector<8x64xf32>
    %186 = tpu.matmul %184, %185, %cst_81 {dimension_numbers = #tpu.dot_dimension_numbers<[1], [0], [0], [1], [0, 0, 1, 1], [], []>} : vector<8x72xbf16>, vector<72x64xbf16>, vector<8x64xf32> -> vector<8x64xf32>
    %cst_82 = arith.constant 0.000000e+00 : f32
    %187 = vector.broadcast %cst_82 : f32 to vector<8x64xf32>
    %188 = arith.cmpf ogt, %186, %187 : vector<8x64xf32>
    %cst_83 = arith.constant 0.000000e+00 : f32
    %189 = vector.broadcast %cst_83 : f32 to vector<8x64xf32>
    %190 = arith.minimumf %186, %189 : vector<8x64xf32>
    %191 = math.exp %190 : vector<8x64xf32>
    %cst_84 = arith.constant 1.000000e+00 : f32
    %192 = vector.broadcast %cst_84 : f32 to vector<8x64xf32>
    %193 = arith.subf %191, %192 : vector<8x64xf32>
    %194 = arith.select %188, %186, %193 : vector<8x64xi1>, vector<8x64xf32>
    %195 = arith.truncf %194 : vector<8x64xf32> to vector<8x64xbf16>
    %c0_85 = arith.constant 0 : index
    %c0_86 = arith.constant 0 : index
    %196 = vector.load %arg5[%c0_85, %c0_86] : memref<64x256xbf16, #tpu.memory_space<vmem>>, vector<64x256xbf16>
    %cst_87 = arith.constant dense<0.000000e+00> : vector<8x256xf32>
    %197 = tpu.matmul %195, %196, %cst_87 {dimension_numbers = #tpu.dot_dimension_numbers<[1], [0], [0], [1], [0, 0, 1, 1], [], []>} : vector<8x64xbf16>, vector<64x256xbf16>, vector<8x256xf32> -> vector<8x256xf32>
    %c0_88 = arith.constant 0 : index
    %c0_89 = arith.constant 0 : index
    %198 = vector.load %arg6[%c0_88, %c0_89] : memref<16x256xbf16, #tpu.memory_space<vmem>>, vector<16x256xbf16>
    %cst_90 = arith.constant dense<0.000000e+00> : vector<8x256xf32>
    %199 = tpu.matmul %21, %198, %cst_90 {dimension_numbers = #tpu.dot_dimension_numbers<[1], [0], [0], [1], [0, 0, 1, 1], [], []>} : vector<8x16xbf16>, vector<16x256xbf16>, vector<8x256xf32> -> vector<8x256xf32>
    %200 = tpu.iota {dimensions = array<i32: 1>} : vector<1x256xi32>
    %c16_i32 = arith.constant 16 : i32
    %c0_i32_91 = arith.constant 0 : i32
    %201 = arith.cmpi eq, %c16_i32, %c0_i32_91 : i32
    %c1_i32_92 = arith.constant 1 : i32
    %202 = arith.select %201, %c1_i32_92, %c16_i32 : i32
    %203 = vector.broadcast %202 : i32 to vector<1x256xi32>
    %204 = arith.remsi %200, %203 : vector<1x256xi32>
    %c0_i32_93 = arith.constant 0 : i32
    %205 = vector.broadcast %c0_i32_93 : i32 to vector<1x256xi32>
    %206 = arith.cmpi ne, %204, %205 : vector<1x256xi32>
    %c0_i32_94 = arith.constant 0 : i32
    %207 = vector.broadcast %c0_i32_94 : i32 to vector<1x256xi32>
    %208 = arith.cmpi slt, %204, %207 : vector<1x256xi32>
    %c0_i32_95 = arith.constant 0 : i32
    %209 = arith.cmpi slt, %202, %c0_i32_95 : i32
    %210 = vector.broadcast %209 : i1 to vector<1x256xi1>
    %211 = vector.broadcast %210 : vector<1x256xi1> to vector<1x256xi1>
    %212 = arith.xori %208, %211 : vector<1x256xi1>
    %213 = arith.andi %212, %206 : vector<1x256xi1>
    %214 = vector.broadcast %202 : i32 to vector<1x256xi32>
    %215 = arith.addi %204, %214 : vector<1x256xi32>
    %216 = arith.select %213, %215, %204 : vector<1x256xi1>, vector<1x256xi32>
    %c16_i32_96 = arith.constant 16 : i32
    %217 = vector.broadcast %c16_i32_96 : i32 to vector<1x256xi32>
    %218 = arith.cmpi sge, %200, %217 : vector<1x256xi32>
    %c240_i32 = arith.constant 240 : i32
    %219 = vector.broadcast %c240_i32 : i32 to vector<1x256xi32>
    %220 = arith.cmpi slt, %200, %219 : vector<1x256xi32>
    %c1_i32_97 = arith.constant 1 : i32
    %221 = vector.broadcast %c1_i32_97 : i32 to vector<1x256xi32>
    %222 = arith.cmpi sge, %216, %221 : vector<1x256xi32>
    %c14_i32 = arith.constant 14 : i32
    %223 = vector.broadcast %c14_i32 : i32 to vector<1x256xi32>
    %224 = arith.cmpi sle, %216, %223 : vector<1x256xi32>
    %225 = arith.andi %218, %222 : vector<1x256xi1>
    %226 = arith.andi %218, %224 : vector<1x256xi1>
    %227 = arith.andi %220, %222 : vector<1x256xi1>
    %228 = arith.andi %220, %224 : vector<1x256xi1>
    %c17_i32 = arith.constant 17 : i32
    %229 = tpu.dynamic_rotate %197 by %c17_i32 dim 1 : vector<8x256xf32>, i32 -> vector<8x256xf32>
    %cst_98 = arith.constant 0.000000e+00 : f32
    %230 = vector.broadcast %cst_98 : f32 to vector<8x256xf32>
    %231 = vector.shape_cast %225 : vector<1x256xi1> to vector<1x256xi1>
    %232 = vector.broadcast %231 : vector<1x256xi1> to vector<8x256xi1>
    %233 = arith.select %232, %229, %230 : vector<8x256xi1>, vector<8x256xf32>
    %234 = arith.truncf %233 : vector<8x256xf32> to vector<8x256xbf16>
    %c0_99 = arith.constant 0 : index
    %c0_100 = arith.constant 0 : index
    %235 = vector.load %arg8[%c0_99, %c0_100] : memref<144x256xbf16, #tpu.memory_space<vmem>>, vector<8x256xbf16>
    tpu.vector_store %arg8[%c0_99, %c0_100], %234 {strides = array<i32>} : memref<144x256xbf16, #tpu.memory_space<vmem>>, vector<8x256xbf16>,
    %c17_i32_101 = arith.constant 17 : i32
    %236 = tpu.dynamic_rotate %199 by %c17_i32_101 dim 1 : vector<8x256xf32>, i32 -> vector<8x256xf32>
    %cst_102 = arith.constant 0.000000e+00 : f32
    %237 = vector.broadcast %cst_102 : f32 to vector<8x256xf32>
    %238 = vector.shape_cast %225 : vector<1x256xi1> to vector<1x256xi1>
    %239 = vector.broadcast %238 : vector<1x256xi1> to vector<8x256xi1>
    %240 = arith.select %239, %236, %237 : vector<8x256xi1>, vector<8x256xf32>
    %241 = arith.truncf %240 : vector<8x256xf32> to vector<8x256xbf16>
    %c8_103 = arith.constant 8 : index
    %c0_104 = arith.constant 0 : index
    %242 = vector.load %arg8[%c8_103, %c0_104] : memref<144x256xbf16, #tpu.memory_space<vmem>>, vector<8x256xbf16>
    tpu.vector_store %arg8[%c8_103, %c0_104], %241 {strides = array<i32>} : memref<144x256xbf16, #tpu.memory_space<vmem>>, vector<8x256xbf16>,
    %c16_i32_105 = arith.constant 16 : i32
    %243 = tpu.dynamic_rotate %197 by %c16_i32_105 dim 1 : vector<8x256xf32>, i32 -> vector<8x256xf32>
    %cst_106 = arith.constant 0.000000e+00 : f32
    %244 = vector.broadcast %cst_106 : f32 to vector<8x256xf32>
    %245 = vector.shape_cast %218 : vector<1x256xi1> to vector<1x256xi1>
    %246 = vector.broadcast %245 : vector<1x256xi1> to vector<8x256xi1>
    %247 = arith.select %246, %243, %244 : vector<8x256xi1>, vector<8x256xf32>
    %248 = arith.truncf %247 : vector<8x256xf32> to vector<8x256xbf16>
    %c16_107 = arith.constant 16 : index
    %c0_108 = arith.constant 0 : index
    %249 = vector.load %arg8[%c16_107, %c0_108] : memref<144x256xbf16, #tpu.memory_space<vmem>>, vector<8x256xbf16>
    tpu.vector_store %arg8[%c16_107, %c0_108], %248 {strides = array<i32>} : memref<144x256xbf16, #tpu.memory_space<vmem>>, vector<8x256xbf16>,
    %c16_i32_109 = arith.constant 16 : i32
    %250 = tpu.dynamic_rotate %199 by %c16_i32_109 dim 1 : vector<8x256xf32>, i32 -> vector<8x256xf32>
    %cst_110 = arith.constant 0.000000e+00 : f32
    %251 = vector.broadcast %cst_110 : f32 to vector<8x256xf32>
    %252 = vector.shape_cast %218 : vector<1x256xi1> to vector<1x256xi1>
    %253 = vector.broadcast %252 : vector<1x256xi1> to vector<8x256xi1>
    %254 = arith.select %253, %250, %251 : vector<8x256xi1>, vector<8x256xf32>
    %255 = arith.truncf %254 : vector<8x256xf32> to vector<8x256xbf16>
    %c24_111 = arith.constant 24 : index
    %c0_112 = arith.constant 0 : index
    %256 = vector.load %arg8[%c24_111, %c0_112] : memref<144x256xbf16, #tpu.memory_space<vmem>>, vector<8x256xbf16>
    tpu.vector_store %arg8[%c24_111, %c0_112], %255 {strides = array<i32>} : memref<144x256xbf16, #tpu.memory_space<vmem>>, vector<8x256xbf16>,
    %c15_i32 = arith.constant 15 : i32
    %257 = tpu.dynamic_rotate %197 by %c15_i32 dim 1 : vector<8x256xf32>, i32 -> vector<8x256xf32>
    %cst_113 = arith.constant 0.000000e+00 : f32
    %258 = vector.broadcast %cst_113 : f32 to vector<8x256xf32>
    %259 = vector.shape_cast %226 : vector<1x256xi1> to vector<1x256xi1>
    %260 = vector.broadcast %259 : vector<1x256xi1> to vector<8x256xi1>
    %261 = arith.select %260, %257, %258 : vector<8x256xi1>, vector<8x256xf32>
    %262 = arith.truncf %261 : vector<8x256xf32> to vector<8x256xbf16>
    %c32_114 = arith.constant 32 : index
    %c0_115 = arith.constant 0 : index
    %263 = vector.load %arg8[%c32_114, %c0_115] : memref<144x256xbf16, #tpu.memory_space<vmem>>, vector<8x256xbf16>
    tpu.vector_store %arg8[%c32_114, %c0_115], %262 {strides = array<i32>} : memref<144x256xbf16, #tpu.memory_space<vmem>>, vector<8x256xbf16>,
    %c15_i32_116 = arith.constant 15 : i32
    %264 = tpu.dynamic_rotate %199 by %c15_i32_116 dim 1 : vector<8x256xf32>, i32 -> vector<8x256xf32>
    %cst_117 = arith.constant 0.000000e+00 : f32
    %265 = vector.broadcast %cst_117 : f32 to vector<8x256xf32>
    %266 = vector.shape_cast %226 : vector<1x256xi1> to vector<1x256xi1>
    %267 = vector.broadcast %266 : vector<1x256xi1> to vector<8x256xi1>
    %268 = arith.select %267, %264, %265 : vector<8x256xi1>, vector<8x256xf32>
    %269 = arith.truncf %268 : vector<8x256xf32> to vector<8x256xbf16>
    %c40_118 = arith.constant 40 : index
    %c0_119 = arith.constant 0 : index
    %270 = vector.load %arg8[%c40_118, %c0_119] : memref<144x256xbf16, #tpu.memory_space<vmem>>, vector<8x256xbf16>
    tpu.vector_store %arg8[%c40_118, %c0_119], %269 {strides = array<i32>} : memref<144x256xbf16, #tpu.memory_space<vmem>>, vector<8x256xbf16>,
    %c1_i32_120 = arith.constant 1 : i32
    %271 = tpu.dynamic_rotate %197 by %c1_i32_120 dim 1 : vector<8x256xf32>, i32 -> vector<8x256xf32>
    %cst_121 = arith.constant 0.000000e+00 : f32
    %272 = vector.broadcast %cst_121 : f32 to vector<8x256xf32>
    %273 = vector.shape_cast %222 : vector<1x256xi1> to vector<1x256xi1>
    %274 = vector.broadcast %273 : vector<1x256xi1> to vector<8x256xi1>
    %275 = arith.select %274, %271, %272 : vector<8x256xi1>, vector<8x256xf32>
    %276 = arith.truncf %275 : vector<8x256xf32> to vector<8x256xbf16>
    %c48_122 = arith.constant 48 : index
    %c0_123 = arith.constant 0 : index
    %277 = vector.load %arg8[%c48_122, %c0_123] : memref<144x256xbf16, #tpu.memory_space<vmem>>, vector<8x256xbf16>
    tpu.vector_store %arg8[%c48_122, %c0_123], %276 {strides = array<i32>} : memref<144x256xbf16, #tpu.memory_space<vmem>>, vector<8x256xbf16>,
    %c1_i32_124 = arith.constant 1 : i32
    %278 = tpu.dynamic_rotate %199 by %c1_i32_124 dim 1 : vector<8x256xf32>, i32 -> vector<8x256xf32>
    %cst_125 = arith.constant 0.000000e+00 : f32
    %279 = vector.broadcast %cst_125 : f32 to vector<8x256xf32>
    %280 = vector.shape_cast %222 : vector<1x256xi1> to vector<1x256xi1>
    %281 = vector.broadcast %280 : vector<1x256xi1> to vector<8x256xi1>
    %282 = arith.select %281, %278, %279 : vector<8x256xi1>, vector<8x256xf32>
    %283 = arith.truncf %282 : vector<8x256xf32> to vector<8x256xbf16>
    %c56_126 = arith.constant 56 : index
    %c0_127 = arith.constant 0 : index
    %284 = vector.load %arg8[%c56_126, %c0_127] : memref<144x256xbf16, #tpu.memory_space<vmem>>, vector<8x256xbf16>
    tpu.vector_store %arg8[%c56_126, %c0_127], %283 {strides = array<i32>} : memref<144x256xbf16, #tpu.memory_space<vmem>>, vector<8x256xbf16>,
    %285 = arith.truncf %197 : vector<8x256xf32> to vector<8x256xbf16>
    %c64_128 = arith.constant 64 : index
    %c0_129 = arith.constant 0 : index
    %286 = vector.load %arg8[%c64_128, %c0_129] : memref<144x256xbf16, #tpu.memory_space<vmem>>, vector<8x256xbf16>
    tpu.vector_store %arg8[%c64_128, %c0_129], %285 {strides = array<i32>} : memref<144x256xbf16, #tpu.memory_space<vmem>>, vector<8x256xbf16>,
    %287 = arith.truncf %199 : vector<8x256xf32> to vector<8x256xbf16>
    %c72 = arith.constant 72 : index
    %c0_130 = arith.constant 0 : index
    %288 = vector.load %arg8[%c72, %c0_130] : memref<144x256xbf16, #tpu.memory_space<vmem>>, vector<8x256xbf16>
    tpu.vector_store %arg8[%c72, %c0_130], %287 {strides = array<i32>} : memref<144x256xbf16, #tpu.memory_space<vmem>>, vector<8x256xbf16>,
    %c255_i32 = arith.constant 255 : i32
    %289 = tpu.dynamic_rotate %197 by %c255_i32 dim 1 : vector<8x256xf32>, i32 -> vector<8x256xf32>
    %cst_131 = arith.constant 0.000000e+00 : f32
    %290 = vector.broadcast %cst_131 : f32 to vector<8x256xf32>
    %291 = vector.shape_cast %224 : vector<1x256xi1> to vector<1x256xi1>
    %292 = vector.broadcast %291 : vector<1x256xi1> to vector<8x256xi1>
    %293 = arith.select %292, %289, %290 : vector<8x256xi1>, vector<8x256xf32>
    %294 = arith.truncf %293 : vector<8x256xf32> to vector<8x256xbf16>
    %c80 = arith.constant 80 : index
    %c0_132 = arith.constant 0 : index
    %295 = vector.load %arg8[%c80, %c0_132] : memref<144x256xbf16, #tpu.memory_space<vmem>>, vector<8x256xbf16>
    tpu.vector_store %arg8[%c80, %c0_132], %294 {strides = array<i32>} : memref<144x256xbf16, #tpu.memory_space<vmem>>, vector<8x256xbf16>,
    %c255_i32_133 = arith.constant 255 : i32
    %296 = tpu.dynamic_rotate %199 by %c255_i32_133 dim 1 : vector<8x256xf32>, i32 -> vector<8x256xf32>
    %cst_134 = arith.constant 0.000000e+00 : f32
    %297 = vector.broadcast %cst_134 : f32 to vector<8x256xf32>
    %298 = vector.shape_cast %224 : vector<1x256xi1> to vector<1x256xi1>
    %299 = vector.broadcast %298 : vector<1x256xi1> to vector<8x256xi1>
    %300 = arith.select %299, %296, %297 : vector<8x256xi1>, vector<8x256xf32>
    %301 = arith.truncf %300 : vector<8x256xf32> to vector<8x256xbf16>
    %c88 = arith.constant 88 : index
    %c0_135 = arith.constant 0 : index
    %302 = vector.load %arg8[%c88, %c0_135] : memref<144x256xbf16, #tpu.memory_space<vmem>>, vector<8x256xbf16>
    tpu.vector_store %arg8[%c88, %c0_135], %301 {strides = array<i32>} : memref<144x256xbf16, #tpu.memory_space<vmem>>, vector<8x256xbf16>,
    %c241_i32 = arith.constant 241 : i32
    %303 = tpu.dynamic_rotate %197 by %c241_i32 dim 1 : vector<8x256xf32>, i32 -> vector<8x256xf32>
    %cst_136 = arith.constant 0.000000e+00 : f32
    %304 = vector.broadcast %cst_136 : f32 to vector<8x256xf32>
    %305 = vector.shape_cast %227 : vector<1x256xi1> to vector<1x256xi1>
    %306 = vector.broadcast %305 : vector<1x256xi1> to vector<8x256xi1>
    %307 = arith.select %306, %303, %304 : vector<8x256xi1>, vector<8x256xf32>
    %308 = arith.truncf %307 : vector<8x256xf32> to vector<8x256xbf16>
    %c96 = arith.constant 96 : index
    %c0_137 = arith.constant 0 : index
    %309 = vector.load %arg8[%c96, %c0_137] : memref<144x256xbf16, #tpu.memory_space<vmem>>, vector<8x256xbf16>
    tpu.vector_store %arg8[%c96, %c0_137], %308 {strides = array<i32>} : memref<144x256xbf16, #tpu.memory_space<vmem>>, vector<8x256xbf16>,
    %c241_i32_138 = arith.constant 241 : i32
    %310 = tpu.dynamic_rotate %199 by %c241_i32_138 dim 1 : vector<8x256xf32>, i32 -> vector<8x256xf32>
    %cst_139 = arith.constant 0.000000e+00 : f32
    %311 = vector.broadcast %cst_139 : f32 to vector<8x256xf32>
    %312 = vector.shape_cast %227 : vector<1x256xi1> to vector<1x256xi1>
    %313 = vector.broadcast %312 : vector<1x256xi1> to vector<8x256xi1>
    %314 = arith.select %313, %310, %311 : vector<8x256xi1>, vector<8x256xf32>
    %315 = arith.truncf %314 : vector<8x256xf32> to vector<8x256xbf16>
    %c104 = arith.constant 104 : index
    %c0_140 = arith.constant 0 : index
    %316 = vector.load %arg8[%c104, %c0_140] : memref<144x256xbf16, #tpu.memory_space<vmem>>, vector<8x256xbf16>
    tpu.vector_store %arg8[%c104, %c0_140], %315 {strides = array<i32>} : memref<144x256xbf16, #tpu.memory_space<vmem>>, vector<8x256xbf16>,
    %c240_i32_141 = arith.constant 240 : i32
    %317 = tpu.dynamic_rotate %197 by %c240_i32_141 dim 1 : vector<8x256xf32>, i32 -> vector<8x256xf32>
    %cst_142 = arith.constant 0.000000e+00 : f32
    %318 = vector.broadcast %cst_142 : f32 to vector<8x256xf32>
    %319 = vector.shape_cast %220 : vector<1x256xi1> to vector<1x256xi1>
    %320 = vector.broadcast %319 : vector<1x256xi1> to vector<8x256xi1>
    %321 = arith.select %320, %317, %318 : vector<8x256xi1>, vector<8x256xf32>
    %322 = arith.truncf %321 : vector<8x256xf32> to vector<8x256xbf16>
    %c112 = arith.constant 112 : index
    %c0_143 = arith.constant 0 : index
    %323 = vector.load %arg8[%c112, %c0_143] : memref<144x256xbf16, #tpu.memory_space<vmem>>, vector<8x256xbf16>
    tpu.vector_store %arg8[%c112, %c0_143], %322 {strides = array<i32>} : memref<144x256xbf16, #tpu.memory_space<vmem>>, vector<8x256xbf16>,
    %c240_i32_144 = arith.constant 240 : i32
    %324 = tpu.dynamic_rotate %199 by %c240_i32_144 dim 1 : vector<8x256xf32>, i32 -> vector<8x256xf32>
    %cst_145 = arith.constant 0.000000e+00 : f32
    %325 = vector.broadcast %cst_145 : f32 to vector<8x256xf32>
    %326 = vector.shape_cast %220 : vector<1x256xi1> to vector<1x256xi1>
    %327 = vector.broadcast %326 : vector<1x256xi1> to vector<8x256xi1>
    %328 = arith.select %327, %324, %325 : vector<8x256xi1>, vector<8x256xf32>
    %329 = arith.truncf %328 : vector<8x256xf32> to vector<8x256xbf16>
    %c120 = arith.constant 120 : index
    %c0_146 = arith.constant 0 : index
    %330 = vector.load %arg8[%c120, %c0_146] : memref<144x256xbf16, #tpu.memory_space<vmem>>, vector<8x256xbf16>
    tpu.vector_store %arg8[%c120, %c0_146], %329 {strides = array<i32>} : memref<144x256xbf16, #tpu.memory_space<vmem>>, vector<8x256xbf16>,
    %c239_i32 = arith.constant 239 : i32
    %331 = tpu.dynamic_rotate %197 by %c239_i32 dim 1 : vector<8x256xf32>, i32 -> vector<8x256xf32>
    %cst_147 = arith.constant 0.000000e+00 : f32
    %332 = vector.broadcast %cst_147 : f32 to vector<8x256xf32>
    %333 = vector.shape_cast %228 : vector<1x256xi1> to vector<1x256xi1>
    %334 = vector.broadcast %333 : vector<1x256xi1> to vector<8x256xi1>
    %335 = arith.select %334, %331, %332 : vector<8x256xi1>, vector<8x256xf32>
    %336 = arith.truncf %335 : vector<8x256xf32> to vector<8x256xbf16>
    %c128 = arith.constant 128 : index
    %c0_148 = arith.constant 0 : index
    %337 = vector.load %arg8[%c128, %c0_148] : memref<144x256xbf16, #tpu.memory_space<vmem>>, vector<8x256xbf16>
    tpu.vector_store %arg8[%c128, %c0_148], %336 {strides = array<i32>} : memref<144x256xbf16, #tpu.memory_space<vmem>>, vector<8x256xbf16>,
    %c239_i32_149 = arith.constant 239 : i32
    %338 = tpu.dynamic_rotate %199 by %c239_i32_149 dim 1 : vector<8x256xf32>, i32 -> vector<8x256xf32>
    %cst_150 = arith.constant 0.000000e+00 : f32
    %339 = vector.broadcast %cst_150 : f32 to vector<8x256xf32>
    %340 = vector.shape_cast %228 : vector<1x256xi1> to vector<1x256xi1>
    %341 = vector.broadcast %340 : vector<1x256xi1> to vector<8x256xi1>
    %342 = arith.select %341, %338, %339 : vector<8x256xi1>, vector<8x256xf32>
    %343 = arith.truncf %342 : vector<8x256xf32> to vector<8x256xbf16>
    %c136 = arith.constant 136 : index
    %c0_151 = arith.constant 0 : index
    %344 = vector.load %arg8[%c136, %c0_151] : memref<144x256xbf16, #tpu.memory_space<vmem>>, vector<8x256xbf16>
    tpu.vector_store %arg8[%c136, %c0_151], %343 {strides = array<i32>} : memref<144x256xbf16, #tpu.memory_space<vmem>>, vector<8x256xbf16>,
    %c16_152 = arith.constant 16 : index
    %c0_153 = arith.constant 0 : index
    %345 = vector.load %arg3[%c16_152, %c0_153] : memref<40x144xbf16, #tpu.memory_space<vmem>>, vector<8x144xbf16>
    %c0_154 = arith.constant 0 : index
    %c0_155 = arith.constant 0 : index
    %346 = vector.load %arg8[%c0_154, %c0_155] : memref<144x256xbf16, #tpu.memory_space<vmem>>, vector<144x256xbf16>
    %cst_156 = arith.constant dense<0.000000e+00> : vector<8x256xf32>
    %347 = tpu.matmul %345, %346, %cst_156 {dimension_numbers = #tpu.dot_dimension_numbers<[1], [0], [0], [1], [0, 0, 1, 1], [], []>} : vector<8x144xbf16>, vector<144x256xbf16>, vector<8x256xf32> -> vector<8x256xf32>
    %cst_157 = arith.constant 0.000000e+00 : f32
    %348 = vector.broadcast %cst_157 : f32 to vector<8x256xf32>
    %349 = arith.cmpf ogt, %347, %348 : vector<8x256xf32>
    %cst_158 = arith.constant 0.000000e+00 : f32
    %350 = vector.broadcast %cst_158 : f32 to vector<8x256xf32>
    %351 = arith.minimumf %347, %350 : vector<8x256xf32>
    %352 = math.exp %351 : vector<8x256xf32>
    %cst_159 = arith.constant 1.000000e+00 : f32
    %353 = vector.broadcast %cst_159 : f32 to vector<8x256xf32>
    %354 = arith.subf %352, %353 : vector<8x256xf32>
    %355 = arith.select %349, %347, %354 : vector<8x256xi1>, vector<8x256xf32>
    %c17_i32_160 = arith.constant 17 : i32
    %356 = tpu.dynamic_rotate %355 by %c17_i32_160 dim 1 : vector<8x256xf32>, i32 -> vector<8x256xf32>
    %cst_161 = arith.constant 0.000000e+00 : f32
    %357 = vector.broadcast %cst_161 : f32 to vector<8x256xf32>
    %358 = vector.shape_cast %225 : vector<1x256xi1> to vector<1x256xi1>
    %359 = vector.broadcast %358 : vector<1x256xi1> to vector<8x256xi1>
    %360 = arith.select %359, %356, %357 : vector<8x256xi1>, vector<8x256xf32>
    %361 = arith.truncf %360 : vector<8x256xf32> to vector<8x256xbf16>
    %c0_162 = arith.constant 0 : index
    %c0_163 = arith.constant 0 : index
    %362 = vector.load %arg8[%c0_162, %c0_163] : memref<144x256xbf16, #tpu.memory_space<vmem>>, vector<8x256xbf16>
    tpu.vector_store %arg8[%c0_162, %c0_163], %361 {strides = array<i32>} : memref<144x256xbf16, #tpu.memory_space<vmem>>, vector<8x256xbf16>,
    %c16_i32_164 = arith.constant 16 : i32
    %363 = tpu.dynamic_rotate %355 by %c16_i32_164 dim 1 : vector<8x256xf32>, i32 -> vector<8x256xf32>
    %cst_165 = arith.constant 0.000000e+00 : f32
    %364 = vector.broadcast %cst_165 : f32 to vector<8x256xf32>
    %365 = vector.shape_cast %218 : vector<1x256xi1> to vector<1x256xi1>
    %366 = vector.broadcast %365 : vector<1x256xi1> to vector<8x256xi1>
    %367 = arith.select %366, %363, %364 : vector<8x256xi1>, vector<8x256xf32>
    %368 = arith.truncf %367 : vector<8x256xf32> to vector<8x256xbf16>
    %c8_166 = arith.constant 8 : index
    %c0_167 = arith.constant 0 : index
    %369 = vector.load %arg8[%c8_166, %c0_167] : memref<144x256xbf16, #tpu.memory_space<vmem>>, vector<8x256xbf16>
    tpu.vector_store %arg8[%c8_166, %c0_167], %368 {strides = array<i32>} : memref<144x256xbf16, #tpu.memory_space<vmem>>, vector<8x256xbf16>,
    %c15_i32_168 = arith.constant 15 : i32
    %370 = tpu.dynamic_rotate %355 by %c15_i32_168 dim 1 : vector<8x256xf32>, i32 -> vector<8x256xf32>
    %cst_169 = arith.constant 0.000000e+00 : f32
    %371 = vector.broadcast %cst_169 : f32 to vector<8x256xf32>
    %372 = vector.shape_cast %226 : vector<1x256xi1> to vector<1x256xi1>
    %373 = vector.broadcast %372 : vector<1x256xi1> to vector<8x256xi1>
    %374 = arith.select %373, %370, %371 : vector<8x256xi1>, vector<8x256xf32>
    %375 = arith.truncf %374 : vector<8x256xf32> to vector<8x256xbf16>
    %c16_170 = arith.constant 16 : index
    %c0_171 = arith.constant 0 : index
    %376 = vector.load %arg8[%c16_170, %c0_171] : memref<144x256xbf16, #tpu.memory_space<vmem>>, vector<8x256xbf16>
    tpu.vector_store %arg8[%c16_170, %c0_171], %375 {strides = array<i32>} : memref<144x256xbf16, #tpu.memory_space<vmem>>, vector<8x256xbf16>,
    %c1_i32_172 = arith.constant 1 : i32
    %377 = tpu.dynamic_rotate %355 by %c1_i32_172 dim 1 : vector<8x256xf32>, i32 -> vector<8x256xf32>
    %cst_173 = arith.constant 0.000000e+00 : f32
    %378 = vector.broadcast %cst_173 : f32 to vector<8x256xf32>
    %379 = vector.shape_cast %222 : vector<1x256xi1> to vector<1x256xi1>
    %380 = vector.broadcast %379 : vector<1x256xi1> to vector<8x256xi1>
    %381 = arith.select %380, %377, %378 : vector<8x256xi1>, vector<8x256xf32>
    %382 = arith.truncf %381 : vector<8x256xf32> to vector<8x256xbf16>
    %c24_174 = arith.constant 24 : index
    %c0_175 = arith.constant 0 : index
    %383 = vector.load %arg8[%c24_174, %c0_175] : memref<144x256xbf16, #tpu.memory_space<vmem>>, vector<8x256xbf16>
    tpu.vector_store %arg8[%c24_174, %c0_175], %382 {strides = array<i32>} : memref<144x256xbf16, #tpu.memory_space<vmem>>, vector<8x256xbf16>,
    %384 = arith.truncf %355 : vector<8x256xf32> to vector<8x256xbf16>
    %c32_176 = arith.constant 32 : index
    %c0_177 = arith.constant 0 : index
    %385 = vector.load %arg8[%c32_176, %c0_177] : memref<144x256xbf16, #tpu.memory_space<vmem>>, vector<8x256xbf16>
    tpu.vector_store %arg8[%c32_176, %c0_177], %384 {strides = array<i32>} : memref<144x256xbf16, #tpu.memory_space<vmem>>, vector<8x256xbf16>,
    %c255_i32_178 = arith.constant 255 : i32
    %386 = tpu.dynamic_rotate %355 by %c255_i32_178 dim 1 : vector<8x256xf32>, i32 -> vector<8x256xf32>
    %cst_179 = arith.constant 0.000000e+00 : f32
    %387 = vector.broadcast %cst_179 : f32 to vector<8x256xf32>
    %388 = vector.shape_cast %224 : vector<1x256xi1> to vector<1x256xi1>
    %389 = vector.broadcast %388 : vector<1x256xi1> to vector<8x256xi1>
    %390 = arith.select %389, %386, %387 : vector<8x256xi1>, vector<8x256xf32>
    %391 = arith.truncf %390 : vector<8x256xf32> to vector<8x256xbf16>
    %c40_180 = arith.constant 40 : index
    %c0_181 = arith.constant 0 : index
    %392 = vector.load %arg8[%c40_180, %c0_181] : memref<144x256xbf16, #tpu.memory_space<vmem>>, vector<8x256xbf16>
    tpu.vector_store %arg8[%c40_180, %c0_181], %391 {strides = array<i32>} : memref<144x256xbf16, #tpu.memory_space<vmem>>, vector<8x256xbf16>,
    %c241_i32_182 = arith.constant 241 : i32
    %393 = tpu.dynamic_rotate %355 by %c241_i32_182 dim 1 : vector<8x256xf32>, i32 -> vector<8x256xf32>
    %cst_183 = arith.constant 0.000000e+00 : f32
    %394 = vector.broadcast %cst_183 : f32 to vector<8x256xf32>
    %395 = vector.shape_cast %227 : vector<1x256xi1> to vector<1x256xi1>
    %396 = vector.broadcast %395 : vector<1x256xi1> to vector<8x256xi1>
    %397 = arith.select %396, %393, %394 : vector<8x256xi1>, vector<8x256xf32>
    %398 = arith.truncf %397 : vector<8x256xf32> to vector<8x256xbf16>
    %c48_184 = arith.constant 48 : index
    %c0_185 = arith.constant 0 : index
    %399 = vector.load %arg8[%c48_184, %c0_185] : memref<144x256xbf16, #tpu.memory_space<vmem>>, vector<8x256xbf16>
    tpu.vector_store %arg8[%c48_184, %c0_185], %398 {strides = array<i32>} : memref<144x256xbf16, #tpu.memory_space<vmem>>, vector<8x256xbf16>,
    %c240_i32_186 = arith.constant 240 : i32
    %400 = tpu.dynamic_rotate %355 by %c240_i32_186 dim 1 : vector<8x256xf32>, i32 -> vector<8x256xf32>
    %cst_187 = arith.constant 0.000000e+00 : f32
    %401 = vector.broadcast %cst_187 : f32 to vector<8x256xf32>
    %402 = vector.shape_cast %220 : vector<1x256xi1> to vector<1x256xi1>
    %403 = vector.broadcast %402 : vector<1x256xi1> to vector<8x256xi1>
    %404 = arith.select %403, %400, %401 : vector<8x256xi1>, vector<8x256xf32>
    %405 = arith.truncf %404 : vector<8x256xf32> to vector<8x256xbf16>
    %c56_188 = arith.constant 56 : index
    %c0_189 = arith.constant 0 : index
    %406 = vector.load %arg8[%c56_188, %c0_189] : memref<144x256xbf16, #tpu.memory_space<vmem>>, vector<8x256xbf16>
    tpu.vector_store %arg8[%c56_188, %c0_189], %405 {strides = array<i32>} : memref<144x256xbf16, #tpu.memory_space<vmem>>, vector<8x256xbf16>,
    %c239_i32_190 = arith.constant 239 : i32
    %407 = tpu.dynamic_rotate %355 by %c239_i32_190 dim 1 : vector<8x256xf32>, i32 -> vector<8x256xf32>
    %cst_191 = arith.constant 0.000000e+00 : f32
    %408 = vector.broadcast %cst_191 : f32 to vector<8x256xf32>
    %409 = vector.shape_cast %228 : vector<1x256xi1> to vector<1x256xi1>
    %410 = vector.broadcast %409 : vector<1x256xi1> to vector<8x256xi1>
    %411 = arith.select %410, %407, %408 : vector<8x256xi1>, vector<8x256xf32>
    %412 = arith.truncf %411 : vector<8x256xf32> to vector<8x256xbf16>
    %c64_192 = arith.constant 64 : index
    %c0_193 = arith.constant 0 : index
    %413 = vector.load %arg8[%c64_192, %c0_193] : memref<144x256xbf16, #tpu.memory_space<vmem>>, vector<8x256xbf16>
    tpu.vector_store %arg8[%c64_192, %c0_193], %412 {strides = array<i32>} : memref<144x256xbf16, #tpu.memory_space<vmem>>, vector<8x256xbf16>,
    %c24_194 = arith.constant 24 : index
    %c0_195 = arith.constant 0 : index
    %414 = vector.load %arg3[%c24_194, %c0_195] : memref<40x144xbf16, #tpu.memory_space<vmem>>, vector<8x72xbf16>
    %c0_196 = arith.constant 0 : index
    %c0_197 = arith.constant 0 : index
    %415 = vector.load %arg8[%c0_196, %c0_197] : memref<144x256xbf16, #tpu.memory_space<vmem>>, vector<72x256xbf16>
    %cst_198 = arith.constant dense<0.000000e+00> : vector<8x256xf32>
    %416 = tpu.matmul %414, %415, %cst_198 {dimension_numbers = #tpu.dot_dimension_numbers<[1], [0], [0], [1], [0, 0, 1, 1], [], []>} : vector<8x72xbf16>, vector<72x256xbf16>, vector<8x256xf32> -> vector<8x256xf32>
    %cst_199 = arith.constant 0.000000e+00 : f32
    %417 = vector.broadcast %cst_199 : f32 to vector<8x256xf32>
    %418 = arith.cmpf ogt, %416, %417 : vector<8x256xf32>
    %cst_200 = arith.constant 0.000000e+00 : f32
    %419 = vector.broadcast %cst_200 : f32 to vector<8x256xf32>
    %420 = arith.minimumf %416, %419 : vector<8x256xf32>
    %421 = math.exp %420 : vector<8x256xf32>
    %cst_201 = arith.constant 1.000000e+00 : f32
    %422 = vector.broadcast %cst_201 : f32 to vector<8x256xf32>
    %423 = arith.subf %421, %422 : vector<8x256xf32>
    %424 = arith.select %418, %416, %423 : vector<8x256xi1>, vector<8x256xf32>
    %c17_i32_202 = arith.constant 17 : i32
    %425 = tpu.dynamic_rotate %424 by %c17_i32_202 dim 1 : vector<8x256xf32>, i32 -> vector<8x256xf32>
    %cst_203 = arith.constant 0.000000e+00 : f32
    %426 = vector.broadcast %cst_203 : f32 to vector<8x256xf32>
    %427 = vector.shape_cast %225 : vector<1x256xi1> to vector<1x256xi1>
    %428 = vector.broadcast %427 : vector<1x256xi1> to vector<8x256xi1>
    %429 = arith.select %428, %425, %426 : vector<8x256xi1>, vector<8x256xf32>
    %430 = arith.truncf %429 : vector<8x256xf32> to vector<8x256xbf16>
    %c0_204 = arith.constant 0 : index
    %c0_205 = arith.constant 0 : index
    %431 = vector.load %arg8[%c0_204, %c0_205] : memref<144x256xbf16, #tpu.memory_space<vmem>>, vector<8x256xbf16>
    tpu.vector_store %arg8[%c0_204, %c0_205], %430 {strides = array<i32>} : memref<144x256xbf16, #tpu.memory_space<vmem>>, vector<8x256xbf16>,
    %c16_i32_206 = arith.constant 16 : i32
    %432 = tpu.dynamic_rotate %424 by %c16_i32_206 dim 1 : vector<8x256xf32>, i32 -> vector<8x256xf32>
    %cst_207 = arith.constant 0.000000e+00 : f32
    %433 = vector.broadcast %cst_207 : f32 to vector<8x256xf32>
    %434 = vector.shape_cast %218 : vector<1x256xi1> to vector<1x256xi1>
    %435 = vector.broadcast %434 : vector<1x256xi1> to vector<8x256xi1>
    %436 = arith.select %435, %432, %433 : vector<8x256xi1>, vector<8x256xf32>
    %437 = arith.truncf %436 : vector<8x256xf32> to vector<8x256xbf16>
    %c8_208 = arith.constant 8 : index
    %c0_209 = arith.constant 0 : index
    %438 = vector.load %arg8[%c8_208, %c0_209] : memref<144x256xbf16, #tpu.memory_space<vmem>>, vector<8x256xbf16>
    tpu.vector_store %arg8[%c8_208, %c0_209], %437 {strides = array<i32>} : memref<144x256xbf16, #tpu.memory_space<vmem>>, vector<8x256xbf16>,
    %c15_i32_210 = arith.constant 15 : i32
    %439 = tpu.dynamic_rotate %424 by %c15_i32_210 dim 1 : vector<8x256xf32>, i32 -> vector<8x256xf32>
    %cst_211 = arith.constant 0.000000e+00 : f32
    %440 = vector.broadcast %cst_211 : f32 to vector<8x256xf32>
    %441 = vector.shape_cast %226 : vector<1x256xi1> to vector<1x256xi1>
    %442 = vector.broadcast %441 : vector<1x256xi1> to vector<8x256xi1>
    %443 = arith.select %442, %439, %440 : vector<8x256xi1>, vector<8x256xf32>
    %444 = arith.truncf %443 : vector<8x256xf32> to vector<8x256xbf16>
    %c16_212 = arith.constant 16 : index
    %c0_213 = arith.constant 0 : index
    %445 = vector.load %arg8[%c16_212, %c0_213] : memref<144x256xbf16, #tpu.memory_space<vmem>>, vector<8x256xbf16>
    tpu.vector_store %arg8[%c16_212, %c0_213], %444 {strides = array<i32>} : memref<144x256xbf16, #tpu.memory_space<vmem>>, vector<8x256xbf16>,
    %c1_i32_214 = arith.constant 1 : i32
    %446 = tpu.dynamic_rotate %424 by %c1_i32_214 dim 1 : vector<8x256xf32>, i32 -> vector<8x256xf32>
    %cst_215 = arith.constant 0.000000e+00 : f32
    %447 = vector.broadcast %cst_215 : f32 to vector<8x256xf32>
    %448 = vector.shape_cast %222 : vector<1x256xi1> to vector<1x256xi1>
    %449 = vector.broadcast %448 : vector<1x256xi1> to vector<8x256xi1>
    %450 = arith.select %449, %446, %447 : vector<8x256xi1>, vector<8x256xf32>
    %451 = arith.truncf %450 : vector<8x256xf32> to vector<8x256xbf16>
    %c24_216 = arith.constant 24 : index
    %c0_217 = arith.constant 0 : index
    %452 = vector.load %arg8[%c24_216, %c0_217] : memref<144x256xbf16, #tpu.memory_space<vmem>>, vector<8x256xbf16>
    tpu.vector_store %arg8[%c24_216, %c0_217], %451 {strides = array<i32>} : memref<144x256xbf16, #tpu.memory_space<vmem>>, vector<8x256xbf16>,
    %453 = arith.truncf %424 : vector<8x256xf32> to vector<8x256xbf16>
    %c32_218 = arith.constant 32 : index
    %c0_219 = arith.constant 0 : index
    %454 = vector.load %arg8[%c32_218, %c0_219] : memref<144x256xbf16, #tpu.memory_space<vmem>>, vector<8x256xbf16>
    tpu.vector_store %arg8[%c32_218, %c0_219], %453 {strides = array<i32>} : memref<144x256xbf16, #tpu.memory_space<vmem>>, vector<8x256xbf16>,
    %c255_i32_220 = arith.constant 255 : i32
    %455 = tpu.dynamic_rotate %424 by %c255_i32_220 dim 1 : vector<8x256xf32>, i32 -> vector<8x256xf32>
    %cst_221 = arith.constant 0.000000e+00 : f32
    %456 = vector.broadcast %cst_221 : f32 to vector<8x256xf32>
    %457 = vector.shape_cast %224 : vector<1x256xi1> to vector<1x256xi1>
    %458 = vector.broadcast %457 : vector<1x256xi1> to vector<8x256xi1>
    %459 = arith.select %458, %455, %456 : vector<8x256xi1>, vector<8x256xf32>
    %460 = arith.truncf %459 : vector<8x256xf32> to vector<8x256xbf16>
    %c40_222 = arith.constant 40 : index
    %c0_223 = arith.constant 0 : index
    %461 = vector.load %arg8[%c40_222, %c0_223] : memref<144x256xbf16, #tpu.memory_space<vmem>>, vector<8x256xbf16>
    tpu.vector_store %arg8[%c40_222, %c0_223], %460 {strides = array<i32>} : memref<144x256xbf16, #tpu.memory_space<vmem>>, vector<8x256xbf16>,
    %c241_i32_224 = arith.constant 241 : i32
    %462 = tpu.dynamic_rotate %424 by %c241_i32_224 dim 1 : vector<8x256xf32>, i32 -> vector<8x256xf32>
    %cst_225 = arith.constant 0.000000e+00 : f32
    %463 = vector.broadcast %cst_225 : f32 to vector<8x256xf32>
    %464 = vector.shape_cast %227 : vector<1x256xi1> to vector<1x256xi1>
    %465 = vector.broadcast %464 : vector<1x256xi1> to vector<8x256xi1>
    %466 = arith.select %465, %462, %463 : vector<8x256xi1>, vector<8x256xf32>
    %467 = arith.truncf %466 : vector<8x256xf32> to vector<8x256xbf16>
    %c48_226 = arith.constant 48 : index
    %c0_227 = arith.constant 0 : index
    %468 = vector.load %arg8[%c48_226, %c0_227] : memref<144x256xbf16, #tpu.memory_space<vmem>>, vector<8x256xbf16>
    tpu.vector_store %arg8[%c48_226, %c0_227], %467 {strides = array<i32>} : memref<144x256xbf16, #tpu.memory_space<vmem>>, vector<8x256xbf16>,
    %c240_i32_228 = arith.constant 240 : i32
    %469 = tpu.dynamic_rotate %424 by %c240_i32_228 dim 1 : vector<8x256xf32>, i32 -> vector<8x256xf32>
    %cst_229 = arith.constant 0.000000e+00 : f32
    %470 = vector.broadcast %cst_229 : f32 to vector<8x256xf32>
    %471 = vector.shape_cast %220 : vector<1x256xi1> to vector<1x256xi1>
    %472 = vector.broadcast %471 : vector<1x256xi1> to vector<8x256xi1>
    %473 = arith.select %472, %469, %470 : vector<8x256xi1>, vector<8x256xf32>
    %474 = arith.truncf %473 : vector<8x256xf32> to vector<8x256xbf16>
    %c56_230 = arith.constant 56 : index
    %c0_231 = arith.constant 0 : index
    %475 = vector.load %arg8[%c56_230, %c0_231] : memref<144x256xbf16, #tpu.memory_space<vmem>>, vector<8x256xbf16>
    tpu.vector_store %arg8[%c56_230, %c0_231], %474 {strides = array<i32>} : memref<144x256xbf16, #tpu.memory_space<vmem>>, vector<8x256xbf16>,
    %c239_i32_232 = arith.constant 239 : i32
    %476 = tpu.dynamic_rotate %424 by %c239_i32_232 dim 1 : vector<8x256xf32>, i32 -> vector<8x256xf32>
    %cst_233 = arith.constant 0.000000e+00 : f32
    %477 = vector.broadcast %cst_233 : f32 to vector<8x256xf32>
    %478 = vector.shape_cast %228 : vector<1x256xi1> to vector<1x256xi1>
    %479 = vector.broadcast %478 : vector<1x256xi1> to vector<8x256xi1>
    %480 = arith.select %479, %476, %477 : vector<8x256xi1>, vector<8x256xf32>
    %481 = arith.truncf %480 : vector<8x256xf32> to vector<8x256xbf16>
    %c64_234 = arith.constant 64 : index
    %c0_235 = arith.constant 0 : index
    %482 = vector.load %arg8[%c64_234, %c0_235] : memref<144x256xbf16, #tpu.memory_space<vmem>>, vector<8x256xbf16>
    tpu.vector_store %arg8[%c64_234, %c0_235], %481 {strides = array<i32>} : memref<144x256xbf16, #tpu.memory_space<vmem>>, vector<8x256xbf16>,
    %c32_236 = arith.constant 32 : index
    %c0_237 = arith.constant 0 : index
    %483 = vector.load %arg3[%c32_236, %c0_237] : memref<40x144xbf16, #tpu.memory_space<vmem>>, vector<8x72xbf16>
    %c0_238 = arith.constant 0 : index
    %c0_239 = arith.constant 0 : index
    %484 = vector.load %arg8[%c0_238, %c0_239] : memref<144x256xbf16, #tpu.memory_space<vmem>>, vector<72x256xbf16>
    %cst_240 = arith.constant dense<0.000000e+00> : vector<8x256xf32>
    %485 = tpu.matmul %483, %484, %cst_240 {dimension_numbers = #tpu.dot_dimension_numbers<[1], [0], [0], [1], [0, 0, 1, 1], [], []>} : vector<8x72xbf16>, vector<72x256xbf16>, vector<8x256xf32> -> vector<8x256xf32>
    %cst_241 = arith.constant 0.000000e+00 : f32
    %486 = vector.broadcast %cst_241 : f32 to vector<8x256xf32>
    %487 = arith.cmpf ogt, %485, %486 : vector<8x256xf32>
    %cst_242 = arith.constant 0.000000e+00 : f32
    %488 = vector.broadcast %cst_242 : f32 to vector<8x256xf32>
    %489 = arith.minimumf %485, %488 : vector<8x256xf32>
    %490 = math.exp %489 : vector<8x256xf32>
    %cst_243 = arith.constant 1.000000e+00 : f32
    %491 = vector.broadcast %cst_243 : f32 to vector<8x256xf32>
    %492 = arith.subf %490, %491 : vector<8x256xf32>
    %493 = arith.select %487, %485, %492 : vector<8x256xi1>, vector<8x256xf32>
    %c0_244 = arith.constant 0 : index
    %c0_245 = arith.constant 0 : index
    %c0_246 = arith.constant 0 : index
    %494 = vector.load %arg7[%c0_244, %c0_245, %c0_246] : memref<1x8x256xf32, #tpu.memory_space<vmem>>, vector<1x8x256xf32>
    %495 = vector.shape_cast %494 : vector<1x8x256xf32> to vector<8x256xf32>
    %496 = vector.shape_cast %493 : vector<8x256xf32> to vector<1x8x256xf32>
    tpu.vector_store %arg7[%c0_244, %c0_245, %c0_246], %496 {strides = array<i32>} : memref<1x8x256xf32, #tpu.memory_space<vmem>>, vector<1x8x256xf32>,
    return
  }
  func.func @transform_0(%arg0: i32) -> (i32, i32, i32) {
    %c0_i32 = arith.constant 0 : i32
    %c0_i32_0 = arith.constant 0 : i32
    %c0_i32_1 = arith.constant 0 : i32
    return %arg0, %c0_i32, %c0_i32_0 : i32, i32, i32
  }
  func.func @transform_1(%arg0: i32) -> (i32, i32) {
    %c0_i32 = arith.constant 0 : i32
    %c0_i32_0 = arith.constant 0 : i32
    %c0_i32_1 = arith.constant 0 : i32
    return %c0_i32, %c0_i32_0 : i32, i32
  }
  func.func @transform_2(%arg0: i32) -> (i32, i32) {
    %c0_i32 = arith.constant 0 : i32
    %c0_i32_0 = arith.constant 0 : i32
    %c0_i32_1 = arith.constant 0 : i32
    return %c0_i32, %c0_i32_0 : i32, i32
  }
  func.func @transform_3(%arg0: i32) -> (i32, i32) {
    %c0_i32 = arith.constant 0 : i32
    %c0_i32_0 = arith.constant 0 : i32
    %c0_i32_1 = arith.constant 0 : i32
    return %c0_i32, %c0_i32_0 : i32, i32
  }
  func.func @transform_4(%arg0: i32) -> (i32, i32) {
    %c0_i32 = arith.constant 0 : i32
    %c0_i32_0 = arith.constant 0 : i32
    %c0_i32_1 = arith.constant 0 : i32
    return %c0_i32, %c0_i32_0 : i32, i32
  }
  func.func @transform_5(%arg0: i32) -> (i32, i32) {
    %c0_i32 = arith.constant 0 : i32
    %c0_i32_0 = arith.constant 0 : i32
    %c0_i32_1 = arith.constant 0 : i32
    return %c0_i32, %c0_i32_0 : i32, i32
  }
  func.func @transform_6(%arg0: i32) -> (i32, i32, i32) {
    %c0_i32 = arith.constant 0 : i32
    %c0_i32_0 = arith.constant 0 : i32
    %c0_i32_1 = arith.constant 0 : i32
    return %arg0, %c0_i32, %c0_i32_0 : i32, i32, i32
  }
}

</mosaic_0001>

<llo_original>
// kernel: generator_forward.1
$region0: #{generator_forward.1}
  #allocation0 [shape = 'u32[]', space=smem, size = 0x4, offset = 0x4, fixed_abs, tag = 'smem constant byte address 0x4 - core index']
  #allocation1 [shape = 'u32[144,128]{1,0:T(1,128)}', space=vmem, size = 0x12000, scoped, tag = 'internal scratch']
  #allocation2 [shape = 'bf16[144,256]{1,0:T(16,128)(2,1)}', space=vmem, size = 0x12000, scoped, tag = 'scratch operand']
  #allocation3 [shape = 'bf16[8,16]{1,0:T(8,128)(2,1)}', space=vmem, size = 0x800, scoped, tag = 'scratch operand']
  %s0 = inlined_call_operand.vmem [shape: bf16[2,1,16], index: 0, kind: input, shape index: {}]
  %s1 = inlined_call_operand.vmem [shape: bf16[16,128], index: 1, kind: input, shape index: {}]
  %s2 = inlined_call_operand.hbm [shape: bf16[40,144], index: 2, kind: input, shape index: {}]
  %s3 = inlined_call_operand.hbm [shape: bf16[16,64], index: 3, kind: input, shape index: {}]
  %s4 = inlined_call_operand.hbm [shape: bf16[64,256], index: 4, kind: input, shape index: {}]
  %s5 = inlined_call_operand.hbm [shape: bf16[16,256], index: 5, kind: input, shape index: {}]
  %s6 = inlined_call_operand.vmem [shape: f32[2,8,256], index: 6, kind: output, shape index: {}]
  %s7 = sld [smem:[#allocation0]]
  $region73: #{generator_forward.1} parent=0
    _
  %s9 = ssub.s32 1, %s7
  %s10 = scalar_select 0, %s9, %s7
  $region1: #{generator_forward.1} parent=0
    #allocation4 [shape = 'u8[20480]{0}', space=vmem, size = 0x5000, scoped, tag = 'input window, operand 2, single buffered']
    #allocation5 [shape = 's32[2]{0}', space=sflag, size = 0x8, scoped, tag = 'scoped memory for generator_forward.1']
    #allocation6 [shape = 'u8[4096]{0}', space=vmem, size = 0x1000, scoped, tag = 'input window, operand 3, single buffered']
    #allocation7 [shape = 's32[1]{0}', space=sflag, size = 0x4, scoped, tag = 'scoped memory for generator_forward.1']
    #allocation8 [shape = 'u8[32768]{0}', space=vmem, size = 0x8000, scoped, tag = 'input window, operand 4, single buffered']
    #allocation9 [shape = 'u8[8192]{0}', space=vmem, size = 0x2000, scoped, tag = 'input window, operand 5, single buffered']
    #allocation10 [shape = 's32[1]{0}', space=sflag, size = 0x4, scoped, tag = 'scoped memory for generator_forward.1']
    %11 = vsyncpa [#allocation5], 0
    %12 = vsyncpa [#allocation7], 0
    %13 = vsyncpa [#allocation10], 0
    loop: start=0, step=1, limit=4
    $region2: #{generator_forward.1} parent=1 // loop_pre_header
      _
    $region3: #{generator_forward.1} parent=1 // loop_header
      %s15 = sphi 0, %s19
      %p16 = scmp.ge.s32.totalorder %s15, 4
      %s25 = sphi 0, %s27
      %s28 = sphi 0, %s25
      %s29 = sphi 0, %s28
      %s45 = sphi 0, %s29
      %s49 = sphi 0, %s49
      %s51 = sphi 0, %s49
      %s52 = sphi 0, %s51
      %s66 = sphi 0, %s52
      %s70 = sphi 0, %s70
      %s72 = sphi 0, %s70
      %s73 = sphi 0, %s72
      %s87 = sphi 0, %s73
      %s91 = sphi 0, %s91
      %s93 = sphi 0, %s91
      %s94 = sphi 0, %s93
      %s108 = sphi 0, %s94
      %s112 = sphi 0, %s112
      %s114 = sphi 0, %s112
      %s115 = sphi 0, %s114
      %s129 = sphi 0, %s115
      %s133 = sphi 0, %s133
      %s135 = sphi 0, %s133
      %s136 = sphi 0, %s135
      %s150 = sphi 0, %s136
      %s156 = sphi 0, %s158
      %s159 = sphi 0, %s156
      %s160 = sphi 0, %s159
      %s176 = sphi 0, %s160
    $region4: #{generator_forward.1} parent=1 // loop_header_branch
      %18 = sbr.rel (%p16) target = $region8
    $region5: #{generator_forward.1} parent=1 // loop_body
      %s20 = ssub.s32 %s15, 1
      %s21 = ssub.s32 %s15, 2
      %s22 = sadd.s32 %s15, 1
      %s23 = ssub.s32 %s15, %s22
      %p24 = scmp.eq.s32.totalorder %s23, 0
      %s26 = sadd.s32 %s25, 1
      %s27 = scalar_select %p24, %s25, %s26
      %p30 = pneg %p24
      %p31 = scmp.eq.s32.totalorder %s15, 1
      %p32 = por %p30, %p31
      %p33 = scmp.ne.s32.totalorder %s25, %s28
      %p34 = scmp.eq.s32.totalorder %s15, 0
      %p35 = por %p33, %p34
      %p36 = scmp.ne.s32.totalorder %s25, %s28
      %p37 = scmp.eq.s32.totalorder %s20, 1
      %p38 = por %p36, %p37
      %p39 = scmp.ne.s32.totalorder %s28, %s29
      %p40 = scmp.eq.s32.totalorder %s20, 0
      %p41 = por %p39, %p40
      %p42 = scmp.ne.s32.totalorder %s28, %s29
      %p43 = scmp.eq.s32.totalorder %s21, 1
      %p44 = por %p42, %p43
      %p46 = scmp.ne.s32.totalorder %s29, %s45
      %p47 = scmp.eq.s32.totalorder %s21, 0
      %p48 = por %p46, %p47
      %s50 = sadd.s32 %s49, 1
      %p53 = scmp.eq.s32.totalorder %s15, 1
      %p54 = scmp.ne.s32.totalorder %s49, %s51
      %p55 = scmp.eq.s32.totalorder %s15, 0
      %p56 = por %p54, %p55
      %p57 = scmp.ne.s32.totalorder %s49, %s51
      %p58 = scmp.eq.s32.totalorder %s20, 1
      %p59 = por %p57, %p58
      %p60 = scmp.ne.s32.totalorder %s51, %s52
      %p61 = scmp.eq.s32.totalorder %s20, 0
      %p62 = por %p60, %p61
      %p63 = scmp.ne.s32.totalorder %s51, %s52
      %p64 = scmp.eq.s32.totalorder %s21, 1
      %p65 = por %p63, %p64
      %p67 = scmp.ne.s32.totalorder %s52, %s66
      %p68 = scmp.eq.s32.totalorder %s21, 0
      %p69 = por %p67, %p68
      %s71 = sadd.s32 %s70, 1
      %p74 = scmp.eq.s32.totalorder %s15, 1
      %p75 = scmp.ne.s32.totalorder %s70, %s72
      %p76 = scmp.eq.s32.totalorder %s15, 0
      %p77 = por %p75, %p76
      %p78 = scmp.ne.s32.totalorder %s70, %s72
      %p79 = scmp.eq.s32.totalorder %s20, 1
      %p80 = por %p78, %p79
      %p81 = scmp.ne.s32.totalorder %s72, %s73
      %p82 = scmp.eq.s32.totalorder %s20, 0
      %p83 = por %p81, %p82
      %p84 = scmp.ne.s32.totalorder %s72, %s73
      %p85 = scmp.eq.s32.totalorder %s21, 1
      %p86 = por %p84, %p85
      %p88 = scmp.ne.s32.totalorder %s73, %s87
      %p89 = scmp.eq.s32.totalorder %s21, 0
      %p90 = por %p88, %p89
      %s92 = sadd.s32 %s91, 1
      %p95 = scmp.eq.s32.totalorder %s15, 1
      %p96 = scmp.ne.s32.totalorder %s91, %s93
      %p97 = scmp.eq.s32.totalorder %s15, 0
      %p98 = por %p96, %p97
      %p99 = scmp.ne.s32.totalorder %s91, %s93
      %p100 = scmp.eq.s32.totalorder %s20, 1
      %p101 = por %p99, %p100
      %p102 = scmp.ne.s32.totalorder %s93, %s94
      %p103 = scmp.eq.s32.totalorder %s20, 0
      %p104 = por %p102, %p103
      %p105 = scmp.ne.s32.totalorder %s93, %s94
      %p106 = scmp.eq.s32.totalorder %s21, 1
      %p107 = por %p105, %p106
      %p109 = scmp.ne.s32.totalorder %s94, %s108
      %p110 = scmp.eq.s32.totalorder %s21, 0
      %p111 = por %p109, %p110
      %s113 = sadd.s32 %s112, 1
      %p116 = scmp.eq.s32.totalorder %s15, 1
      %p117 = scmp.ne.s32.totalorder %s112, %s114
      %p118 = scmp.eq.s32.totalorder %s15, 0
      %p119 = por %p117, %p118
      %p120 = scmp.ne.s32.totalorder %s112, %s114
      %p121 = scmp.eq.s32.totalorder %s20, 1
      %p122 = por %p120, %p121
      %p123 = scmp.ne.s32.totalorder %s114, %s115
      %p124 = scmp.eq.s32.totalorder %s20, 0
      %p125 = por %p123, %p124
      %p126 = scmp.ne.s32.totalorder %s114, %s115
      %p127 = scmp.eq.s32.totalorder %s21, 1
      %p128 = por %p126, %p127
      %p130 = scmp.ne.s32.totalorder %s115, %s129
      %p131 = scmp.eq.s32.totalorder %s21, 0
      %p132 = por %p130, %p131
      %s134 = sadd.s32 %s133, 1
      %p137 = scmp.eq.s32.totalorder %s15, 1
      %p138 = scmp.ne.s32.totalorder %s133, %s135
      %p139 = scmp.eq.s32.totalorder %s15, 0
      %p140 = por %p138, %p139
      %p141 = scmp.ne.s32.totalorder %s133, %s135
      %p142 = scmp.eq.s32.totalorder %s20, 1
      %p143 = por %p141, %p142
      %p144 = scmp.ne.s32.totalorder %s135, %s136
      %p145 = scmp.eq.s32.totalorder %s20, 0
      %p146 = por %p144, %p145
      %p147 = scmp.ne.s32.totalorder %s135, %s136
      %p148 = scmp.eq.s32.totalorder %s21, 1
      %p149 = por %p147, %p148
      %p151 = scmp.ne.s32.totalorder %s136, %s150
      %p152 = scmp.eq.s32.totalorder %s21, 0
      %p153 = por %p151, %p152
      %s154 = ssub.s32 %s15, %s22
      %p155 = scmp.eq.s32.totalorder %s154, 0
      %s157 = sadd.s32 %s156, 1
      %s158 = scalar_select %p155, %s156, %s157
      %p161 = pneg %p155
      %p162 = scmp.eq.s32.totalorder %s15, 1
      %p163 = por %p161, %p162
      %p164 = scmp.ne.s32.totalorder %s156, %s159
      %p165 = scmp.eq.s32.totalorder %s15, 0
      %p166 = por %p164, %p165
      %p167 = scmp.ne.s32.totalorder %s156, %s159
      %p168 = scmp.eq.s32.totalorder %s20, 1
      %p169 = por %p167, %p168
      %p170 = scmp.ne.s32.totalorder %s159, %s160
      %p171 = scmp.eq.s32.totalorder %s20, 0
      %p172 = por %p170, %p171
      %p173 = scmp.ne.s32.totalorder %s159, %s160
      %p174 = scmp.eq.s32.totalorder %s21, 1
      %p175 = por %p173, %p174
      %p177 = scmp.ne.s32.totalorder %s160, %s176
      %p178 = scmp.eq.s32.totalorder %s21, 0
      %p179 = por %p177, %p178
      %p180 = scmp.le.s32.totalorder 1, %s15
      %p181 = scmp.lt.s32.totalorder %s15, 3
      %p182 = pnand %p180, %p181
      %p183 = pneg %p182
      // Predicated region
      $region9: #{generator_forward.1} parent=5 // pred_check
        _
      $region10: #{generator_forward.1} parent=5 // pred_check_branch
        %185 = sbr.rel (%p182) target = $region12
      $region11: #{generator_forward.1} parent=5 // pred_region
        %s186 = ssub.s32 %s15, 1
        // Predicated region
        $region13: #{generator_forward.1} parent=11 // pred_check
          %p187 = pneg %p62
        $region14: #{generator_forward.1} parent=11 // pred_check_branch
          %189 = sbr.rel (%p187) target = $region16
        $region15: #{generator_forward.1} parent=11 // pred_region
          _
        $region16: #{generator_forward.1} parent=11 // pred_fallthru
          _
        // Predicated region
        $region17: #{generator_forward.1} parent=11 // pred_check
          %p190 = pneg %p83
        $region18: #{generator_forward.1} parent=11 // pred_check_branch
          %192 = sbr.rel (%p190) target = $region20
        $region19: #{generator_forward.1} parent=11 // pred_region
          %s194 = ssub.s32 640, 640
          %195 = vsyncadd [#allocation5], %s194
          %s196 = sshll.u32 [#allocation4], 4
          %s197 = int_to_ptr.vmem [resolvable:$true] %s196
          %202 = dma.hbm_to_vmem [thread:$0]  %s2, 640, %s197, [#allocation5], 128, 128, 8
        $region20: #{generator_forward.1} parent=11 // pred_fallthru
          _
        // Predicated region
        $region21: #{generator_forward.1} parent=11 // pred_check
          %p203 = pneg %p104
        $region22: #{generator_forward.1} parent=11 // pred_check_branch
          %205 = sbr.rel (%p203) target = $region24
        $region23: #{generator_forward.1} parent=11 // pred_region
          %s207 = ssub.s32 128, 128
          %208 = vsyncadd [#allocation7], %s207
          %s209 = sshll.u32 [#allocation6], 4
          %s210 = int_to_ptr.vmem [resolvable:$true] %s209
          %215 = dma.hbm_to_vmem [thread:$0]  %s3, 128, %s210, [#allocation7], 64, 64, 4
        $region24: #{generator_forward.1} parent=11 // pred_fallthru
          _
        // Predicated region
        $region25: #{generator_forward.1} parent=11 // pred_check
          %p216 = pneg %p125
        $region26: #{generator_forward.1} parent=11 // pred_check_branch
          %218 = sbr.rel (%p216) target = $region28
        $region27: #{generator_forward.1} parent=11 // pred_region
          %s220 = ssub.s32 1024, 1024
          %221 = vsyncadd [#allocation7], %s220
          %s222 = sshll.u32 [#allocation8], 4
          %s223 = int_to_ptr.vmem [resolvable:$true] %s222
          %228 = dma.hbm_to_vmem [thread:$0]  %s4, 1024, %s223, [#allocation7], 128, 128, 8
        $region28: #{generator_forward.1} parent=11 // pred_fallthru
          _
        // Predicated region
        $region29: #{generator_forward.1} parent=11 // pred_check
          %p229 = pneg %p146
        $region30: #{generator_forward.1} parent=11 // pred_check_branch
          %231 = sbr.rel (%p229) target = $region32
        $region31: #{generator_forward.1} parent=11 // pred_region
          %s233 = ssub.s32 256, 256
          %234 = vsyncadd [#allocation10], %s233
          %s235 = sshll.u32 [#allocation9], 4
          %s236 = int_to_ptr.vmem [resolvable:$true] %s235
          %241 = dma.hbm_to_vmem [thread:$0]  %s5, 256, %s236, [#allocation10], 128, 128, 8
        $region32: #{generator_forward.1} parent=11 // pred_fallthru
          _
      $region12: #{generator_forward.1} parent=5 // pred_fallthru
        _
      %p242 = scmp.lt.s32.totalorder %s15, 2
      // Predicated region
      $region33: #{generator_forward.1} parent=5 // pred_check
        %p243 = pneg %p242
      $region34: #{generator_forward.1} parent=5 // pred_check_branch
        %245 = sbr.rel (%p243) target = $region36
      $region35: #{generator_forward.1} parent=5 // pred_region
        // Predicated region
        $region37: #{generator_forward.1} parent=35 // pred_check
          %p246 = pneg %p35
        $region38: #{generator_forward.1} parent=35 // pred_check_branch
          %248 = sbr.rel (%p246) target = $region40
        $region39: #{generator_forward.1} parent=35 // pred_region
          %p249 = scmp.lt.s32.totalorder %s15, 1
          %s250 = scalar_select %p249, %s15, 1
          %s251 = scalar_lea.vmem %s0, %s250
        $region40: #{generator_forward.1} parent=35 // pred_fallthru
          _
      $region36: #{generator_forward.1} parent=5 // pred_fallthru
        _
      %p252 = scmp.le.s32.totalorder 1, %s15
      %p253 = scmp.lt.s32.totalorder %s15, 3
      %p254 = pnand %p252, %p253
      %p255 = pneg %p254
      // Predicated region
      $region41: #{generator_forward.1} parent=5 // pred_check
        _
      $region42: #{generator_forward.1} parent=5 // pred_check_branch
        %257 = sbr.rel (%p254) target = $region44
      $region43: #{generator_forward.1} parent=5 // pred_region
        %s258 = ssub.s32 %s15, 1
        // Predicated region
        $region45: #{generator_forward.1} parent=43 // pred_check
          %p259 = pneg %p83
        $region46: #{generator_forward.1} parent=43 // pred_check_branch
          %261 = sbr.rel (%p259) target = $region48
        $region47: #{generator_forward.1} parent=43 // pred_region
          %262 = dma.done [#allocation5], 640
        $region48: #{generator_forward.1} parent=43 // pred_fallthru
          _
        // Predicated region
        $region49: #{generator_forward.1} parent=43 // pred_check
          %p263 = pneg %p104
        $region50: #{generator_forward.1} parent=43 // pred_check_branch
          %265 = sbr.rel (%p263) target = $region52
        $region51: #{generator_forward.1} parent=43 // pred_region
          %266 = dma.done [#allocation7], 128
        $region52: #{generator_forward.1} parent=43 // pred_fallthru
          _
        // Predicated region
        $region53: #{generator_forward.1} parent=43 // pred_check
          %p267 = pneg %p125
        $region54: #{generator_forward.1} parent=43 // pred_check_branch
          %269 = sbr.rel (%p267) target = $region56
        $region55: #{generator_forward.1} parent=43 // pred_region
          %270 = dma.done [#allocation7], 1024
        $region56: #{generator_forward.1} parent=43 // pred_fallthru
          _
        // Predicated region
        $region57: #{generator_forward.1} parent=43 // pred_check
          %p271 = pneg %p146
        $region58: #{generator_forward.1} parent=43 // pred_check_branch
          %273 = sbr.rel (%p271) target = $region60
        $region59: #{generator_forward.1} parent=43 // pred_region
          %274 = dma.done [#allocation10], 256
        $region60: #{generator_forward.1} parent=43 // pred_fallthru
          _
        %p275 = scmp.lt.s32.totalorder %s20, 1
        %s276 = scalar_select %p275, %s20, 1
        %s277 = scalar_lea.vmem %s0, %s276
        %p278 = pneg %p41
        %p279 = pneg %p38
        %p280 = pneg %p62
        %p281 = pneg %p59
        %p282 = pneg %p83
        %p283 = pneg %p80
        %p284 = pneg %p104
        %p285 = pneg %p101
        %p286 = pneg %p125
        %p287 = pneg %p122
        %p288 = pneg %p146
        %p289 = pneg %p143
        %p290 = pneg %p172
        %p291 = pneg %p169
        %p292 = scmp.lt.s32.totalorder %s20, 1
        %s293 = scalar_select %p292, %s20, 1
        %s294 = smul.addr %s293, 2
        %s295 = smul.addr %s294, 8
        %s296 = scalar_lea.vmem %s6, %s295
        %p297 = scmp.lt.s32.totalorder %s20, 1
        %s298 = scalar_select %p297, %s20, 1
        %s299 = scalar_lea.vmem %s0, %s298
        %p300 = scmp.lt.s32.totalorder %s20, 1
        %s301 = scalar_select %p300, %s20, 1
        %s302 = smul.addr %s301, 2
        %s303 = smul.addr %s302, 8
        %s304 = scalar_lea.vmem %s6, %s303
        %v306 = vld [vmem:[%s299] sm:$0x1]
        %v307 = vld [vmem:[%s1] sm:$0xf]
        %v308 = vld [vmem:[%s1 + $0x4] sm:$0xf]
        %v311 = vunpack.c.l.b16 %v307
        %v312 = vunpack.c.l.b16 %v308
        %v313 = vpack.c.b16 %v312, %v311
        %vm315 = vcmask 130048
        %v317 = vsel %vm315, %v306, 0
        %319 = vmatprep.subr.bf16.mxu0 0
        %320 = vmatpush1.bf16.msra.mxu0 %v313
        %321 = vmatprep.subr.bf16.mxu0 0
        %322 = vmatpush1.bf16.msra.mxu0 0
        %323 = vmatprep.subr.bf16.mxu0 0
        %324 = vmatpush1.bf16.msra.mxu0 0
        %325 = vmatprep.subr.bf16.mxu0 0
        %326 = vmatpush1.bf16.msra.mxu0 0
        %327 = vmatprep.subr.bf16.mxu0 0
        %328 = vmatpush1.bf16.msra.mxu0 0
        %329 = vmatprep.subr.bf16.mxu0 0
        %330 = vmatpush1.bf16.msra.mxu0 0
        %331 = vmatprep.subr.bf16.mxu0 0
        %332 = vmatpush1.bf16.msra.mxu0 0
        %333 = vmatprep.subr.bf16.mxu0 0
        %334 = vmatpush1.bf16.msra.mxu0 0
        %335 = vmatprep.subr.bf16.mxu0 0
        %336 = vmatpush1.bf16.msra.mxu0 0
        %337 = vmatprep.subr.bf16.mxu0 0
        %338 = vmatpush1.bf16.msra.mxu0 0
        %339 = vmatprep.subr.bf16.mxu0 0
        %340 = vmatpush1.bf16.msra.mxu0 0
        %341 = vmatprep.subr.bf16.mxu0 0
        %342 = vmatpush1.bf16.msra.mxu0 0
        %343 = vmatprep.subr.bf16.mxu0 0
        %344 = vmatpush1.bf16.msra.mxu0 0
        %345 = vmatprep.subr.bf16.mxu0 0
        %346 = vmatpush1.bf16.msra.mxu0 0
        %347 = vmatprep.subr.bf16.mxu0 0
        %348 = vmatpush1.bf16.msra.mxu0 0
        %349 = vmatprep.subr.bf16.mxu0 0
        %350 = vmatpush1.bf16.msra.mxu0 0
        %351 = vmatprep.mubr.bf16.mxu0 0
        %352 = vmatmul.mubr.bf16.gmra.mrb[0].mxu0 %v317
        %v353 = vpop.f32.mrb[0].mxu0
        %v354 = vadd.f32 0.0, %v353
        %v355 = vpop.f32.mrb[0].mxu0
        %v356 = vpop.f32.mrb[0].mxu0
        %v357 = vpop.f32.mrb[0].mxu0
        %358 = vdwg.mxu0
        %v359 = vpack.c.bf16 %v354, %v354
        %vm360 = vcmask 122880
        %vm361 = vsmask.f32 256
        %vm362 = vmand %vm360, %vm361
        %v363 = vld [vmem:[#allocation3] sm:$0x1]
        %v364 = vsel %vm362, %v359, %v363
        %365 = vst [vmem:[#allocation3] sm:$0x1] %v364
        %v367 = vunpack.c.l.b16 %v359
        %v368 = vpack.c.b16 %v367, %v367
        %v370 = vshll.u32 %v368, 16
        %372 = vrot.lane.b32.xlu0 %v370, 112
        %v373 = vpop.permute.xlu0 %372
        %vm375 = vsmask.f32 7938
        %vm376 = vmand %vm360, %vm375
        %v377 = vld [vmem:[#allocation3] sm:$0x1]
        %v378 = vsel %vm376, %v373, %v377
        %379 = vst [vmem:[#allocation3] sm:$0x1] %v378
        %v380 = vrot.slane %v368, 7
        %381 = vrot.lane.b32.xlu0 %v380, 96
        %v382 = vpop.permute.xlu0 %381
        %vm384 = vcmask 123905
        %vm385 = vsmask.f32 1280
        %vm386 = vmand %vm384, %vm385
        %v387 = vld [vmem:[#allocation3] sm:$0x2]
        %v388 = vsel %vm386, %v382, %v387
        %389 = vst [vmem:[#allocation3] sm:$0x2] %v388
        %v390 = vrot.slane %v370, 7
        %391 = vrot.lane.b32.xlu0 %v390, 80
        %v392 = vpop.permute.xlu0 %391
        %vm394 = vsmask.f32 7942
        %vm395 = vmand %vm384, %vm394
        %v396 = vld [vmem:[#allocation3] sm:$0x2]
        %v397 = vsel %vm395, %v392, %v396
        %398 = vst [vmem:[#allocation3] sm:$0x2] %v397
        %v399 = vrot.slane %v368, 6
        %400 = vrot.lane.b32.xlu0 %v399, 64
        %v401 = vpop.permute.xlu0 %400
        %vm403 = vcmask 124930
        %vm404 = vsmask.f32 2304
        %vm405 = vmand %vm403, %vm404
        %v406 = vld [vmem:[#allocation3] sm:$0x4]
        %v407 = vsel %vm405, %v401, %v406
        %408 = vst [vmem:[#allocation3] sm:$0x4] %v407
        %v409 = vrot.slane %v370, 6
        %410 = vrot.lane.b32.xlu0 %v409, 48
        %v411 = vpop.permute.xlu0 %410
        %vm413 = vsmask.f32 7946
        %vm414 = vmand %vm403, %vm413
        %v415 = vld [vmem:[#allocation3] sm:$0x4]
        %v416 = vsel %vm414, %v411, %v415
        %417 = vst [vmem:[#allocation3] sm:$0x4] %v416
        %v418 = vrot.slane %v368, 5
        %419 = vrot.lane.b32.xlu0 %v418, 32
        %v420 = vpop.permute.xlu0 %419
        %vm422 = vcmask 125955
        %vm423 = vsmask.f32 3328
        %vm424 = vmand %vm422, %vm423
        %v425 = vld [vmem:[#allocation3] sm:$0x8]
        %v426 = vsel %vm424, %v420, %v425
        %427 = vst [vmem:[#allocation3] sm:$0x8] %v426
        %v428 = vrot.slane %v370, 5
        %429 = vrot.lane.b32.xlu0 %v428, 16
        %v430 = vpop.permute.xlu0 %429
        %vm432 = vsmask.f32 7950
        %vm433 = vmand %vm422, %vm432
        %v434 = vld [vmem:[#allocation3] sm:$0x8]
        %v435 = vsel %vm433, %v430, %v434
        %436 = vst [vmem:[#allocation3] sm:$0x8] %v435
        %v437 = vld [vmem:[#allocation3] sm:$0xf]
        %v438 = vlaneseq
        %v439 = vand.u32 %v438, 127
        %vm440 = vcmp.lt.s32.totalorder %v439, 0
        %v441 = vsub.s32 0, %v439
        %v442 = vsel %vm440, %v441, %v439
        %v443 = vshrl.u32 %v442, 3
        %v444 = vand.u32 %v442, 7
        %v445 = vsub.s32 0, %v444
        %v446 = vsel %vm440, %v445, %v444
        %vm447 = vcmp.ne.s32.totalorder %v446, 0
        %vm448 = vcmp.lt.s32.totalorder %v446, 0
        %vm449 = vmand %vm448, %vm447
        %v450 = vadd.s32 %v446, 8
        %v451 = vsel %vm449, %v450, %v446
        %vm452 = vcmp.ge.s32.totalorder %v439, 8
        %vm453 = vcmp.lt.s32.totalorder %v439, 56
        %vm454 = vcmp.ge.s32.totalorder %v451, 1
        %vm455 = vcmp.le.s32.totalorder %v451, 6
        %vm456 = vmand %vm452, %vm454
        %vm457 = vmand %vm452, %vm455
        %vm458 = vmand %vm453, %vm454
        %vm459 = vmand %vm453, %vm455
        %v460 = vld [vmem:[#allocation6] sm:$0xf]
        %v461 = vld [vmem:[#allocation6 + $0x4] sm:$0xf]
        %v464 = vunpack.c.l.b16 %v460
        %v465 = vunpack.c.l.b16 %v461
        %v466 = vpack.c.b16 %v465, %v464
        %v469 = vsel %vm315, %v437, 0
        %471 = vmatprep.subr.bf16.mxu0 0
        %472 = vmatpush1.bf16.msra.mxu0 %v466
        %473 = vmatprep.subr.bf16.mxu0 0
        %474 = vmatpush1.bf16.msra.mxu0 0
        %475 = vmatprep.subr.bf16.mxu0 0
        %476 = vmatpush1.bf16.msra.mxu0 0
        %477 = vmatprep.subr.bf16.mxu0 0
        %478 = vmatpush1.bf16.msra.mxu0 0
        %479 = vmatprep.subr.bf16.mxu0 0
        %480 = vmatpush1.bf16.msra.mxu0 0
        %481 = vmatprep.subr.bf16.mxu0 0
        %482 = vmatpush1.bf16.msra.mxu0 0
        %483 = vmatprep.subr.bf16.mxu0 0
        %484 = vmatpush1.bf16.msra.mxu0 0
        %485 = vmatprep.subr.bf16.mxu0 0
        %486 = vmatpush1.bf16.msra.mxu0 0
        %487 = vmatprep.subr.bf16.mxu0 0
        %488 = vmatpush1.bf16.msra.mxu0 0
        %489 = vmatprep.subr.bf16.mxu0 0
        %490 = vmatpush1.bf16.msra.mxu0 0
        %491 = vmatprep.subr.bf16.mxu0 0
        %492 = vmatpush1.bf16.msra.mxu0 0
        %493 = vmatprep.subr.bf16.mxu0 0
        %494 = vmatpush1.bf16.msra.mxu0 0
        %495 = vmatprep.subr.bf16.mxu0 0
        %496 = vmatpush1.bf16.msra.mxu0 0
        %497 = vmatprep.subr.bf16.mxu0 0
        %498 = vmatpush1.bf16.msra.mxu0 0
        %499 = vmatprep.subr.bf16.mxu0 0
        %500 = vmatpush1.bf16.msra.mxu0 0
        %501 = vmatprep.subr.bf16.mxu0 0
        %502 = vmatpush1.bf16.msra.mxu0 0
        %503 = vmatprep.mubr.bf16.mxu0 0
        %504 = vmatmul.mubr.bf16.gmra.mrb[0].mxu0 %v469
        %v505 = vpop.f32.mrb[0].mxu0
        %v506 = vadd.f32 0.0, %v505
        %v507 = vpop.f32.mrb[0].mxu0
        %v508 = vpop.f32.mrb[0].mxu0
        %v509 = vpop.f32.mrb[0].mxu0
        %510 = vdwg.mxu0
        %512 = vrot.lane.b32.xlu0 %v506, 9
        %v513 = vpop.permute.xlu0 %512
        %vm515 = vcmask 72704
        %v516 = vsel %vm515, 0.0, %v513
        %vm517 = vcmask 596992
        %v518 = vsel %vm517, %v516, 0.0
        %v519 = vsel %vm456, 1, 0
        %vm520 = vcmp.eq.s32.totalorder %v519, 1
        %v521 = vsel %vm520, %v518, 0.0
        %v522 = vpack.c.bf16 %v521, %v521
        %vm523 = vcmask 519168
        %524 = vst.msk [vmem:[#allocation2] sm:$0xf] %vm523, %v522
        %v525 = vsel %vm452, 1, 0
        %vm526 = vcmp.eq.s32.totalorder %v525, 1
        %528 = vrot.lane.b32.xlu0 %v518, 127
        %v529 = vpop.permute.xlu0 %528
        %v531 = vsel %vm526, %v529, 0.0
        %v532 = vpack.c.bf16 %v531, %v531
        %v534 = vrot.slane %v532, 4
        %vm536 = vcmask 523268
        %537 = vst.msk [vmem:[#allocation2] sm:$0xf0] %vm536, %v534
        %v538 = vsel %vm457, 1, 0
        %vm539 = vcmp.eq.s32.totalorder %v538, 1
        %540 = vrot.lane.b32.xlu0 %v518, 126
        %v541 = vpop.permute.xlu0 %540
        %v543 = vsel %vm539, %v541, 0.0
        %v544 = vpack.c.bf16 %v543, %v543
        %545 = vst.msk [vmem:[#allocation2 + $0x10] sm:$0xf] %vm523, %v544
        %v546 = vsel %vm454, 1, 0
        %vm547 = vcmp.eq.s32.totalorder %v546, 1
        %548 = vrot.lane.b32.xlu0 %v518, 120
        %v549 = vpop.permute.xlu0 %548
        %v551 = vsel %vm547, %v549, 0.0
        %v552 = vpack.c.bf16 %v551, %v551
        %v554 = vrot.slane %v552, 4
        %556 = vst.msk [vmem:[#allocation2 + $0x10] sm:$0xf0] %vm536, %v554
        %v557 = vpack.c.bf16 %v506, %v506
        %558 = vst.msk [vmem:[#allocation2 + $0x20] sm:$0xf] %vm523, %v557
        %v559 = vsel %vm455, 1, 0
        %vm560 = vcmp.eq.s32.totalorder %v559, 1
        %561 = vrot.lane.b32.xlu0 %v518, 118
        %v562 = vpop.permute.xlu0 %561
        %v564 = vsel %vm560, %v562, 0.0
        %v565 = vpack.c.bf16 %v564, %v564
        %v567 = vrot.slane %v565, 4
        %569 = vst.msk [vmem:[#allocation2 + $0x20] sm:$0xf0] %vm536, %v567
        %v570 = vsel %vm458, 1, 0
        %vm571 = vcmp.eq.s32.totalorder %v570, 1
        %572 = vrot.lane.b32.xlu0 %v518, 112
        %v573 = vpop.permute.xlu0 %572
        %v575 = vsel %vm571, %v573, 0.0
        %v576 = vpack.c.bf16 %v575, %v575
        %577 = vst.msk [vmem:[#allocation2 + $0x30] sm:$0xf] %vm523, %v576
        %v578 = vsel %vm453, 1, 0
        %vm579 = vcmp.eq.s32.totalorder %v578, 1
        %580 = vrot.lane.b32.xlu0 %v518, 111
        %v581 = vpop.permute.xlu0 %580
        %v583 = vsel %vm579, %v581, 0.0
        %v584 = vpack.c.bf16 %v583, %v583
        %v586 = vrot.slane %v584, 4
        %588 = vst.msk [vmem:[#allocation2 + $0x30] sm:$0xf0] %vm536, %v586
        %v589 = vsel %vm459, 1, 0
        %vm590 = vcmp.eq.s32.totalorder %v589, 1
        %591 = vrot.lane.b32.xlu0 %v518, 110
        %v592 = vpop.permute.xlu0 %591
        %v594 = vsel %vm590, %v592, 0.0
        %v595 = vpack.c.bf16 %v594, %v594
        %596 = vst.msk [vmem:[#allocation2 + $0x40] sm:$0xf] %vm523, %v595
        %v597 = vld [vmem:[#allocation4] sm:$0xf]
        %v598 = vld [vmem:[#allocation2] sm:$0xff]
        %v599 = vld [vmem:[#allocation2 + $0x10] sm:$0xff]
        %v600 = vld [vmem:[#allocation2 + $0x20] sm:$0xff]
        %v601 = vld [vmem:[#allocation2 + $0x30] sm:$0xff]
        %v602 = vld [vmem:[#allocation2 + $0x40] sm:$0xf]
        %vm603 = vcmask 588800
        %v605 = vsel %vm603, %v597, 0
        %vm607 = vcmask 1043456
        %v609 = vsel %vm607, %v602, 0
        %611 = vmatprep.subr.bf16.mxu0 0
        %612 = vmatpush1.bf16.msra.mxu0 %v598
        %613 = vmatprep.subr.bf16.mxu0 0
        %614 = vmatpush1.bf16.msra.mxu0 %v599
        %615 = vmatprep.subr.bf16.mxu0 0
        %616 = vmatpush1.bf16.msra.mxu0 %v600
        %617 = vmatprep.subr.bf16.mxu0 0
        %618 = vmatpush1.bf16.msra.mxu0 %v601
        %619 = vmatprep.subr.bf16.mxu0 0
        %620 = vmatpush1.bf16.msra.mxu0 %v609
        %621 = vmatprep.subr.bf16.mxu0 0
        %622 = vmatpush1.bf16.msra.mxu0 0
        %623 = vmatprep.subr.bf16.mxu0 0
        %624 = vmatpush1.bf16.msra.mxu0 0
        %625 = vmatprep.subr.bf16.mxu0 0
        %626 = vmatpush1.bf16.msra.mxu0 0
        %627 = vmatprep.subr.bf16.mxu0 0
        %628 = vmatpush1.bf16.msra.mxu0 0
        %629 = vmatprep.subr.bf16.mxu0 0
        %630 = vmatpush1.bf16.msra.mxu0 0
        %631 = vmatprep.subr.bf16.mxu0 0
        %632 = vmatpush1.bf16.msra.mxu0 0
        %633 = vmatprep.subr.bf16.mxu0 0
        %634 = vmatpush1.bf16.msra.mxu0 0
        %635 = vmatprep.subr.bf16.mxu0 0
        %636 = vmatpush1.bf16.msra.mxu0 0
        %637 = vmatprep.subr.bf16.mxu0 0
        %638 = vmatpush1.bf16.msra.mxu0 0
        %639 = vmatprep.subr.bf16.mxu0 0
        %640 = vmatpush1.bf16.msra.mxu0 0
        %641 = vmatprep.subr.bf16.mxu0 0
        %642 = vmatpush1.bf16.msra.mxu0 0
        %643 = vmatprep.mubr.bf16.mxu0 0
        %644 = vmatmul.mubr.bf16.gmra.mrb[0].mxu0 %v605
        %v645 = vpop.f32.mrb[0].mxu0
        %v646 = vadd.f32 0.0, %v645
        %v647 = vpop.f32.mrb[0].mxu0
        %v648 = vpop.f32.mrb[0].mxu0
        %v649 = vpop.f32.mrb[0].mxu0
        %650 = vdwg.mxu0
        %vm651 = vcmp.gt.f32.partialorder %v646, 0.0
        %v652 = vmin.f32 %v646, 0.0
        %v653 = vmul.f32 %v652, 1.442695
        %v654 = vpow.pop %v653
        %v655 = vsub.f32 %v654, 1.0
        %v656 = vsel %vm651, %v646, %v655
        %658 = vrot.lane.b32.xlu0 %v656, 9
        %v659 = vpop.permute.xlu0 %658
        %v661 = vsel %vm515, 0.0, %v659
        %v662 = vsel %vm517, %v661, 0.0
        %v663 = vsel %vm520, %v662, 0.0
        %v664 = vpack.c.bf16 %v663, %v663
        %665 = vst.msk [vmem:[#allocation2] sm:$0xf] %vm523, %v664
        %667 = vrot.lane.b32.xlu0 %v662, 127
        %v668 = vpop.permute.xlu0 %667
        %v670 = vsel %vm526, %v668, 0.0
        %v671 = vpack.c.bf16 %v670, %v670
        %v673 = vrot.slane %v671, 4
        %675 = vst.msk [vmem:[#allocation2] sm:$0xf0] %vm536, %v673
        %676 = vrot.lane.b32.xlu0 %v662, 126
        %v677 = vpop.permute.xlu0 %676
        %v679 = vsel %vm539, %v677, 0.0
        %v680 = vpack.c.bf16 %v679, %v679
        %681 = vst.msk [vmem:[#allocation2 + $0x10] sm:$0xf] %vm523, %v680
        %682 = vrot.lane.b32.xlu0 %v662, 120
        %v683 = vpop.permute.xlu0 %682
        %v685 = vsel %vm547, %v683, 0.0
        %v686 = vpack.c.bf16 %v685, %v685
        %v688 = vrot.slane %v686, 4
        %690 = vst.msk [vmem:[#allocation2 + $0x10] sm:$0xf0] %vm536, %v688
        %v691 = vpack.c.bf16 %v656, %v656
        %692 = vst.msk [vmem:[#allocation2 + $0x20] sm:$0xf] %vm523, %v691
        %693 = vrot.lane.b32.xlu0 %v662, 118
        %v694 = vpop.permute.xlu0 %693
        %v696 = vsel %vm560, %v694, 0.0
        %v697 = vpack.c.bf16 %v696, %v696
        %v699 = vrot.slane %v697, 4
        %701 = vst.msk [vmem:[#allocation2 + $0x20] sm:$0xf0] %vm536, %v699
        %702 = vrot.lane.b32.xlu0 %v662, 112
        %v703 = vpop.permute.xlu0 %702
        %v705 = vsel %vm571, %v703, 0.0
        %v706 = vpack.c.bf16 %v705, %v705
        %707 = vst.msk [vmem:[#allocation2 + $0x30] sm:$0xf] %vm523, %v706
        %708 = vrot.lane.b32.xlu0 %v662, 111
        %v709 = vpop.permute.xlu0 %708
        %v711 = vsel %vm579, %v709, 0.0
        %v712 = vpack.c.bf16 %v711, %v711
        %v714 = vrot.slane %v712, 4
        %716 = vst.msk [vmem:[#allocation2 + $0x30] sm:$0xf0] %vm536, %v714
        %717 = vrot.lane.b32.xlu0 %v662, 110
        %v718 = vpop.permute.xlu0 %717
        %v720 = vsel %vm590, %v718, 0.0
        %v721 = vpack.c.bf16 %v720, %v720
        %722 = vst.msk [vmem:[#allocation2 + $0x40] sm:$0xf] %vm523, %v721
        %v723 = vld [vmem:[#allocation4 + $0x8] sm:$0xf]
        %v724 = vld [vmem:[#allocation2] sm:$0xff]
        %v725 = vld [vmem:[#allocation2 + $0x10] sm:$0xff]
        %v726 = vld [vmem:[#allocation2 + $0x20] sm:$0xff]
        %v727 = vld [vmem:[#allocation2 + $0x30] sm:$0xff]
        %v728 = vld [vmem:[#allocation2 + $0x40] sm:$0xf]
        %v730 = vsel %vm603, %v723, 0
        %v733 = vsel %vm607, %v728, 0
        %735 = vmatprep.subr.bf16.mxu0 0
        %736 = vmatpush1.bf16.msra.mxu0 %v724
        %737 = vmatprep.subr.bf16.mxu0 0
        %738 = vmatpush1.bf16.msra.mxu0 %v725
        %739 = vmatprep.subr.bf16.mxu0 0
        %740 = vmatpush1.bf16.msra.mxu0 %v726
        %741 = vmatprep.subr.bf16.mxu0 0
        %742 = vmatpush1.bf16.msra.mxu0 %v727
        %743 = vmatprep.subr.bf16.mxu0 0
        %744 = vmatpush1.bf16.msra.mxu0 %v733
        %745 = vmatprep.subr.bf16.mxu0 0
        %746 = vmatpush1.bf16.msra.mxu0 0
        %747 = vmatprep.subr.bf16.mxu0 0
        %748 = vmatpush1.bf16.msra.mxu0 0
        %749 = vmatprep.subr.bf16.mxu0 0
        %750 = vmatpush1.bf16.msra.mxu0 0
        %751 = vmatprep.subr.bf16.mxu0 0
        %752 = vmatpush1.bf16.msra.mxu0 0
        %753 = vmatprep.subr.bf16.mxu0 0
        %754 = vmatpush1.bf16.msra.mxu0 0
        %755 = vmatprep.subr.bf16.mxu0 0
        %756 = vmatpush1.bf16.msra.mxu0 0
        %757 = vmatprep.subr.bf16.mxu0 0
        %758 = vmatpush1.bf16.msra.mxu0 0
        %759 = vmatprep.subr.bf16.mxu0 0
        %760 = vmatpush1.bf16.msra.mxu0 0
        %761 = vmatprep.subr.bf16.mxu0 0
        %762 = vmatpush1.bf16.msra.mxu0 0
        %763 = vmatprep.subr.bf16.mxu0 0
        %764 = vmatpush1.bf16.msra.mxu0 0
        %765 = vmatprep.subr.bf16.mxu0 0
        %766 = vmatpush1.bf16.msra.mxu0 0
        %767 = vmatprep.mubr.bf16.mxu0 0
        %768 = vmatmul.mubr.bf16.gmra.mrb[0].mxu0 %v730
        %v769 = vpop.f32.mrb[0].mxu0
        %v770 = vadd.f32 0.0, %v769
        %v771 = vpop.f32.mrb[0].mxu0
        %v772 = vpop.f32.mrb[0].mxu0
        %v773 = vpop.f32.mrb[0].mxu0
        %774 = vdwg.mxu0
        %vm775 = vcmp.gt.f32.partialorder %v770, 0.0
        %v776 = vmin.f32 %v770, 0.0
        %v777 = vmul.f32 %v776, 1.442695
        %v778 = vpow.pop %v777
        %v779 = vsub.f32 %v778, 1.0
        %v780 = vsel %vm775, %v770, %v779
        %v781 = vpack.c.bf16 %v780, %v780
        %v782 = vld [vmem:[#allocation8] sm:$0xff]
        %v783 = vld [vmem:[#allocation8 + $0x8] sm:$0xff]
        %v784 = vld [vmem:[#allocation8 + $0x10] sm:$0xff]
        %v785 = vld [vmem:[#allocation8 + $0x18] sm:$0xff]
        %v786 = vld [vmem:[#allocation8 + $0x20] sm:$0xff]
        %v787 = vld [vmem:[#allocation8 + $0x28] sm:$0xff]
        %v788 = vld [vmem:[#allocation8 + $0x30] sm:$0xff]
        %v789 = vld [vmem:[#allocation8 + $0x38] sm:$0xff]
        %v798 = vunpack.c.l.b16 %v782
        %v799 = vunpack.c.h.b16 %v782
        %v800 = vunpack.c.l.b16 %v783
        %v801 = vunpack.c.h.b16 %v783
        %v802 = vunpack.c.l.b16 %v784
        %v803 = vunpack.c.h.b16 %v784
        %v804 = vunpack.c.l.b16 %v785
        %v805 = vunpack.c.h.b16 %v785
        %v806 = vunpack.c.l.b16 %v786
        %v807 = vunpack.c.h.b16 %v786
        %v808 = vunpack.c.l.b16 %v787
        %v809 = vunpack.c.h.b16 %v787
        %v810 = vunpack.c.l.b16 %v788
        %v811 = vunpack.c.h.b16 %v788
        %v812 = vunpack.c.l.b16 %v789
        %v813 = vunpack.c.h.b16 %v789
        %v814 = vpack.c.b16 %v800, %v798
        %v815 = vpack.c.b16 %v801, %v799
        %v816 = vpack.c.b16 %v804, %v802
        %v817 = vpack.c.b16 %v805, %v803
        %v818 = vpack.c.b16 %v808, %v806
        %v819 = vpack.c.b16 %v809, %v807
        %v820 = vpack.c.b16 %v812, %v810
        %v821 = vpack.c.b16 %v813, %v811
        %vm830 = vcmask 523264
        %v832 = vsel %vm830, %v781, 0
        %834 = vmatprep.subr.bf16.mxu0 %v815
        %835 = vmatpush1.bf16.msra.mxu0 %v814
        %836 = vmatprep.subr.bf16.mxu0 %v817
        %837 = vmatpush1.bf16.msra.mxu0 %v816
        %838 = vmatprep.subr.bf16.mxu0 %v819
        %839 = vmatpush1.bf16.msra.mxu0 %v818
        %840 = vmatprep.subr.bf16.mxu0 %v821
        %841 = vmatpush1.bf16.msra.mxu0 %v820
        %842 = vmatprep.subr.bf16.mxu0 0
        %843 = vmatpush1.bf16.msra.mxu0 0
        %844 = vmatprep.subr.bf16.mxu0 0
        %845 = vmatpush1.bf16.msra.mxu0 0
        %846 = vmatprep.subr.bf16.mxu0 0
        %847 = vmatpush1.bf16.msra.mxu0 0
        %848 = vmatprep.subr.bf16.mxu0 0
        %849 = vmatpush1.bf16.msra.mxu0 0
        %850 = vmatprep.subr.bf16.mxu0 0
        %851 = vmatpush1.bf16.msra.mxu0 0
        %852 = vmatprep.subr.bf16.mxu0 0
        %853 = vmatpush1.bf16.msra.mxu0 0
        %854 = vmatprep.subr.bf16.mxu0 0
        %855 = vmatpush1.bf16.msra.mxu0 0
        %856 = vmatprep.subr.bf16.mxu0 0
        %857 = vmatpush1.bf16.msra.mxu0 0
        %858 = vmatprep.subr.bf16.mxu0 0
        %859 = vmatpush1.bf16.msra.mxu0 0
        %860 = vmatprep.subr.bf16.mxu0 0
        %861 = vmatpush1.bf16.msra.mxu0 0
        %862 = vmatprep.subr.bf16.mxu0 0
        %863 = vmatpush1.bf16.msra.mxu0 0
        %864 = vmatprep.subr.bf16.mxu0 0
        %865 = vmatpush1.bf16.msra.mxu0 0
        %866 = vmatprep.mubr.bf16.mxu0 0
        %867 = vmatmul.mubr.bf16.gmra.mrb[0].mxu0 %v832
        %v868 = vpop.f32.mrb[0].mxu0
        %v869 = vadd.f32 0.0, %v868
        %v870 = vpop.f32.mrb[0].mxu0
        %v871 = vadd.f32 0.0, %v870
        %v872 = vpop.f32.mrb[0].mxu0
        %v873 = vpop.f32.mrb[0].mxu0
        %874 = vdwg.mxu0
        %v875 = vld [vmem:[#allocation9] sm:$0xff]
        %v876 = vld [vmem:[#allocation9 + $0x8] sm:$0xff]
        %v879 = vunpack.c.l.b16 %v875
        %v880 = vunpack.c.h.b16 %v875
        %v881 = vunpack.c.l.b16 %v876
        %v882 = vunpack.c.h.b16 %v876
        %v883 = vpack.c.b16 %v881, %v879
        %v884 = vpack.c.b16 %v882, %v880
        %887 = vmatprep.subr.bf16.mxu0 %v884
        %888 = vmatpush1.bf16.msra.mxu0 %v883
        %889 = vmatprep.subr.bf16.mxu0 0
        %890 = vmatpush1.bf16.msra.mxu0 0
        %891 = vmatprep.subr.bf16.mxu0 0
        %892 = vmatpush1.bf16.msra.mxu0 0
        %893 = vmatprep.subr.bf16.mxu0 0
        %894 = vmatpush1.bf16.msra.mxu0 0
        %895 = vmatprep.subr.bf16.mxu0 0
        %896 = vmatpush1.bf16.msra.mxu0 0
        %897 = vmatprep.subr.bf16.mxu0 0
        %898 = vmatpush1.bf16.msra.mxu0 0
        %899 = vmatprep.subr.bf16.mxu0 0
        %900 = vmatpush1.bf16.msra.mxu0 0
        %901 = vmatprep.subr.bf16.mxu0 0
        %902 = vmatpush1.bf16.msra.mxu0 0
        %903 = vmatprep.subr.bf16.mxu0 0
        %904 = vmatpush1.bf16.msra.mxu0 0
        %905 = vmatprep.subr.bf16.mxu0 0
        %906 = vmatpush1.bf16.msra.mxu0 0
        %907 = vmatprep.subr.bf16.mxu0 0
        %908 = vmatpush1.bf16.msra.mxu0 0
        %909 = vmatprep.subr.bf16.mxu0 0
        %910 = vmatpush1.bf16.msra.mxu0 0
        %911 = vmatprep.subr.bf16.mxu0 0
        %912 = vmatpush1.bf16.msra.mxu0 0
        %913 = vmatprep.subr.bf16.mxu0 0
        %914 = vmatpush1.bf16.msra.mxu0 0
        %915 = vmatprep.subr.bf16.mxu0 0
        %916 = vmatpush1.bf16.msra.mxu0 0
        %917 = vmatprep.subr.bf16.mxu0 0
        %918 = vmatpush1.bf16.msra.mxu0 0
        %919 = vmatprep.mubr.bf16.mxu0 0
        %920 = vmatmul.mubr.bf16.gmra.mrb[0].mxu0 %v469
        %v921 = vpop.f32.mrb[0].mxu0
        %v922 = vadd.f32 0.0, %v921
        %v923 = vpop.f32.mrb[0].mxu0
        %v924 = vadd.f32 0.0, %v923
        %v925 = vpop.f32.mrb[0].mxu0
        %v926 = vpop.f32.mrb[0].mxu0
        %927 = vdwg.mxu0
        %v928 = vadd.s32 %v439, 128
        %vm929 = vcmp.lt.s32.totalorder %v439, 0
        %v930 = vsub.s32 0, %v439
        %v931 = vsel %vm929, %v930, %v439
        %v932 = vshrl.u32 %v931, 4
        %v933 = vand.u32 %v931, 15
        %v934 = vsub.s32 0, %v933
        %v935 = vsel %vm929, %v934, %v933
        %vm936 = vcmp.lt.s32.totalorder %v928, 0
        %v937 = vsub.s32 0, %v928
        %v938 = vsel %vm936, %v937, %v928
        %v939 = vshrl.u32 %v938, 4
        %v940 = vand.u32 %v938, 15
        %v941 = vsub.s32 0, %v940
        %v942 = vsel %vm936, %v941, %v940
        %vm943 = vcmp.ne.s32.totalorder %v935, 0
        %vm944 = vcmp.ne.s32.totalorder %v942, 0
        %vm945 = vcmp.lt.s32.totalorder %v935, 0
        %vm946 = vcmp.lt.s32.totalorder %v942, 0
        %vm947 = vmand %vm945, %vm943
        %vm948 = vmand %vm946, %vm944
        %v949 = vadd.s32 %v935, 16
        %v950 = vadd.s32 %v942, 16
        %v951 = vsel %vm947, %v949, %v935
        %v952 = vsel %vm948, %v950, %v942
        %vm953 = vcmp.ge.s32.totalorder %v439, 16
        %vm954 = vcmp.ge.s32.totalorder %v928, 16
        %vm955 = vcmp.lt.s32.totalorder %v439, 240
        %vm956 = vcmp.lt.s32.totalorder %v928, 240
        %vm957 = vcmp.ge.s32.totalorder %v951, 1
        %vm958 = vcmp.ge.s32.totalorder %v952, 1
        %vm959 = vcmp.le.s32.totalorder %v951, 14
        %vm960 = vcmp.le.s32.totalorder %v952, 14
        %vm961 = vmand %vm953, %vm957
        %vm962 = vmand %vm954, %vm958
        %vm963 = vmand %vm953, %vm959
        %vm964 = vmand %vm954, %vm960
        %vm965 = vmand %vm955, %vm957
        %vm966 = vmand %vm956, %vm958
        %vm967 = vmand %vm955, %vm959
        %vm968 = vmand %vm956, %vm960
        %969 = vrot.lane.b32.xlu0 %v869, 17
        %v970 = vpop.permute.xlu0 %969
        %971 = vrot.lane.b32.xlu0 %v871, 17
        %v972 = vpop.permute.xlu0 %971
        %vm973 = vcmp.lt.s32.totalorder %v439, 17
        %v974 = vsel %vm973, %v970, %v972
        %v975 = vsel %vm973, %v972, %v970
        %v976 = vsel %vm961, 1, 0
        %v977 = vsel %vm962, 1, 0
        %vm978 = vcmp.eq.s32.totalorder %v976, 1
        %vm979 = vcmp.eq.s32.totalorder %v977, 1
        %v980 = vsel %vm978, %v975, 0.0
        %v981 = vsel %vm979, %v974, 0.0
        %v982 = vpack.c.bf16 %v980, %v980
        %v983 = vpack.c.bf16 %v981, %v981
        %984 = vst [vmem:[#allocation2] sm:$0xf] %v982
        %985 = vst [vmem:[#allocation2 + $0x8] sm:$0xf] %v983
        %986 = vrot.lane.b32.xlu0 %v922, 17
        %v987 = vpop.permute.xlu0 %986
        %988 = vrot.lane.b32.xlu0 %v924, 17
        %v989 = vpop.permute.xlu0 %988
        %v990 = vsel %vm973, %v987, %v989
        %v991 = vsel %vm973, %v989, %v987
        %v992 = vsel %vm978, %v991, 0.0
        %v993 = vsel %vm979, %v990, 0.0
        %v994 = vpack.c.bf16 %v992, %v992
        %v995 = vpack.c.bf16 %v993, %v993
        %v998 = vrot.slane %v994, 4
        %v999 = vrot.slane %v995, 4
        %1002 = vst [vmem:[#allocation2] sm:$0xf0] %v998
        %1003 = vst [vmem:[#allocation2 + $0x8] sm:$0xf0] %v999
        %1004 = vrot.lane.b32.xlu0 %v869, 16
        %v1005 = vpop.permute.xlu0 %1004
        %1006 = vrot.lane.b32.xlu0 %v871, 16
        %v1007 = vpop.permute.xlu0 %1006
        %vm1008 = vcmp.lt.s32.totalorder %v439, 16
        %v1009 = vsel %vm1008, %v1005, %v1007
        %v1010 = vsel %vm1008, %v1007, %v1005
        %v1011 = vsel %vm953, 1, 0
        %v1012 = vsel %vm954, 1, 0
        %vm1013 = vcmp.eq.s32.totalorder %v1011, 1
        %vm1014 = vcmp.eq.s32.totalorder %v1012, 1
        %v1015 = vsel %vm1013, %v1010, 0.0
        %v1016 = vsel %vm1014, %v1009, 0.0
        %v1017 = vpack.c.bf16 %v1015, %v1015
        %v1018 = vpack.c.bf16 %v1016, %v1016
        %1019 = vst [vmem:[#allocation2 + $0x10] sm:$0xf] %v1017
        %1020 = vst [vmem:[#allocation2 + $0x18] sm:$0xf] %v1018
        %1021 = vrot.lane.b32.xlu0 %v922, 16
        %v1022 = vpop.permute.xlu0 %1021
        %1023 = vrot.lane.b32.xlu0 %v924, 16
        %v1024 = vpop.permute.xlu0 %1023
        %v1025 = vsel %vm1008, %v1022, %v1024
        %v1026 = vsel %vm1008, %v1024, %v1022
        %v1027 = vsel %vm1013, %v1026, 0.0
        %v1028 = vsel %vm1014, %v1025, 0.0
        %v1029 = vpack.c.bf16 %v1027, %v1027
        %v1030 = vpack.c.bf16 %v1028, %v1028
        %v1033 = vrot.slane %v1029, 4
        %v1034 = vrot.slane %v1030, 4
        %1037 = vst [vmem:[#allocation2 + $0x10] sm:$0xf0] %v1033
        %1038 = vst [vmem:[#allocation2 + $0x18] sm:$0xf0] %v1034
        %1039 = vrot.lane.b32.xlu0 %v869, 15
        %v1040 = vpop.permute.xlu0 %1039
        %1041 = vrot.lane.b32.xlu0 %v871, 15
        %v1042 = vpop.permute.xlu0 %1041
        %vm1043 = vcmp.lt.s32.totalorder %v439, 15
        %v1044 = vsel %vm1043, %v1040, %v1042
        %v1045 = vsel %vm1043, %v1042, %v1040
        %v1046 = vsel %vm963, 1, 0
        %v1047 = vsel %vm964, 1, 0
        %vm1048 = vcmp.eq.s32.totalorder %v1046, 1
        %vm1049 = vcmp.eq.s32.totalorder %v1047, 1
        %v1050 = vsel %vm1048, %v1045, 0.0
        %v1051 = vsel %vm1049, %v1044, 0.0
        %v1052 = vpack.c.bf16 %v1050, %v1050
        %v1053 = vpack.c.bf16 %v1051, %v1051
        %1054 = vst [vmem:[#allocation2 + $0x20] sm:$0xf] %v1052
        %1055 = vst [vmem:[#allocation2 + $0x28] sm:$0xf] %v1053
        %1056 = vrot.lane.b32.xlu0 %v922, 15
        %v1057 = vpop.permute.xlu0 %1056
        %1058 = vrot.lane.b32.xlu0 %v924, 15
        %v1059 = vpop.permute.xlu0 %1058
        %v1060 = vsel %vm1043, %v1057, %v1059
        %v1061 = vsel %vm1043, %v1059, %v1057
        %v1062 = vsel %vm1048, %v1061, 0.0
        %v1063 = vsel %vm1049, %v1060, 0.0
        %v1064 = vpack.c.bf16 %v1062, %v1062
        %v1065 = vpack.c.bf16 %v1063, %v1063
        %v1068 = vrot.slane %v1064, 4
        %v1069 = vrot.slane %v1065, 4
        %1072 = vst [vmem:[#allocation2 + $0x20] sm:$0xf0] %v1068
        %1073 = vst [vmem:[#allocation2 + $0x28] sm:$0xf0] %v1069
        %1074 = vrot.lane.b32.xlu0 %v869, 1
        %v1075 = vpop.permute.xlu0 %1074
        %1076 = vrot.lane.b32.xlu0 %v871, 1
        %v1077 = vpop.permute.xlu0 %1076
        %vm1078 = vcmp.lt.s32.totalorder %v439, 1
        %v1079 = vsel %vm1078, %v1075, %v1077
        %v1080 = vsel %vm1078, %v1077, %v1075
        %v1081 = vsel %vm957, 1, 0
        %v1082 = vsel %vm958, 1, 0
        %vm1083 = vcmp.eq.s32.totalorder %v1081, 1
        %vm1084 = vcmp.eq.s32.totalorder %v1082, 1
        %v1085 = vsel %vm1083, %v1080, 0.0
        %v1086 = vsel %vm1084, %v1079, 0.0
        %v1087 = vpack.c.bf16 %v1085, %v1085
        %v1088 = vpack.c.bf16 %v1086, %v1086
        %1089 = vst [vmem:[#allocation2 + $0x30] sm:$0xf] %v1087
        %1090 = vst [vmem:[#allocation2 + $0x38] sm:$0xf] %v1088
        %1091 = vrot.lane.b32.xlu0 %v922, 1
        %v1092 = vpop.permute.xlu0 %1091
        %1093 = vrot.lane.b32.xlu0 %v924, 1
        %v1094 = vpop.permute.xlu0 %1093
        %v1095 = vsel %vm1078, %v1092, %v1094
        %v1096 = vsel %vm1078, %v1094, %v1092
        %v1097 = vsel %vm1083, %v1096, 0.0
        %v1098 = vsel %vm1084, %v1095, 0.0
        %v1099 = vpack.c.bf16 %v1097, %v1097
        %v1100 = vpack.c.bf16 %v1098, %v1098
        %v1103 = vrot.slane %v1099, 4
        %v1104 = vrot.slane %v1100, 4
        %1107 = vst [vmem:[#allocation2 + $0x30] sm:$0xf0] %v1103
        %1108 = vst [vmem:[#allocation2 + $0x38] sm:$0xf0] %v1104
        %v1109 = vpack.c.bf16 %v869, %v869
        %v1110 = vpack.c.bf16 %v871, %v871
        %1111 = vst [vmem:[#allocation2 + $0x40] sm:$0xf] %v1109
        %1112 = vst [vmem:[#allocation2 + $0x48] sm:$0xf] %v1110
        %v1113 = vpack.c.bf16 %v922, %v922
        %v1114 = vpack.c.bf16 %v924, %v924
        %v1117 = vrot.slane %v1113, 4
        %v1118 = vrot.slane %v1114, 4
        %1121 = vst [vmem:[#allocation2 + $0x40] sm:$0xf0] %v1117
        %1122 = vst [vmem:[#allocation2 + $0x48] sm:$0xf0] %v1118
        %1123 = vrot.lane.b32.xlu0 %v869, 127
        %v1124 = vpop.permute.xlu0 %1123
        %1125 = vrot.lane.b32.xlu0 %v871, 127
        %v1126 = vpop.permute.xlu0 %1125
        %vm1127 = vcmp.lt.s32.totalorder %v439, 127
        %v1128 = vsel %vm1127, %v1124, %v1126
        %v1129 = vsel %vm1127, %v1126, %v1124
        %v1130 = vsel %vm959, 1, 0
        %v1131 = vsel %vm960, 1, 0
        %vm1132 = vcmp.eq.s32.totalorder %v1130, 1
        %vm1133 = vcmp.eq.s32.totalorder %v1131, 1
        %v1134 = vsel %vm1132, %v1128, 0.0
        %v1135 = vsel %vm1133, %v1129, 0.0
        %v1136 = vpack.c.bf16 %v1134, %v1134
        %v1137 = vpack.c.bf16 %v1135, %v1135
        %1138 = vst [vmem:[#allocation2 + $0x50] sm:$0xf] %v1136
        %1139 = vst [vmem:[#allocation2 + $0x58] sm:$0xf] %v1137
        %1140 = vrot.lane.b32.xlu0 %v922, 127
        %v1141 = vpop.permute.xlu0 %1140
        %1142 = vrot.lane.b32.xlu0 %v924, 127
        %v1143 = vpop.permute.xlu0 %1142
        %v1144 = vsel %vm1127, %v1141, %v1143
        %v1145 = vsel %vm1127, %v1143, %v1141
        %v1146 = vsel %vm1132, %v1144, 0.0
        %v1147 = vsel %vm1133, %v1145, 0.0
        %v1148 = vpack.c.bf16 %v1146, %v1146
        %v1149 = vpack.c.bf16 %v1147, %v1147
        %v1152 = vrot.slane %v1148, 4
        %v1153 = vrot.slane %v1149, 4
        %1156 = vst [vmem:[#allocation2 + $0x50] sm:$0xf0] %v1152
        %1157 = vst [vmem:[#allocation2 + $0x58] sm:$0xf0] %v1153
        %1158 = vrot.lane.b32.xlu0 %v869, 113
        %v1159 = vpop.permute.xlu0 %1158
        %1160 = vrot.lane.b32.xlu0 %v871, 113
        %v1161 = vpop.permute.xlu0 %1160
        %vm1162 = vcmp.lt.s32.totalorder %v439, 113
        %v1163 = vsel %vm1162, %v1159, %v1161
        %v1164 = vsel %vm1162, %v1161, %v1159
        %v1165 = vsel %vm965, 1, 0
        %v1166 = vsel %vm966, 1, 0
        %vm1167 = vcmp.eq.s32.totalorder %v1165, 1
        %vm1168 = vcmp.eq.s32.totalorder %v1166, 1
        %v1169 = vsel %vm1167, %v1163, 0.0
        %v1170 = vsel %vm1168, %v1164, 0.0
        %v1171 = vpack.c.bf16 %v1169, %v1169
        %v1172 = vpack.c.bf16 %v1170, %v1170
        %1173 = vst [vmem:[#allocation2 + $0x60] sm:$0xf] %v1171
        %1174 = vst [vmem:[#allocation2 + $0x68] sm:$0xf] %v1172
        %1175 = vrot.lane.b32.xlu0 %v922, 113
        %v1176 = vpop.permute.xlu0 %1175
        %1177 = vrot.lane.b32.xlu0 %v924, 113
        %v1178 = vpop.permute.xlu0 %1177
        %v1179 = vsel %vm1162, %v1176, %v1178
        %v1180 = vsel %vm1162, %v1178, %v1176
        %v1181 = vsel %vm1167, %v1179, 0.0
        %v1182 = vsel %vm1168, %v1180, 0.0
        %v1183 = vpack.c.bf16 %v1181, %v1181
        %v1184 = vpack.c.bf16 %v1182, %v1182
        %v1187 = vrot.slane %v1183, 4
        %v1188 = vrot.slane %v1184, 4
        %1191 = vst [vmem:[#allocation2 + $0x60] sm:$0xf0] %v1187
        %1192 = vst [vmem:[#allocation2 + $0x68] sm:$0xf0] %v1188
        %1193 = vrot.lane.b32.xlu0 %v869, 112
        %v1194 = vpop.permute.xlu0 %1193
        %1195 = vrot.lane.b32.xlu0 %v871, 112
        %v1196 = vpop.permute.xlu0 %1195
        %vm1197 = vcmp.lt.s32.totalorder %v439, 112
        %v1198 = vsel %vm1197, %v1194, %v1196
        %v1199 = vsel %vm1197, %v1196, %v1194
        %v1200 = vsel %vm955, 1, 0
        %v1201 = vsel %vm956, 1, 0
        %vm1202 = vcmp.eq.s32.totalorder %v1200, 1
        %vm1203 = vcmp.eq.s32.totalorder %v1201, 1
        %v1204 = vsel %vm1202, %v1198, 0.0
        %v1205 = vsel %vm1203, %v1199, 0.0
        %v1206 = vpack.c.bf16 %v1204, %v1204
        %v1207 = vpack.c.bf16 %v1205, %v1205
        %1208 = vst [vmem:[#allocation2 + $0x70] sm:$0xf] %v1206
        %1209 = vst [vmem:[#allocation2 + $0x78] sm:$0xf] %v1207
        %1210 = vrot.lane.b32.xlu0 %v922, 112
        %v1211 = vpop.permute.xlu0 %1210
        %1212 = vrot.lane.b32.xlu0 %v924, 112
        %v1213 = vpop.permute.xlu0 %1212
        %v1214 = vsel %vm1197, %v1211, %v1213
        %v1215 = vsel %vm1197, %v1213, %v1211
        %v1216 = vsel %vm1202, %v1214, 0.0
        %v1217 = vsel %vm1203, %v1215, 0.0
        %v1218 = vpack.c.bf16 %v1216, %v1216
        %v1219 = vpack.c.bf16 %v1217, %v1217
        %v1222 = vrot.slane %v1218, 4
        %v1223 = vrot.slane %v1219, 4
        %1226 = vst [vmem:[#allocation2 + $0x70] sm:$0xf0] %v1222
        %1227 = vst [vmem:[#allocation2 + $0x78] sm:$0xf0] %v1223
        %1228 = vrot.lane.b32.xlu0 %v869, 111
        %v1229 = vpop.permute.xlu0 %1228
        %1230 = vrot.lane.b32.xlu0 %v871, 111
        %v1231 = vpop.permute.xlu0 %1230
        %vm1232 = vcmp.lt.s32.totalorder %v439, 111
        %v1233 = vsel %vm1232, %v1229, %v1231
        %v1234 = vsel %vm1232, %v1231, %v1229
        %v1235 = vsel %vm967, 1, 0
        %v1236 = vsel %vm968, 1, 0
        %vm1237 = vcmp.eq.s32.totalorder %v1235, 1
        %vm1238 = vcmp.eq.s32.totalorder %v1236, 1
        %v1239 = vsel %vm1237, %v1233, 0.0
        %v1240 = vsel %vm1238, %v1234, 0.0
        %v1241 = vpack.c.bf16 %v1239, %v1239
        %v1242 = vpack.c.bf16 %v1240, %v1240
        %1243 = vst [vmem:[#allocation2 + $0x80] sm:$0xf] %v1241
        %1244 = vst [vmem:[#allocation2 + $0x88] sm:$0xf] %v1242
        %1245 = vrot.lane.b32.xlu0 %v922, 111
        %v1246 = vpop.permute.xlu0 %1245
        %1247 = vrot.lane.b32.xlu0 %v924, 111
        %v1248 = vpop.permute.xlu0 %1247
        %v1249 = vsel %vm1232, %v1246, %v1248
        %v1250 = vsel %vm1232, %v1248, %v1246
        %v1251 = vsel %vm1237, %v1249, 0.0
        %v1252 = vsel %vm1238, %v1250, 0.0
        %v1253 = vpack.c.bf16 %v1251, %v1251
        %v1254 = vpack.c.bf16 %v1252, %v1252
        %v1257 = vrot.slane %v1253, 4
        %v1258 = vrot.slane %v1254, 4
        %1261 = vst [vmem:[#allocation2 + $0x80] sm:$0xf0] %v1257
        %1262 = vst [vmem:[#allocation2 + $0x88] sm:$0xf0] %v1258
        %v1263 = vld [vmem:[#allocation4 + $0x10] sm:$0xff]
        %v1264 = vld [vmem:[#allocation2] sm:$0xff]
        %v1265 = vld [vmem:[#allocation2 + $0x8] sm:$0xff]
        %v1266 = vld [vmem:[#allocation2 + $0x10] sm:$0xff]
        %v1267 = vld [vmem:[#allocation2 + $0x18] sm:$0xff]
        %v1268 = vld [vmem:[#allocation2 + $0x20] sm:$0xff]
        %v1269 = vld [vmem:[#allocation2 + $0x28] sm:$0xff]
        %v1270 = vld [vmem:[#allocation2 + $0x30] sm:$0xff]
        %v1271 = vld [vmem:[#allocation2 + $0x38] sm:$0xff]
        %v1272 = vld [vmem:[#allocation2 + $0x40] sm:$0xff]
        %v1273 = vld [vmem:[#allocation2 + $0x48] sm:$0xff]
        %v1274 = vld [vmem:[#allocation2 + $0x50] sm:$0xff]
        %v1275 = vld [vmem:[#allocation2 + $0x58] sm:$0xff]
        %v1276 = vld [vmem:[#allocation2 + $0x60] sm:$0xff]
        %v1277 = vld [vmem:[#allocation2 + $0x68] sm:$0xff]
        %v1278 = vld [vmem:[#allocation2 + $0x70] sm:$0xff]
        %v1279 = vld [vmem:[#allocation2 + $0x78] sm:$0xff]
        %v1280 = vld [vmem:[#allocation2 + $0x80] sm:$0xff]
        %v1281 = vld [vmem:[#allocation2 + $0x88] sm:$0xff]
        %v1283 = vunpack.c.l.b16 %v1263
        %v1284 = vunpack.c.h.b16 %v1263
        %v1285 = vpack.c.b16 %v1283, %v1283
        %v1286 = vpack.c.b16 %v1284, %v1284
        %v1289 = vsel %vm315, %v1286, 0
        %1291 = vmatprep.subr.bf16.mxu0 %v1265
        %1292 = vmatpush1.bf16.msra.mxu0 %v1264
        %1293 = vmatprep.subr.bf16.mxu0 %v1267
        %1294 = vmatpush1.bf16.msra.mxu0 %v1266
        %1295 = vmatprep.subr.bf16.mxu0 %v1269
        %1296 = vmatpush1.bf16.msra.mxu0 %v1268
        %1297 = vmatprep.subr.bf16.mxu0 %v1271
        %1298 = vmatpush1.bf16.msra.mxu0 %v1270
        %1299 = vmatprep.subr.bf16.mxu0 %v1273
        %1300 = vmatpush1.bf16.msra.mxu0 %v1272
        %1301 = vmatprep.subr.bf16.mxu0 %v1275
        %1302 = vmatpush1.bf16.msra.mxu0 %v1274
        %1303 = vmatprep.subr.bf16.mxu0 %v1277
        %1304 = vmatpush1.bf16.msra.mxu0 %v1276
        %1305 = vmatprep.subr.bf16.mxu0 %v1279
        %1306 = vmatpush1.bf16.msra.mxu0 %v1278
        %1307 = vmatprep.subr.bf16.mxu0 %v1281
        %1308 = vmatpush1.bf16.msra.mxu0 %v1280
        %1309 = vmatprep.subr.bf16.mxu0 0
        %1310 = vmatpush1.bf16.msra.mxu0 0
        %1311 = vmatprep.subr.bf16.mxu0 0
        %1312 = vmatpush1.bf16.msra.mxu0 0
        %1313 = vmatprep.subr.bf16.mxu0 0
        %1314 = vmatpush1.bf16.msra.mxu0 0
        %1315 = vmatprep.subr.bf16.mxu0 0
        %1316 = vmatpush1.bf16.msra.mxu0 0
        %1317 = vmatprep.subr.bf16.mxu0 0
        %1318 = vmatpush1.bf16.msra.mxu0 0
        %1319 = vmatprep.subr.bf16.mxu0 0
        %1320 = vmatpush1.bf16.msra.mxu0 0
        %1321 = vmatprep.subr.bf16.mxu0 0
        %1322 = vmatpush1.bf16.msra.mxu0 0
        %1323 = vmatprep.mubr.bf16.mxu0 %v1289
        %1324 = vmatmul.mubr.bf16.gmra.mrb[0].mxu0 %v1285
        %v1325 = vpop.f32.mrb[0].mxu0
        %v1326 = vadd.f32 0.0, %v1325
        %v1327 = vpop.f32.mrb[0].mxu0
        %v1328 = vadd.f32 0.0, %v1327
        %v1329 = vpop.f32.mrb[0].mxu0
        %v1330 = vpop.f32.mrb[0].mxu0
        %1331 = vdwg.mxu0
        %vm1332 = vcmp.gt.f32.partialorder %v1326, 0.0
        %vm1333 = vcmp.gt.f32.partialorder %v1328, 0.0
        %v1334 = vmin.f32 %v1326, 0.0
        %v1335 = vmin.f32 %v1328, 0.0
        %v1336 = vmul.f32 %v1334, 1.442695
        %v1337 = vpow.pop %v1336
        %v1338 = vmul.f32 %v1335, 1.442695
        %v1339 = vpow.pop %v1338
        %v1340 = vsub.f32 %v1337, 1.0
        %v1341 = vsub.f32 %v1339, 1.0
        %v1342 = vsel %vm1332, %v1326, %v1340
        %v1343 = vsel %vm1333, %v1328, %v1341
        %1344 = vrot.lane.b32.xlu0 %v1342, 17
        %v1345 = vpop.permute.xlu0 %1344
        %1346 = vrot.lane.b32.xlu0 %v1343, 17
        %v1347 = vpop.permute.xlu0 %1346
        %v1348 = vsel %vm973, %v1345, %v1347
        %v1349 = vsel %vm973, %v1347, %v1345
        %v1350 = vsel %vm978, %v1349, 0.0
        %v1351 = vsel %vm979, %v1348, 0.0
        %v1352 = vpack.c.bf16 %v1350, %v1350
        %v1353 = vpack.c.bf16 %v1351, %v1351
        %1354 = vst [vmem:[#allocation2] sm:$0xf] %v1352
        %1355 = vst [vmem:[#allocation2 + $0x8] sm:$0xf] %v1353
        %1356 = vrot.lane.b32.xlu0 %v1342, 16
        %v1357 = vpop.permute.xlu0 %1356
        %1358 = vrot.lane.b32.xlu0 %v1343, 16
        %v1359 = vpop.permute.xlu0 %1358
        %v1360 = vsel %vm1008, %v1357, %v1359
        %v1361 = vsel %vm1008, %v1359, %v1357
        %v1362 = vsel %vm1013, %v1361, 0.0
        %v1363 = vsel %vm1014, %v1360, 0.0
        %v1364 = vpack.c.bf16 %v1362, %v1362
        %v1365 = vpack.c.bf16 %v1363, %v1363
        %v1368 = vrot.slane %v1364, 4
        %v1369 = vrot.slane %v1365, 4
        %1372 = vst [vmem:[#allocation2] sm:$0xf0] %v1368
        %1373 = vst [vmem:[#allocation2 + $0x8] sm:$0xf0] %v1369
        %1374 = vrot.lane.b32.xlu0 %v1342, 15
        %v1375 = vpop.permute.xlu0 %1374
        %1376 = vrot.lane.b32.xlu0 %v1343, 15
        %v1377 = vpop.permute.xlu0 %1376
        %v1378 = vsel %vm1043, %v1375, %v1377
        %v1379 = vsel %vm1043, %v1377, %v1375
        %v1380 = vsel %vm1048, %v1379, 0.0
        %v1381 = vsel %vm1049, %v1378, 0.0
        %v1382 = vpack.c.bf16 %v1380, %v1380
        %v1383 = vpack.c.bf16 %v1381, %v1381
        %1384 = vst [vmem:[#allocation2 + $0x10] sm:$0xf] %v1382
        %1385 = vst [vmem:[#allocation2 + $0x18] sm:$0xf] %v1383
        %1386 = vrot.lane.b32.xlu0 %v1342, 1
        %v1387 = vpop.permute.xlu0 %1386
        %1388 = vrot.lane.b32.xlu0 %v1343, 1
        %v1389 = vpop.permute.xlu0 %1388
        %v1390 = vsel %vm1078, %v1387, %v1389
        %v1391 = vsel %vm1078, %v1389, %v1387
        %v1392 = vsel %vm1083, %v1391, 0.0
        %v1393 = vsel %vm1084, %v1390, 0.0
        %v1394 = vpack.c.bf16 %v1392, %v1392
        %v1395 = vpack.c.bf16 %v1393, %v1393
        %v1398 = vrot.slane %v1394, 4
        %v1399 = vrot.slane %v1395, 4
        %1402 = vst [vmem:[#allocation2 + $0x10] sm:$0xf0] %v1398
        %1403 = vst [vmem:[#allocation2 + $0x18] sm:$0xf0] %v1399
        %v1404 = vpack.c.bf16 %v1342, %v1342
        %v1405 = vpack.c.bf16 %v1343, %v1343
        %1406 = vst [vmem:[#allocation2 + $0x20] sm:$0xf] %v1404
        %1407 = vst [vmem:[#allocation2 + $0x28] sm:$0xf] %v1405
        %1408 = vrot.lane.b32.xlu0 %v1342, 127
        %v1409 = vpop.permute.xlu0 %1408
        %1410 = vrot.lane.b32.xlu0 %v1343, 127
        %v1411 = vpop.permute.xlu0 %1410
        %v1412 = vsel %vm1127, %v1409, %v1411
        %v1413 = vsel %vm1127, %v1411, %v1409
        %v1414 = vsel %vm1132, %v1412, 0.0
        %v1415 = vsel %vm1133, %v1413, 0.0
        %v1416 = vpack.c.bf16 %v1414, %v1414
        %v1417 = vpack.c.bf16 %v1415, %v1415
        %v1420 = vrot.slane %v1416, 4
        %v1421 = vrot.slane %v1417, 4
        %1424 = vst [vmem:[#allocation2 + $0x20] sm:$0xf0] %v1420
        %1425 = vst [vmem:[#allocation2 + $0x28] sm:$0xf0] %v1421
        %1426 = vrot.lane.b32.xlu0 %v1342, 113
        %v1427 = vpop.permute.xlu0 %1426
        %1428 = vrot.lane.b32.xlu0 %v1343, 113
        %v1429 = vpop.permute.xlu0 %1428
        %v1430 = vsel %vm1162, %v1427, %v1429
        %v1431 = vsel %vm1162, %v1429, %v1427
        %v1432 = vsel %vm1167, %v1430, 0.0
        %v1433 = vsel %vm1168, %v1431, 0.0
        %v1434 = vpack.c.bf16 %v1432, %v1432
        %v1435 = vpack.c.bf16 %v1433, %v1433
        %1436 = vst [vmem:[#allocation2 + $0x30] sm:$0xf] %v1434
        %1437 = vst [vmem:[#allocation2 + $0x38] sm:$0xf] %v1435
        %1438 = vrot.lane.b32.xlu0 %v1342, 112
        %v1439 = vpop.permute.xlu0 %1438
        %1440 = vrot.lane.b32.xlu0 %v1343, 112
        %v1441 = vpop.permute.xlu0 %1440
        %v1442 = vsel %vm1197, %v1439, %v1441
        %v1443 = vsel %vm1197, %v1441, %v1439
        %v1444 = vsel %vm1202, %v1442, 0.0
        %v1445 = vsel %vm1203, %v1443, 0.0
        %v1446 = vpack.c.bf16 %v1444, %v1444
        %v1447 = vpack.c.bf16 %v1445, %v1445
        %v1450 = vrot.slane %v1446, 4
        %v1451 = vrot.slane %v1447, 4
        %1454 = vst [vmem:[#allocation2 + $0x30] sm:$0xf0] %v1450
        %1455 = vst [vmem:[#allocation2 + $0x38] sm:$0xf0] %v1451
        %1456 = vrot.lane.b32.xlu0 %v1342, 111
        %v1457 = vpop.permute.xlu0 %1456
        %1458 = vrot.lane.b32.xlu0 %v1343, 111
        %v1459 = vpop.permute.xlu0 %1458
        %v1460 = vsel %vm1232, %v1457, %v1459
        %v1461 = vsel %vm1232, %v1459, %v1457
        %v1462 = vsel %vm1237, %v1460, 0.0
        %v1463 = vsel %vm1238, %v1461, 0.0
        %v1464 = vpack.c.bf16 %v1462, %v1462
        %v1465 = vpack.c.bf16 %v1463, %v1463
        %1466 = vst [vmem:[#allocation2 + $0x40] sm:$0xf] %v1464
        %1467 = vst [vmem:[#allocation2 + $0x48] sm:$0xf] %v1465
        %v1468 = vld [vmem:[#allocation4 + $0x18] sm:$0xf]
        %v1469 = vld [vmem:[#allocation2] sm:$0xff]
        %v1470 = vld [vmem:[#allocation2 + $0x8] sm:$0xff]
        %v1471 = vld [vmem:[#allocation2 + $0x10] sm:$0xff]
        %v1472 = vld [vmem:[#allocation2 + $0x18] sm:$0xff]
        %v1473 = vld [vmem:[#allocation2 + $0x20] sm:$0xff]
        %v1474 = vld [vmem:[#allocation2 + $0x28] sm:$0xff]
        %v1475 = vld [vmem:[#allocation2 + $0x30] sm:$0xff]
        %v1476 = vld [vmem:[#allocation2 + $0x38] sm:$0xff]
        %v1477 = vld [vmem:[#allocation2 + $0x40] sm:$0xf]
        %v1478 = vld [vmem:[#allocation2 + $0x48] sm:$0xf]
        %v1480 = vsel %vm603, %v1468, 0
        %v1483 = vsel %vm607, %v1477, 0
        %v1486 = vsel %vm607, %v1478, 0
        %1488 = vmatprep.subr.bf16.mxu0 %v1470
        %1489 = vmatpush1.bf16.msra.mxu0 %v1469
        %1490 = vmatprep.subr.bf16.mxu0 %v1472
        %1491 = vmatpush1.bf16.msra.mxu0 %v1471
        %1492 = vmatprep.subr.bf16.mxu0 %v1474
        %1493 = vmatpush1.bf16.msra.mxu0 %v1473
        %1494 = vmatprep.subr.bf16.mxu0 %v1476
        %1495 = vmatpush1.bf16.msra.mxu0 %v1475
        %1496 = vmatprep.subr.bf16.mxu0 %v1486
        %1497 = vmatpush1.bf16.msra.mxu0 %v1483
        %1498 = vmatprep.subr.bf16.mxu0 0
        %1499 = vmatpush1.bf16.msra.mxu0 0
        %1500 = vmatprep.subr.bf16.mxu0 0
        %1501 = vmatpush1.bf16.msra.mxu0 0
        %1502 = vmatprep.subr.bf16.mxu0 0
        %1503 = vmatpush1.bf16.msra.mxu0 0
        %1504 = vmatprep.subr.bf16.mxu0 0
        %1505 = vmatpush1.bf16.msra.mxu0 0
        %1506 = vmatprep.subr.bf16.mxu0 0
        %1507 = vmatpush1.bf16.msra.mxu0 0
        %1508 = vmatprep.subr.bf16.mxu0 0
        %1509 = vmatpush1.bf16.msra.mxu0 0
        %1510 = vmatprep.subr.bf16.mxu0 0
        %1511 = vmatpush1.bf16.msra.mxu0 0
        %1512 = vmatprep.subr.bf16.mxu0 0
        %1513 = vmatpush1.bf16.msra.mxu0 0
        %1514 = vmatprep.subr.bf16.mxu0 0
        %1515 = vmatpush1.bf16.msra.mxu0 0
        %1516 = vmatprep.subr.bf16.mxu0 0
        %1517 = vmatpush1.bf16.msra.mxu0 0
        %1518 = vmatprep.subr.bf16.mxu0 0
        %1519 = vmatpush1.bf16.msra.mxu0 0
        %1520 = vmatprep.mubr.bf16.mxu0 0
        %1521 = vmatmul.mubr.bf16.gmra.mrb[0].mxu0 %v1480
        %v1522 = vpop.f32.mrb[0].mxu0
        %v1523 = vadd.f32 0.0, %v1522
        %v1524 = vpop.f32.mrb[0].mxu0
        %v1525 = vadd.f32 0.0, %v1524
        %v1526 = vpop.f32.mrb[0].mxu0
        %v1527 = vpop.f32.mrb[0].mxu0
        %1528 = vdwg.mxu0
        %vm1529 = vcmp.gt.f32.partialorder %v1523, 0.0
        %vm1530 = vcmp.gt.f32.partialorder %v1525, 0.0
        %v1531 = vmin.f32 %v1523, 0.0
        %v1532 = vmin.f32 %v1525, 0.0
        %v1533 = vmul.f32 %v1531, 1.442695
        %v1534 = vpow.pop %v1533
        %v1535 = vmul.f32 %v1532, 1.442695
        %v1536 = vpow.pop %v1535
        %v1537 = vsub.f32 %v1534, 1.0
        %v1538 = vsub.f32 %v1536, 1.0
        %v1539 = vsel %vm1529, %v1523, %v1537
        %v1540 = vsel %vm1530, %v1525, %v1538
        %1541 = vrot.lane.b32.xlu0 %v1539, 17
        %v1542 = vpop.permute.xlu0 %1541
        %1543 = vrot.lane.b32.xlu0 %v1540, 17
        %v1544 = vpop.permute.xlu0 %1543
        %v1545 = vsel %vm973, %v1542, %v1544
        %v1546 = vsel %vm973, %v1544, %v1542
        %v1547 = vsel %vm978, %v1546, 0.0
        %v1548 = vsel %vm979, %v1545, 0.0
        %v1549 = vpack.c.bf16 %v1547, %v1547
        %v1550 = vpack.c.bf16 %v1548, %v1548
        %1551 = vst [vmem:[#allocation2] sm:$0xf] %v1549
        %1552 = vst [vmem:[#allocation2 + $0x8] sm:$0xf] %v1550
        %1553 = vrot.lane.b32.xlu0 %v1539, 16
        %v1554 = vpop.permute.xlu0 %1553
        %1555 = vrot.lane.b32.xlu0 %v1540, 16
        %v1556 = vpop.permute.xlu0 %1555
        %v1557 = vsel %vm1008, %v1554, %v1556
        %v1558 = vsel %vm1008, %v1556, %v1554
        %v1559 = vsel %vm1013, %v1558, 0.0
        %v1560 = vsel %vm1014, %v1557, 0.0
        %v1561 = vpack.c.bf16 %v1559, %v1559
        %v1562 = vpack.c.bf16 %v1560, %v1560
        %v1565 = vrot.slane %v1561, 4
        %v1566 = vrot.slane %v1562, 4
        %1569 = vst [vmem:[#allocation2] sm:$0xf0] %v1565
        %1570 = vst [vmem:[#allocation2 + $0x8] sm:$0xf0] %v1566
        %1571 = vrot.lane.b32.xlu0 %v1539, 15
        %v1572 = vpop.permute.xlu0 %1571
        %1573 = vrot.lane.b32.xlu0 %v1540, 15
        %v1574 = vpop.permute.xlu0 %1573
        %v1575 = vsel %vm1043, %v1572, %v1574
        %v1576 = vsel %vm1043, %v1574, %v1572
        %v1577 = vsel %vm1048, %v1576, 0.0
        %v1578 = vsel %vm1049, %v1575, 0.0
        %v1579 = vpack.c.bf16 %v1577, %v1577
        %v1580 = vpack.c.bf16 %v1578, %v1578
        %1581 = vst [vmem:[#allocation2 + $0x10] sm:$0xf] %v1579
        %1582 = vst [vmem:[#allocation2 + $0x18] sm:$0xf] %v1580
        %1583 = vrot.lane.b32.xlu0 %v1539, 1
        %v1584 = vpop.permute.xlu0 %1583
        %1585 = vrot.lane.b32.xlu0 %v1540, 1
        %v1586 = vpop.permute.xlu0 %1585
        %v1587 = vsel %vm1078, %v1584, %v1586
        %v1588 = vsel %vm1078, %v1586, %v1584
        %v1589 = vsel %vm1083, %v1588, 0.0
        %v1590 = vsel %vm1084, %v1587, 0.0
        %v1591 = vpack.c.bf16 %v1589, %v1589
        %v1592 = vpack.c.bf16 %v1590, %v1590
        %v1595 = vrot.slane %v1591, 4
        %v1596 = vrot.slane %v1592, 4
        %1599 = vst [vmem:[#allocation2 + $0x10] sm:$0xf0] %v1595
        %1600 = vst [vmem:[#allocation2 + $0x18] sm:$0xf0] %v1596
        %v1601 = vpack.c.bf16 %v1539, %v1539
        %v1602 = vpack.c.bf16 %v1540, %v1540
        %1603 = vst [vmem:[#allocation2 + $0x20] sm:$0xf] %v1601
        %1604 = vst [vmem:[#allocation2 + $0x28] sm:$0xf] %v1602
        %1605 = vrot.lane.b32.xlu0 %v1539, 127
        %v1606 = vpop.permute.xlu0 %1605
        %1607 = vrot.lane.b32.xlu0 %v1540, 127
        %v1608 = vpop.permute.xlu0 %1607
        %v1609 = vsel %vm1127, %v1606, %v1608
        %v1610 = vsel %vm1127, %v1608, %v1606
        %v1611 = vsel %vm1132, %v1609, 0.0
        %v1612 = vsel %vm1133, %v1610, 0.0
        %v1613 = vpack.c.bf16 %v1611, %v1611
        %v1614 = vpack.c.bf16 %v1612, %v1612
        %v1617 = vrot.slane %v1613, 4
        %v1618 = vrot.slane %v1614, 4
        %1621 = vst [vmem:[#allocation2 + $0x20] sm:$0xf0] %v1617
        %1622 = vst [vmem:[#allocation2 + $0x28] sm:$0xf0] %v1618
        %1623 = vrot.lane.b32.xlu0 %v1539, 113
        %v1624 = vpop.permute.xlu0 %1623
        %1625 = vrot.lane.b32.xlu0 %v1540, 113
        %v1626 = vpop.permute.xlu0 %1625
        %v1627 = vsel %vm1162, %v1624, %v1626
        %v1628 = vsel %vm1162, %v1626, %v1624
        %v1629 = vsel %vm1167, %v1627, 0.0
        %v1630 = vsel %vm1168, %v1628, 0.0
        %v1631 = vpack.c.bf16 %v1629, %v1629
        %v1632 = vpack.c.bf16 %v1630, %v1630
        %1633 = vst [vmem:[#allocation2 + $0x30] sm:$0xf] %v1631
        %1634 = vst [vmem:[#allocation2 + $0x38] sm:$0xf] %v1632
        %1635 = vrot.lane.b32.xlu0 %v1539, 112
        %v1636 = vpop.permute.xlu0 %1635
        %1637 = vrot.lane.b32.xlu0 %v1540, 112
        %v1638 = vpop.permute.xlu0 %1637
        %v1639 = vsel %vm1197, %v1636, %v1638
        %v1640 = vsel %vm1197, %v1638, %v1636
        %v1641 = vsel %vm1202, %v1639, 0.0
        %v1642 = vsel %vm1203, %v1640, 0.0
        %v1643 = vpack.c.bf16 %v1641, %v1641
        %v1644 = vpack.c.bf16 %v1642, %v1642
        %v1647 = vrot.slane %v1643, 4
        %v1648 = vrot.slane %v1644, 4
        %1651 = vst [vmem:[#allocation2 + $0x30] sm:$0xf0] %v1647
        %1652 = vst [vmem:[#allocation2 + $0x38] sm:$0xf0] %v1648
        %1653 = vrot.lane.b32.xlu0 %v1539, 111
        %v1654 = vpop.permute.xlu0 %1653
        %1655 = vrot.lane.b32.xlu0 %v1540, 111
        %v1656 = vpop.permute.xlu0 %1655
        %v1657 = vsel %vm1232, %v1654, %v1656
        %v1658 = vsel %vm1232, %v1656, %v1654
        %v1659 = vsel %vm1237, %v1657, 0.0
        %v1660 = vsel %vm1238, %v1658, 0.0
        %v1661 = vpack.c.bf16 %v1659, %v1659
        %v1662 = vpack.c.bf16 %v1660, %v1660
        %1663 = vst [vmem:[#allocation2 + $0x40] sm:$0xf] %v1661
        %1664 = vst [vmem:[#allocation2 + $0x48] sm:$0xf] %v1662
        %v1665 = vld [vmem:[#allocation4 + $0x20] sm:$0xf]
        %v1666 = vld [vmem:[#allocation2] sm:$0xff]
        %v1667 = vld [vmem:[#allocation2 + $0x8] sm:$0xff]
        %v1668 = vld [vmem:[#allocation2 + $0x10] sm:$0xff]
        %v1669 = vld [vmem:[#allocation2 + $0x18] sm:$0xff]
        %v1670 = vld [vmem:[#allocation2 + $0x20] sm:$0xff]
        %v1671 = vld [vmem:[#allocation2 + $0x28] sm:$0xff]
        %v1672 = vld [vmem:[#allocation2 + $0x30] sm:$0xff]
        %v1673 = vld [vmem:[#allocation2 + $0x38] sm:$0xff]
        %v1674 = vld [vmem:[#allocation2 + $0x40] sm:$0xf]
        %v1675 = vld [vmem:[#allocation2 + $0x48] sm:$0xf]
        %v1677 = vsel %vm603, %v1665, 0
        %v1680 = vsel %vm607, %v1674, 0
        %v1683 = vsel %vm607, %v1675, 0
        %1685 = vmatprep.subr.bf16.mxu0 %v1667
        %1686 = vmatpush1.bf16.msra.mxu0 %v1666
        %1687 = vmatprep.subr.bf16.mxu0 %v1669
        %1688 = vmatpush1.bf16.msra.mxu0 %v1668
        %1689 = vmatprep.subr.bf16.mxu0 %v1671
        %1690 = vmatpush1.bf16.msra.mxu0 %v1670
        %1691 = vmatprep.subr.bf16.mxu0 %v1673
        %1692 = vmatpush1.bf16.msra.mxu0 %v1672
        %1693 = vmatprep.subr.bf16.mxu0 %v1683
        %1694 = vmatpush1.bf16.msra.mxu0 %v1680
        %1695 = vmatprep.subr.bf16.mxu0 0
        %1696 = vmatpush1.bf16.msra.mxu0 0
        %1697 = vmatprep.subr.bf16.mxu0 0
        %1698 = vmatpush1.bf16.msra.mxu0 0
        %1699 = vmatprep.subr.bf16.mxu0 0
        %1700 = vmatpush1.bf16.msra.mxu0 0
        %1701 = vmatprep.subr.bf16.mxu0 0
        %1702 = vmatpush1.bf16.msra.mxu0 0
        %1703 = vmatprep.subr.bf16.mxu0 0
        %1704 = vmatpush1.bf16.msra.mxu0 0
        %1705 = vmatprep.subr.bf16.mxu0 0
        %1706 = vmatpush1.bf16.msra.mxu0 0
        %1707 = vmatprep.subr.bf16.mxu0 0
        %1708 = vmatpush1.bf16.msra.mxu0 0
        %1709 = vmatprep.subr.bf16.mxu0 0
        %1710 = vmatpush1.bf16.msra.mxu0 0
        %1711 = vmatprep.subr.bf16.mxu0 0
        %1712 = vmatpush1.bf16.msra.mxu0 0
        %1713 = vmatprep.subr.bf16.mxu0 0
        %1714 = vmatpush1.bf16.msra.mxu0 0
        %1715 = vmatprep.subr.bf16.mxu0 0
        %1716 = vmatpush1.bf16.msra.mxu0 0
        %1717 = vmatprep.mubr.bf16.mxu0 0
        %1718 = vmatmul.mubr.bf16.gmra.mrb[0].mxu0 %v1677
        %v1719 = vpop.f32.mrb[0].mxu0
        %v1720 = vadd.f32 0.0, %v1719
        %v1721 = vpop.f32.mrb[0].mxu0
        %v1722 = vadd.f32 0.0, %v1721
        %v1723 = vpop.f32.mrb[0].mxu0
        %v1724 = vpop.f32.mrb[0].mxu0
        %1725 = vdwg.mxu0
        %vm1726 = vcmp.gt.f32.partialorder %v1720, 0.0
        %vm1727 = vcmp.gt.f32.partialorder %v1722, 0.0
        %v1728 = vmin.f32 %v1720, 0.0
        %v1729 = vmin.f32 %v1722, 0.0
        %v1730 = vmul.f32 %v1728, 1.442695
        %v1731 = vpow.pop %v1730
        %v1732 = vmul.f32 %v1729, 1.442695
        %v1733 = vpow.pop %v1732
        %v1734 = vsub.f32 %v1731, 1.0
        %v1735 = vsub.f32 %v1733, 1.0
        %v1736 = vsel %vm1726, %v1720, %v1734
        %v1737 = vsel %vm1727, %v1722, %v1735
        %1738 = vst [vmem:[%s304] sm:$0xff] %v1736
        %1739 = vst [vmem:[%s304 + $0x8] sm:$0xff] %v1737
        %p1740 = scmp.lt.s32.totalorder %s20, 1
        %s1741 = scalar_select %p1740, %s20, 1
        %s1742 = smul.addr %s1741, 2
        %s1743 = smul.addr %s1742, 8
        %s1744 = scalar_lea.vmem %s6, %s1743
        // Predicated region
        $region61: #{generator_forward.1} parent=43 // pred_check
          %p1745 = pneg %p169
        $region62: #{generator_forward.1} parent=43 // pred_check_branch
          %1747 = sbr.rel (%p1745) target = $region64
        $region63: #{generator_forward.1} parent=43 // pred_region
          _
        $region64: #{generator_forward.1} parent=43 // pred_fallthru
          _
      $region44: #{generator_forward.1} parent=5 // pred_fallthru
        _
      %p1748 = scmp.le.s32.totalorder 2, %s15
      // Predicated region
      $region65: #{generator_forward.1} parent=5 // pred_check
        %p1749 = pneg %p1748
      $region66: #{generator_forward.1} parent=5 // pred_check_branch
        %1751 = sbr.rel (%p1749) target = $region68
      $region67: #{generator_forward.1} parent=5 // pred_region
        %s1752 = ssub.s32 %s15, 2
        // Predicated region
        $region69: #{generator_forward.1} parent=67 // pred_check
          %p1753 = pneg %p175
        $region70: #{generator_forward.1} parent=67 // pred_check_branch
          %1755 = sbr.rel (%p1753) target = $region72
        $region71: #{generator_forward.1} parent=67 // pred_region
          %p1756 = scmp.lt.s32.totalorder %s21, 1
          %s1757 = scalar_select %p1756, %s21, 1
          %s1758 = smul.addr %s1757, 2
          %s1759 = smul.addr %s1758, 8
          %s1760 = scalar_lea.vmem %s6, %s1759
        $region72: #{generator_forward.1} parent=67 // pred_fallthru
          _
      $region68: #{generator_forward.1} parent=5 // pred_fallthru
        _
    $region6: #{generator_forward.1} parent=1 // loop_footer
      %s19 = sadd.s32 1, %s15
    $region7: #{generator_forward.1} parent=1 // loop_footer_branch
      %14 = sbr.rel target = $region3
    $region8: #{generator_forward.1} parent=1 // loop_exit
      _
    %1761 = vsyncpa [#allocation5], 1
    %s1762 = scalar_lea.sflag [#allocation5], 1
    %1763 = vsyncpa %s1762, 1
    %1764 = vsyncpa [#allocation7], 1
    %1765 = vsyncpa [#allocation10], 1

</llo_original>
